<compile_context>
chip_gen: v5e
topology: v5e:2x2
jax: 0.10.0
libtpu: 0.0.40
codegen_flags: <defaults>
</compile_context>

<pallas_src>
import jax
import jax.numpy as jnp
from jax.experimental import pallas as pl
from jax.experimental.pallas import tpu as pltpu

FEATS = 256          # reduction output channels (as in the module)
NUM_CLASSES = 751    # classifier output size (as in the module)
NC_PAD = 768         # 751 padded to a multiple of 128 for lane-dense stores
C5 = 2048            # branch output channels (resnet layer4 channels)


# ----------------------------- Pallas kernels ------------------------------

def _maxpool_kernel(x_ref, o_ref):
    # x: (rows_tile, L, C)  ->  max over the L spatial positions  ->  (rows_tile, C)
    o_ref[...] = jnp.max(x_ref[...], axis=1)


def strip_maxpool(feat_nhwc, strips):
    """AdaptiveMaxPool2d((strips, 1)) for NHWC features with H divisible by `strips`."""
    N, H, W, C = feat_nhwc.shape
    assert H % strips == 0
    rows = N * strips
    L = (H // strips) * W
    x = feat_nhwc.reshape(rows, L, C)                       # contiguous, no copy

    # Row-tile so each double-buffered input block stays small enough for the
    # tightest scoped-VMEM budget (v5e default 16 MiB, v7x 64 MiB physical).
    bytes_per_row = L * C * jnp.dtype(feat_nhwc.dtype).itemsize
    budget = 4 << 20                                        # ~4 MiB per input block
    fit = max(1, budget // bytes_per_row)
    if fit >= rows:
        tile_rows = rows                                    # whole array in one block
    else:
        tile_rows = max(8, (fit // 8) * 8)                  # keep output block 8-aligned

    out = pl.pallas_call(
        _maxpool_kernel,
        grid=(pl.cdiv(rows, tile_rows),),
        in_specs=[pl.BlockSpec((tile_rows, L, C), lambda i: (i, 0, 0))],
        out_specs=pl.BlockSpec((tile_rows, C), lambda i: (i, 0)),
        out_shape=jax.ShapeDtypeStruct((rows, C), feat_nhwc.dtype),
        compiler_params=pltpu.CompilerParams(dimension_semantics=("parallel",)),
    )(x)
    return out.reshape(N, strips, C)


def _head_kernel(z_ref, rw_ref, rb_ref, fw_ref, fb_ref, f_ref, l_ref):
    # Per grid step g (one of the 8 feature slots):
    #   z:  (1, N, 2048) bf16      rw: (2048, 256) bf16 (BN scale folded in)
    #   rb: (1, 256) f32           fw: (1, 256, 768) bf16   fb: (1, 1, 768) f32
    f = jnp.dot(z_ref[0], rw_ref[...], preferred_element_type=jnp.float32)
    f = jnp.maximum(f + rb_ref[...], 0.0)                   # (N, 256) reduction + BN + ReLU
    f_ref[0] = f
    l_ref[0] = jnp.dot(f.astype(fw_ref.dtype), fw_ref[0],
                       preferred_element_type=jnp.float32) + fb_ref[0]


def head_bank(z, red_w, red_b, fc_w, fc_b):
    # z: (8, N, 2048) bf16, red_w: (2048, 256) bf16, red_b: (1, 256) f32
    # fc_w: (8, 256, NC_PAD) bf16, fc_b: (8, 1, NC_PAD) f32
    G, N, _ = z.shape
    f_out, l_out = pl.pallas_call(
        _head_kernel,
        grid=(G,),
        in_specs=[
            pl.BlockSpec((1, N, C5), lambda g: (g, 0, 0)),
            pl.BlockSpec((C5, FEATS), lambda g: (0, 0)),       # resident across steps
            pl.BlockSpec((1, FEATS), lambda g: (0, 0)),
            pl.BlockSpec((1, FEATS, NC_PAD), lambda g: (g, 0, 0)),
            pl.BlockSpec((1, 1, NC_PAD), lambda g: (g, 0, 0)),
        ],
        out_specs=[
            pl.BlockSpec((1, N, FEATS), lambda g: (g, 0, 0)),
            pl.BlockSpec((1, N, NC_PAD), lambda g: (g, 0, 0)),
        ],
        out_shape=[
            jax.ShapeDtypeStruct((G, N, FEATS), jnp.float32),
            jax.ShapeDtypeStruct((G, N, NC_PAD), jnp.float32),
        ],
        compiler_params=pltpu.CompilerParams(dimension_semantics=("parallel",)),
    )(z, red_w, red_b, fc_w, fc_b)
    return f_out, l_out


# --------------------- plain-JAX glue (backbone stand-in) ---------------------

def _conv2d(x, w, stride):
    # NHWC conv so the Pallas head never has to transpose the 2048-ch maps.
    return jax.lax.conv_general_dilated(
        x, w, (stride, stride), "SAME",
        dimension_numbers=("NHWC", "HWIO", "NHWC"))


def _maxpool_3x3_s2(x):
    return jax.lax.reduce_window(
        x, -jnp.inf, jax.lax.max, (1, 3, 3, 1), (1, 2, 2, 1), "SAME")


def init_params(key):
    ks = jax.random.split(key, 16)
    p = {}
    # scaled-down backbone + three branches (deterministic synthetic weights, HWIO)
    p["conv1"] = 0.05 * jax.random.normal(ks[0], (7, 7, 3, 16), jnp.float32)
    p["conv2"] = 0.05 * jax.random.normal(ks[1], (3, 3, 16, 64), jnp.float32)
    p["p1_conv"] = 0.02 * jax.random.normal(ks[2], (3, 3, 64, C5), jnp.float32)
    p["p2_conv"] = 0.02 * jax.random.normal(ks[3], (3, 3, 64, C5), jnp.float32)
    p["p3_conv"] = 0.02 * jax.random.normal(ks[4], (3, 3, 64, C5), jnp.float32)

    # reduction: Conv2d(2048, 256, 1, bias=False) kaiming fan_in + BN(eval) + ReLU
    w_red = jax.random.normal(ks[5], (FEATS, C5), jnp.float32) * (2.0 / C5) ** 0.5
    gamma = 1.0 + 0.02 * jax.random.normal(ks[6], (FEATS,), jnp.float32)
    beta = jnp.zeros((FEATS,), jnp.float32)
    eps = 1e-5
    # BN eval with running_mean=0, running_var=1: fold scale into the weight.
    scale = gamma / jnp.sqrt(1.0 + eps)                      # (256,)
    red_w = jnp.transpose(w_red) * scale[None, :]            # (2048, 256), scale folded
    p["red_w"] = red_w.astype(jnp.bfloat16)
    p["red_b"] = beta.reshape(1, FEATS)                      # f32 bias (= 0)

    # 8 classifiers: Linear(256, 751), kaiming fan_out weight, zero bias.
    # Bank order: [2048_0, 2048_1, 2048_2, 256_1_0, 256_1_1, 256_2_0, 256_2_1, 256_2_2]
    fc_ws = []
    for i in range(8):
        w = jax.random.normal(ks[7 + i], (NUM_CLASSES, FEATS), jnp.float32)
        w = w * (2.0 / NUM_CLASSES) ** 0.5
        w = jnp.transpose(w)                                 # (256, 751)
        w = jnp.pad(w, ((0, 0), (0, NC_PAD - NUM_CLASSES)))  # lane-dense 768
        fc_ws.append(w)
    p["fc_w"] = jnp.stack(fc_ws).astype(jnp.bfloat16)        # (8, 256, 768)
    p["fc_b"] = jnp.zeros((8, 1, NC_PAD), jnp.float32)
    return p


def mgn_forward(params, x):
    # --- backbone + branches (plain-JAX stand-in, see TODO(synk) above) ---
    x = jnp.transpose(x, (0, 2, 3, 1))                       # NCHW -> NHWC (3 channels, cheap)
    h = jax.nn.relu(_conv2d(x, params["conv1"], 2))          # (N,H/2,W/2,16)
    h = _maxpool_3x3_s2(h)                                   # (N,H/4,W/4,16)
    h = jax.nn.relu(_conv2d(h, params["conv2"], 1))          # (N,H/4,W/4,64)
    p1 = jax.nn.relu(_conv2d(h, params["p1_conv"], 2))       # (N,H/8,W/8,2048) stride-2 branch
    p2 = jax.nn.relu(_conv2d(h, params["p2_conv"], 1))       # (N,H/4,W/4,2048) stride-1 branch
    p3 = jax.nn.relu(_conv2d(h, params["p3_conv"], 1))

    N = x.shape[0]

    # --- MGN head: Pallas kernels ---
    zg_p1 = strip_maxpool(p1, 1)[:, 0]                       # (N, 2048)
    zp2 = strip_maxpool(p2, 2)                               # (N, 2, 2048)
    zp3 = strip_maxpool(p3, 3)                               # (N, 3, 2048)
    # global pools as max-of-strip-maxes (exact, avoids re-reading p2/p3)
    zg_p2 = jnp.max(zp2, axis=1)                             # (N, 2048)
    zg_p3 = jnp.max(zp3, axis=1)

    # stack in classifier-bank order
    z_all = jnp.stack(
        [zg_p1, zg_p2, zg_p3,
         zp2[:, 0], zp2[:, 1],
         zp3[:, 0], zp3[:, 1], zp3[:, 2]], axis=0)           # (8, N, 2048)
    z_all = z_all.astype(jnp.bfloat16)

    # fused reduction(+BN+ReLU) + classifier bank
    f_all, logits_pad = head_bank(z_all, params["red_w"], params["red_b"],
                                  params["fc_w"], params["fc_b"])
    logits = logits_pad[:, :, :NUM_CLASSES]                  # (8, N, 751)

    fg_p1, fg_p2, fg_p3 = f_all[0], f_all[1], f_all[2]
    l_p1, l_p2, l_p3, l0_p2, l1_p2, l0_p3, l1_p3, l2_p3 = (logits[i] for i in range(8))

    # torch.cat([fg_p1, fg_p2, fg_p3, f0_p2, f1_p2, f0_p3, f1_p3, f2_p3], dim=1)
    predict = jnp.transpose(f_all, (1, 0, 2)).reshape(N, 8 * FEATS)

    return (predict, fg_p1, fg_p2, fg_p3, l_p1, l_p2, l_p3,
            l0_p2, l1_p2, l0_p3, l1_p3, l2_p3)


if __name__ == "__main__":
    key = jax.random.PRNGKey(0)
    pkey, xkey = jax.random.split(key)
    params = init_params(pkey)

    # small NCHW input (like a scaled-down 384x128 person crop); H/4 divisible by 2 and 3
    x = jax.random.normal(xkey, (2, 3, 48, 16), jnp.float32)

    outs = jax.jit(mgn_forward)(params, x)
    outs = jax.block_until_ready(outs)

    predict = outs[0]
    assert predict.shape == (2, 8 * FEATS)
    assert outs[1].shape == (2, FEATS)          # fg_p1
    assert outs[4].shape == (2, NUM_CLASSES)    # l_p1
    assert all(o.shape == (2, NUM_CLASSES) for o in outs[4:])
    print("KERNEL_OK")
</pallas_src>

<mosaic_0001>
module attributes {stable_mosaic.version = 11 : i64} {
  func.func @_maxpool_kernel(%arg0: i32, %arg1: memref<4x24x2048xf32, #tpu.memory_space<vmem>>, %arg2: memref<4x2048xf32, #tpu.memory_space<vmem>>) attributes {dimension_semantics = [#tpu.dimension_semantics<parallel>], iteration_bounds = array<i64: 1>, scalar_prefetch = 0 : i64, scratch_operands = 0 : i64, tpu.core_type = #tpu.core_type<tc>, window_params = [{transform_indices = @transform_0, window_bounds = array<i64: 4, 24, 2048>}, {transform_indices = @transform_1, window_bounds = array<i64: 4, 2048>}]} {
    %c0 = arith.constant 0 : index
    %c0_0 = arith.constant 0 : index
    %c0_1 = arith.constant 0 : index
    %0 = vector.load %arg1[%c0, %c0_0, %c0_1] : memref<4x24x2048xf32, #tpu.memory_space<vmem>>, vector<4x24x2048xf32>
    %cst = arith.constant dense<0xFF800000> : vector<4x2048xf32>
    %1 = vector.multi_reduction <maximumf>, %0, %cst [1] : vector<4x24x2048xf32> to vector<4x2048xf32>
    %c0_2 = arith.constant 0 : index
    %c0_3 = arith.constant 0 : index
    %2 = vector.load %arg2[%c0_2, %c0_3] : memref<4x2048xf32, #tpu.memory_space<vmem>>, vector<4x2048xf32>
    tpu.vector_store %arg2[%c0_2, %c0_3], %1 {strides = array<i32>} : memref<4x2048xf32, #tpu.memory_space<vmem>>, vector<4x2048xf32>,
    return
  }
  func.func @transform_0(%arg0: i32) -> (i32, i32, i32) {
    %c0_i32 = arith.constant 0 : i32
    %c0_i32_0 = arith.constant 0 : i32
    %c0_i32_1 = arith.constant 0 : i32
    return %arg0, %c0_i32, %c0_i32_0 : i32, i32, i32
  }
  func.func @transform_1(%arg0: i32) -> (i32, i32) {
    %c0_i32 = arith.constant 0 : i32
    %c0_i32_0 = arith.constant 0 : i32
    return %arg0, %c0_i32 : i32, i32
  }
}

module attributes {stable_mosaic.version = 11 : i64} {
  func.func @_maxpool_kernel(%arg0: i32, %arg1: memref<2x12x2048xf32, #tpu.memory_space<vmem>>, %arg2: memref<2x2048xf32, #tpu.memory_space<vmem>>) attributes {dimension_semantics = [#tpu.dimension_semantics<parallel>], iteration_bounds = array<i64: 1>, scalar_prefetch = 0 : i64, scratch_operands = 0 : i64, tpu.core_type = #tpu.core_type<tc>, window_params = [{transform_indices = @transform_0, window_bounds = array<i64: 2, 12, 2048>}, {transform_indices = @transform_1, window_bounds = array<i64: 2, 2048>}]} {
    %c0 = arith.constant 0 : index
    %c0_0 = arith.constant 0 : index
    %c0_1 = arith.constant 0 : index
    %0 = vector.load %arg1[%c0, %c0_0, %c0_1] : memref<2x12x2048xf32, #tpu.memory_space<vmem>>, vector<2x12x2048xf32>
    %cst = arith.constant dense<0xFF800000> : vector<2x2048xf32>
    %1 = vector.multi_reduction <maximumf>, %0, %cst [1] : vector<2x12x2048xf32> to vector<2x2048xf32>
    %c0_2 = arith.constant 0 : index
    %c0_3 = arith.constant 0 : index
    %2 = vector.load %arg2[%c0_2, %c0_3] : memref<2x2048xf32, #tpu.memory_space<vmem>>, vector<2x2048xf32>
    tpu.vector_store %arg2[%c0_2, %c0_3], %1 {strides = array<i32>} : memref<2x2048xf32, #tpu.memory_space<vmem>>, vector<2x2048xf32>,
    return
  }
  func.func @transform_0(%arg0: i32) -> (i32, i32, i32) {
    %c0_i32 = arith.constant 0 : i32
    %c0_i32_0 = arith.constant 0 : i32
    %c0_i32_1 = arith.constant 0 : i32
    return %arg0, %c0_i32, %c0_i32_0 : i32, i32, i32
  }
  func.func @transform_1(%arg0: i32) -> (i32, i32) {
    %c0_i32 = arith.constant 0 : i32
    %c0_i32_0 = arith.constant 0 : i32
    return %arg0, %c0_i32 : i32, i32
  }
}

module attributes {stable_mosaic.version = 11 : i64} {
  func.func @_maxpool_kernel(%arg0: i32, %arg1: memref<6x16x2048xf32, #tpu.memory_space<vmem>>, %arg2: memref<6x2048xf32, #tpu.memory_space<vmem>>) attributes {dimension_semantics = [#tpu.dimension_semantics<parallel>], iteration_bounds = array<i64: 1>, scalar_prefetch = 0 : i64, scratch_operands = 0 : i64, tpu.core_type = #tpu.core_type<tc>, window_params = [{transform_indices = @transform_0, window_bounds = array<i64: 6, 16, 2048>}, {transform_indices = @transform_1, window_bounds = array<i64: 6, 2048>}]} {
    %c0 = arith.constant 0 : index
    %c0_0 = arith.constant 0 : index
    %c0_1 = arith.constant 0 : index
    %0 = vector.load %arg1[%c0, %c0_0, %c0_1] : memref<6x16x2048xf32, #tpu.memory_space<vmem>>, vector<6x16x2048xf32>
    %cst = arith.constant dense<0xFF800000> : vector<6x2048xf32>
    %1 = vector.multi_reduction <maximumf>, %0, %cst [1] : vector<6x16x2048xf32> to vector<6x2048xf32>
    %c0_2 = arith.constant 0 : index
    %c0_3 = arith.constant 0 : index
    %2 = vector.load %arg2[%c0_2, %c0_3] : memref<6x2048xf32, #tpu.memory_space<vmem>>, vector<6x2048xf32>
    tpu.vector_store %arg2[%c0_2, %c0_3], %1 {strides = array<i32>} : memref<6x2048xf32, #tpu.memory_space<vmem>>, vector<6x2048xf32>,
    return
  }
  func.func @transform_0(%arg0: i32) -> (i32, i32, i32) {
    %c0_i32 = arith.constant 0 : i32
    %c0_i32_0 = arith.constant 0 : i32
    %c0_i32_1 = arith.constant 0 : i32
    return %arg0, %c0_i32, %c0_i32_0 : i32, i32, i32
  }
  func.func @transform_1(%arg0: i32) -> (i32, i32) {
    %c0_i32 = arith.constant 0 : i32
    %c0_i32_0 = arith.constant 0 : i32
    return %arg0, %c0_i32 : i32, i32
  }
}

module attributes {stable_mosaic.version = 11 : i64} {
  func.func @_head_kernel(%arg0: i32, %arg1: memref<1x2x2048xbf16, #tpu.memory_space<vmem>>, %arg2: memref<2048x256xbf16, #tpu.memory_space<vmem>>, %arg3: memref<1x256xf32, #tpu.memory_space<vmem>>, %arg4: memref<1x256x768xbf16, #tpu.memory_space<vmem>>, %arg5: memref<1x1x768xf32, #tpu.memory_space<vmem>>, %arg6: memref<1x2x256xf32, #tpu.memory_space<vmem>>, %arg7: memref<1x2x768xf32, #tpu.memory_space<vmem>>) attributes {dimension_semantics = [#tpu.dimension_semantics<parallel>], iteration_bounds = array<i64: 8>, scalar_prefetch = 0 : i64, scratch_operands = 0 : i64, tpu.core_type = #tpu.core_type<tc>, window_params = [{transform_indices = @transform_0, window_bounds = array<i64: 1, 2, 2048>}, {pipeline_mode = #tpu.pipeline_mode<synchronous>, transform_indices = @transform_1, window_bounds = array<i64: 2048, 256>}, {pipeline_mode = #tpu.pipeline_mode<synchronous>, transform_indices = @transform_2, window_bounds = array<i64: 1, 256>}, {transform_indices = @transform_3, window_bounds = array<i64: 1, 256, 768>}, {transform_indices = @transform_4, window_bounds = array<i64: 1, 1, 768>}, {transform_indices = @transform_5, window_bounds = array<i64: 1, 2, 256>}, {transform_indices = @transform_6, window_bounds = array<i64: 1, 2, 768>}]} {
    %c0 = arith.constant 0 : index
    %c0_0 = arith.constant 0 : index
    %c0_1 = arith.constant 0 : index
    %0 = vector.load %arg1[%c0, %c0_0, %c0_1] : memref<1x2x2048xbf16, #tpu.memory_space<vmem>>, vector<1x2x2048xbf16>
    %1 = vector.shape_cast %0 : vector<1x2x2048xbf16> to vector<2x2048xbf16>
    %c0_2 = arith.constant 0 : index
    %c0_3 = arith.constant 0 : index
    %2 = vector.load %arg2[%c0_2, %c0_3] : memref<2048x256xbf16, #tpu.memory_space<vmem>>, vector<2048x256xbf16>
    %cst = arith.constant dense<0.000000e+00> : vector<2x256xf32>
    %3 = tpu.matmul %1, %2, %cst {dimension_numbers = #tpu.dot_dimension_numbers<[1], [0], [0], [1], [0, 0, 1, 1], [], []>} : vector<2x2048xbf16>, vector<2048x256xbf16>, vector<2x256xf32> -> vector<2x256xf32>
    %c0_4 = arith.constant 0 : index
    %c0_5 = arith.constant 0 : index
    %4 = vector.load %arg3[%c0_4, %c0_5] : memref<1x256xf32, #tpu.memory_space<vmem>>, vector<1x256xf32>
    %5 = vector.broadcast %4 : vector<1x256xf32> to vector<2x256xf32>
    %6 = arith.addf %3, %5 : vector<2x256xf32>
    %cst_6 = arith.constant 0.000000e+00 : f32
    %7 = vector.broadcast %cst_6 : f32 to vector<2x256xf32>
    %8 = arith.maximumf %6, %7 : vector<2x256xf32>
    %c0_7 = arith.constant 0 : index
    %c0_8 = arith.constant 0 : index
    %c0_9 = arith.constant 0 : index
    %9 = vector.load %arg6[%c0_7, %c0_8, %c0_9] : memref<1x2x256xf32, #tpu.memory_space<vmem>>, vector<1x2x256xf32>
    %10 = vector.shape_cast %9 : vector<1x2x256xf32> to vector<2x256xf32>
    %11 = vector.shape_cast %8 : vector<2x256xf32> to vector<1x2x256xf32>
    tpu.vector_store %arg6[%c0_7, %c0_8, %c0_9], %11 {strides = array<i32>} : memref<1x2x256xf32, #tpu.memory_space<vmem>>, vector<1x2x256xf32>,
    %12 = arith.truncf %8 : vector<2x256xf32> to vector<2x256xbf16>
    %c0_10 = arith.constant 0 : index
    %c0_11 = arith.constant 0 : index
    %c0_12 = arith.constant 0 : index
    %13 = vector.load %arg4[%c0_10, %c0_11, %c0_12] : memref<1x256x768xbf16, #tpu.memory_space<vmem>>, vector<1x256x768xbf16>
    %14 = vector.shape_cast %13 : vector<1x256x768xbf16> to vector<256x768xbf16>
    %cst_13 = arith.constant dense<0.000000e+00> : vector<2x768xf32>
    %15 = tpu.matmul %12, %14, %cst_13 {dimension_numbers = #tpu.dot_dimension_numbers<[1], [0], [0], [1], [0, 0, 1, 1], [], []>} : vector<2x256xbf16>, vector<256x768xbf16>, vector<2x768xf32> -> vector<2x768xf32>
    %c0_14 = arith.constant 0 : index
    %c0_15 = arith.constant 0 : index
    %c0_16 = arith.constant 0 : index
    %16 = vector.load %arg5[%c0_14, %c0_15, %c0_16] : memref<1x1x768xf32, #tpu.memory_space<vmem>>, vector<1x1x768xf32>
    %17 = vector.shape_cast %16 : vector<1x1x768xf32> to vector<1x768xf32>
    %18 = vector.broadcast %17 : vector<1x768xf32> to vector<2x768xf32>
    %19 = arith.addf %15, %18 : vector<2x768xf32>
    %c0_17 = arith.constant 0 : index
    %c0_18 = arith.constant 0 : index
    %c0_19 = arith.constant 0 : index
    %20 = vector.load %arg7[%c0_17, %c0_18, %c0_19] : memref<1x2x768xf32, #tpu.memory_space<vmem>>, vector<1x2x768xf32>
    %21 = vector.shape_cast %20 : vector<1x2x768xf32> to vector<2x768xf32>
    %22 = vector.shape_cast %19 : vector<2x768xf32> to vector<1x2x768xf32>
    tpu.vector_store %arg7[%c0_17, %c0_18, %c0_19], %22 {strides = array<i32>} : memref<1x2x768xf32, #tpu.memory_space<vmem>>, vector<1x2x768xf32>,
    return
  }
  func.func @transform_0(%arg0: i32) -> (i32, i32, i32) {
    %c0_i32 = arith.constant 0 : i32
    %c0_i32_0 = arith.constant 0 : i32
    %c0_i32_1 = arith.constant 0 : i32
    return %arg0, %c0_i32, %c0_i32_0 : i32, i32, i32
  }
  func.func @transform_1(%arg0: i32) -> (i32, i32) {
    %c0_i32 = arith.constant 0 : i32
    %c0_i32_0 = arith.constant 0 : i32
    %c0_i32_1 = arith.constant 0 : i32
    return %c0_i32, %c0_i32_0 : i32, i32
  }
  func.func @transform_2(%arg0: i32) -> (i32, i32) {
    %c0_i32 = arith.constant 0 : i32
    %c0_i32_0 = arith.constant 0 : i32
    %c0_i32_1 = arith.constant 0 : i32
    return %c0_i32, %c0_i32_0 : i32, i32
  }
  func.func @transform_3(%arg0: i32) -> (i32, i32, i32) {
    %c0_i32 = arith.constant 0 : i32
    %c0_i32_0 = arith.constant 0 : i32
    %c0_i32_1 = arith.constant 0 : i32
    return %arg0, %c0_i32, %c0_i32_0 : i32, i32, i32
  }
  func.func @transform_4(%arg0: i32) -> (i32, i32, i32) {
    %c0_i32 = arith.constant 0 : i32
    %c0_i32_0 = arith.constant 0 : i32
    %c0_i32_1 = arith.constant 0 : i32
    return %arg0, %c0_i32, %c0_i32_0 : i32, i32, i32
  }
  func.func @transform_5(%arg0: i32) -> (i32, i32, i32) {
    %c0_i32 = arith.constant 0 : i32
    %c0_i32_0 = arith.constant 0 : i32
    %c0_i32_1 = arith.constant 0 : i32
    return %arg0, %c0_i32, %c0_i32_0 : i32, i32, i32
  }
  func.func @transform_6(%arg0: i32) -> (i32, i32, i32) {
    %c0_i32 = arith.constant 0 : i32
    %c0_i32_0 = arith.constant 0 : i32
    %c0_i32_1 = arith.constant 0 : i32
    return %arg0, %c0_i32, %c0_i32_0 : i32, i32, i32
  }
}

</mosaic_0001>

<llo_original>
// kernel: mgn_forward.5
$region0: #{mgn_forward.5}
  #allocation0 [shape = 'u32[]', space=smem, size = 0x4, offset = 0x4, fixed_abs, tag = 'smem constant byte address 0x4 - core index']
  #allocation1 [shape = 'u32[72,128]{1,0:T(1,128)}', space=vmem, size = 0x9000, scoped, tag = 'internal scratch']
  %s0 = inlined_call_operand.vmem [shape: f32[4,24,2048], index: 0, kind: input, shape index: {}]
  %s1 = inlined_call_operand.vmem [shape: f32[4,2048], index: 1, kind: output, shape index: {}]
  %s2 = sld [smem:[#allocation0]]
  $region14: #{mgn_forward.5} parent=0
    _
  %s4 = ssub.s32 1, %s2
  %s5 = scalar_select 0, %s4, %s2
  // Predicated region
  $region2: #{mgn_forward.5} parent=0 // pred_check
    _
  $region3: #{mgn_forward.5} parent=0 // pred_check_branch
    %7 = sbr.rel (0) target = $region5
  $region4: #{mgn_forward.5} parent=0 // pred_region
    _
  $region5: #{mgn_forward.5} parent=0 // pred_fallthru
    _
  %v8 = vld [vmem:[%s0] sm:$0xff]
  %v9 = vld [vmem:[%s0 + $0x8] sm:$0xff]
  %v10 = vld [vmem:[%s0 + $0x10] sm:$0xff]
  %v11 = vld [vmem:[%s0 + $0x18] sm:$0xff]
  %v12 = vld [vmem:[%s0 + $0x20] sm:$0xff]
  %v13 = vld [vmem:[%s0 + $0x28] sm:$0xff]
  %v14 = vld [vmem:[%s0 + $0x30] sm:$0xff]
  %v15 = vld [vmem:[%s0 + $0x38] sm:$0xff]
  %v16 = vld [vmem:[%s0 + $0x40] sm:$0xff]
  %v17 = vld [vmem:[%s0 + $0x48] sm:$0xff]
  %v18 = vld [vmem:[%s0 + $0x50] sm:$0xff]
  %v19 = vld [vmem:[%s0 + $0x58] sm:$0xff]
  %v20 = vld [vmem:[%s0 + $0x60] sm:$0xff]
  %v21 = vld [vmem:[%s0 + $0x68] sm:$0xff]
  %v22 = vld [vmem:[%s0 + $0x70] sm:$0xff]
  %v23 = vld [vmem:[%s0 + $0x78] sm:$0xff]
  %v24 = vld [vmem:[%s0 + $0x80] sm:$0xff]
  %v25 = vld [vmem:[%s0 + $0x88] sm:$0xff]
  %v26 = vld [vmem:[%s0 + $0x90] sm:$0xff]
  %v27 = vld [vmem:[%s0 + $0x98] sm:$0xff]
  %v28 = vld [vmem:[%s0 + $0xa0] sm:$0xff]
  %v29 = vld [vmem:[%s0 + $0xa8] sm:$0xff]
  %v30 = vld [vmem:[%s0 + $0xb0] sm:$0xff]
  %v31 = vld [vmem:[%s0 + $0xb8] sm:$0xff]
  %v32 = vld [vmem:[%s0 + $0xc0] sm:$0xff]
  %v33 = vld [vmem:[%s0 + $0xc8] sm:$0xff]
  %v34 = vld [vmem:[%s0 + $0xd0] sm:$0xff]
  %v35 = vld [vmem:[%s0 + $0xd8] sm:$0xff]
  %v36 = vld [vmem:[%s0 + $0xe0] sm:$0xff]
  %v37 = vld [vmem:[%s0 + $0xe8] sm:$0xff]
  %v38 = vld [vmem:[%s0 + $0xf0] sm:$0xff]
  %v39 = vld [vmem:[%s0 + $0xf8] sm:$0xff]
  %v40 = vld [vmem:[%s0 + $0x100] sm:$0xff]
  %v41 = vld [vmem:[%s0 + $0x108] sm:$0xff]
  %v42 = vld [vmem:[%s0 + $0x110] sm:$0xff]
  %v43 = vld [vmem:[%s0 + $0x118] sm:$0xff]
  %v44 = vld [vmem:[%s0 + $0x120] sm:$0xff]
  %v45 = vld [vmem:[%s0 + $0x128] sm:$0xff]
  %v46 = vld [vmem:[%s0 + $0x130] sm:$0xff]
  %v47 = vld [vmem:[%s0 + $0x138] sm:$0xff]
  %v48 = vld [vmem:[%s0 + $0x140] sm:$0xff]
  %v49 = vld [vmem:[%s0 + $0x148] sm:$0xff]
  %v50 = vld [vmem:[%s0 + $0x150] sm:$0xff]
  %v51 = vld [vmem:[%s0 + $0x158] sm:$0xff]
  %v52 = vld [vmem:[%s0 + $0x160] sm:$0xff]
  %v53 = vld [vmem:[%s0 + $0x168] sm:$0xff]
  %v54 = vld [vmem:[%s0 + $0x170] sm:$0xff]
  %v55 = vld [vmem:[%s0 + $0x178] sm:$0xff]
  %v56 = vld [vmem:[%s0 + $0x180] sm:$0xff]
  %v57 = vld [vmem:[%s0 + $0x188] sm:$0xff]
  %v58 = vld [vmem:[%s0 + $0x190] sm:$0xff]
  %v59 = vld [vmem:[%s0 + $0x198] sm:$0xff]
  %v60 = vld [vmem:[%s0 + $0x1a0] sm:$0xff]
  %v61 = vld [vmem:[%s0 + $0x1a8] sm:$0xff]
  %v62 = vld [vmem:[%s0 + $0x1b0] sm:$0xff]
  %v63 = vld [vmem:[%s0 + $0x1b8] sm:$0xff]
  %v64 = vld [vmem:[%s0 + $0x1c0] sm:$0xff]
  %v65 = vld [vmem:[%s0 + $0x1c8] sm:$0xff]
  %v66 = vld [vmem:[%s0 + $0x1d0] sm:$0xff]
  %v67 = vld [vmem:[%s0 + $0x1d8] sm:$0xff]
  %v68 = vld [vmem:[%s0 + $0x1e0] sm:$0xff]
  %v69 = vld [vmem:[%s0 + $0x1e8] sm:$0xff]
  %v70 = vld [vmem:[%s0 + $0x1f0] sm:$0xff]
  %v71 = vld [vmem:[%s0 + $0x1f8] sm:$0xff]
  %v72 = vld [vmem:[%s0 + $0x200] sm:$0xff]
  %v73 = vld [vmem:[%s0 + $0x208] sm:$0xff]
  %v74 = vld [vmem:[%s0 + $0x210] sm:$0xff]
  %v75 = vld [vmem:[%s0 + $0x218] sm:$0xff]
  %v76 = vld [vmem:[%s0 + $0x220] sm:$0xff]
  %v77 = vld [vmem:[%s0 + $0x228] sm:$0xff]
  %v78 = vld [vmem:[%s0 + $0x230] sm:$0xff]
  %v79 = vld [vmem:[%s0 + $0x238] sm:$0xff]
  %v80 = vld [vmem:[%s0 + $0x240] sm:$0xff]
  %v81 = vld [vmem:[%s0 + $0x248] sm:$0xff]
  %v82 = vld [vmem:[%s0 + $0x250] sm:$0xff]
  %v83 = vld [vmem:[%s0 + $0x258] sm:$0xff]
  %v84 = vld [vmem:[%s0 + $0x260] sm:$0xff]
  %v85 = vld [vmem:[%s0 + $0x268] sm:$0xff]
  %v86 = vld [vmem:[%s0 + $0x270] sm:$0xff]
  %v87 = vld [vmem:[%s0 + $0x278] sm:$0xff]
  %v88 = vld [vmem:[%s0 + $0x280] sm:$0xff]
  %v89 = vld [vmem:[%s0 + $0x288] sm:$0xff]
  %v90 = vld [vmem:[%s0 + $0x290] sm:$0xff]
  %v91 = vld [vmem:[%s0 + $0x298] sm:$0xff]
  %v92 = vld [vmem:[%s0 + $0x2a0] sm:$0xff]
  %v93 = vld [vmem:[%s0 + $0x2a8] sm:$0xff]
  %v94 = vld [vmem:[%s0 + $0x2b0] sm:$0xff]
  %v95 = vld [vmem:[%s0 + $0x2b8] sm:$0xff]
  %v96 = vld [vmem:[%s0 + $0x2c0] sm:$0xff]
  %v97 = vld [vmem:[%s0 + $0x2c8] sm:$0xff]
  %v98 = vld [vmem:[%s0 + $0x2d0] sm:$0xff]
  %v99 = vld [vmem:[%s0 + $0x2d8] sm:$0xff]
  %v100 = vld [vmem:[%s0 + $0x2e0] sm:$0xff]
  %v101 = vld [vmem:[%s0 + $0x2e8] sm:$0xff]
  %v102 = vld [vmem:[%s0 + $0x2f0] sm:$0xff]
  %v103 = vld [vmem:[%s0 + $0x2f8] sm:$0xff]
  %v104 = vld [vmem:[%s0 + $0x300] sm:$0xff]
  %v105 = vld [vmem:[%s0 + $0x308] sm:$0xff]
  %v106 = vld [vmem:[%s0 + $0x310] sm:$0xff]
  %v107 = vld [vmem:[%s0 + $0x318] sm:$0xff]
  %v108 = vld [vmem:[%s0 + $0x320] sm:$0xff]
  %v109 = vld [vmem:[%s0 + $0x328] sm:$0xff]
  %v110 = vld [vmem:[%s0 + $0x330] sm:$0xff]
  %v111 = vld [vmem:[%s0 + $0x338] sm:$0xff]
  %v112 = vld [vmem:[%s0 + $0x340] sm:$0xff]
  %v113 = vld [vmem:[%s0 + $0x348] sm:$0xff]
  %v114 = vld [vmem:[%s0 + $0x350] sm:$0xff]
  %v115 = vld [vmem:[%s0 + $0x358] sm:$0xff]
  %v116 = vld [vmem:[%s0 + $0x360] sm:$0xff]
  %v117 = vld [vmem:[%s0 + $0x368] sm:$0xff]
  %v118 = vld [vmem:[%s0 + $0x370] sm:$0xff]
  %v119 = vld [vmem:[%s0 + $0x378] sm:$0xff]
  %v120 = vld [vmem:[%s0 + $0x380] sm:$0xff]
  %v121 = vld [vmem:[%s0 + $0x388] sm:$0xff]
  %v122 = vld [vmem:[%s0 + $0x390] sm:$0xff]
  %v123 = vld [vmem:[%s0 + $0x398] sm:$0xff]
  %v124 = vld [vmem:[%s0 + $0x3a0] sm:$0xff]
  %v125 = vld [vmem:[%s0 + $0x3a8] sm:$0xff]
  %v126 = vld [vmem:[%s0 + $0x3b0] sm:$0xff]
  %v127 = vld [vmem:[%s0 + $0x3b8] sm:$0xff]
  %v128 = vld [vmem:[%s0 + $0x3c0] sm:$0xff]
  %v129 = vld [vmem:[%s0 + $0x3c8] sm:$0xff]
  %v130 = vld [vmem:[%s0 + $0x3d0] sm:$0xff]
  %v131 = vld [vmem:[%s0 + $0x3d8] sm:$0xff]
  %v132 = vld [vmem:[%s0 + $0x3e0] sm:$0xff]
  %v133 = vld [vmem:[%s0 + $0x3e8] sm:$0xff]
  %v134 = vld [vmem:[%s0 + $0x3f0] sm:$0xff]
  %v135 = vld [vmem:[%s0 + $0x3f8] sm:$0xff]
  %v136 = vld [vmem:[%s0 + $0x400] sm:$0xff]
  %v137 = vld [vmem:[%s0 + $0x408] sm:$0xff]
  %v138 = vld [vmem:[%s0 + $0x410] sm:$0xff]
  %v139 = vld [vmem:[%s0 + $0x418] sm:$0xff]
  %v140 = vld [vmem:[%s0 + $0x420] sm:$0xff]
  %v141 = vld [vmem:[%s0 + $0x428] sm:$0xff]
  %v142 = vld [vmem:[%s0 + $0x430] sm:$0xff]
  %v143 = vld [vmem:[%s0 + $0x438] sm:$0xff]
  %v144 = vld [vmem:[%s0 + $0x440] sm:$0xff]
  %v145 = vld [vmem:[%s0 + $0x448] sm:$0xff]
  %v146 = vld [vmem:[%s0 + $0x450] sm:$0xff]
  %v147 = vld [vmem:[%s0 + $0x458] sm:$0xff]
  %v148 = vld [vmem:[%s0 + $0x460] sm:$0xff]
  %v149 = vld [vmem:[%s0 + $0x468] sm:$0xff]
  %v150 = vld [vmem:[%s0 + $0x470] sm:$0xff]
  %v151 = vld [vmem:[%s0 + $0x478] sm:$0xff]
  %v152 = vld [vmem:[%s0 + $0x480] sm:$0xff]
  %v153 = vld [vmem:[%s0 + $0x488] sm:$0xff]
  %v154 = vld [vmem:[%s0 + $0x490] sm:$0xff]
  %v155 = vld [vmem:[%s0 + $0x498] sm:$0xff]
  %v156 = vld [vmem:[%s0 + $0x4a0] sm:$0xff]
  %v157 = vld [vmem:[%s0 + $0x4a8] sm:$0xff]
  %v158 = vld [vmem:[%s0 + $0x4b0] sm:$0xff]
  %v159 = vld [vmem:[%s0 + $0x4b8] sm:$0xff]
  %v160 = vld [vmem:[%s0 + $0x4c0] sm:$0xff]
  %v161 = vld [vmem:[%s0 + $0x4c8] sm:$0xff]
  %v162 = vld [vmem:[%s0 + $0x4d0] sm:$0xff]
  %v163 = vld [vmem:[%s0 + $0x4d8] sm:$0xff]
  %v164 = vld [vmem:[%s0 + $0x4e0] sm:$0xff]
  %v165 = vld [vmem:[%s0 + $0x4e8] sm:$0xff]
  %v166 = vld [vmem:[%s0 + $0x4f0] sm:$0xff]
  %v167 = vld [vmem:[%s0 + $0x4f8] sm:$0xff]
  %v168 = vld [vmem:[%s0 + $0x500] sm:$0xff]
  %v169 = vld [vmem:[%s0 + $0x508] sm:$0xff]
  %v170 = vld [vmem:[%s0 + $0x510] sm:$0xff]
  %v171 = vld [vmem:[%s0 + $0x518] sm:$0xff]
  %v172 = vld [vmem:[%s0 + $0x520] sm:$0xff]
  %v173 = vld [vmem:[%s0 + $0x528] sm:$0xff]
  %v174 = vld [vmem:[%s0 + $0x530] sm:$0xff]
  %v175 = vld [vmem:[%s0 + $0x538] sm:$0xff]
  %v176 = vld [vmem:[%s0 + $0x540] sm:$0xff]
  %v177 = vld [vmem:[%s0 + $0x548] sm:$0xff]
  %v178 = vld [vmem:[%s0 + $0x550] sm:$0xff]
  %v179 = vld [vmem:[%s0 + $0x558] sm:$0xff]
  %v180 = vld [vmem:[%s0 + $0x560] sm:$0xff]
  %v181 = vld [vmem:[%s0 + $0x568] sm:$0xff]
  %v182 = vld [vmem:[%s0 + $0x570] sm:$0xff]
  %v183 = vld [vmem:[%s0 + $0x578] sm:$0xff]
  %v184 = vld [vmem:[%s0 + $0x580] sm:$0xff]
  %v185 = vld [vmem:[%s0 + $0x588] sm:$0xff]
  %v186 = vld [vmem:[%s0 + $0x590] sm:$0xff]
  %v187 = vld [vmem:[%s0 + $0x598] sm:$0xff]
  %v188 = vld [vmem:[%s0 + $0x5a0] sm:$0xff]
  %v189 = vld [vmem:[%s0 + $0x5a8] sm:$0xff]
  %v190 = vld [vmem:[%s0 + $0x5b0] sm:$0xff]
  %v191 = vld [vmem:[%s0 + $0x5b8] sm:$0xff]
  %v192 = vld [vmem:[%s0 + $0x5c0] sm:$0xff]
  %v193 = vld [vmem:[%s0 + $0x5c8] sm:$0xff]
  %v194 = vld [vmem:[%s0 + $0x5d0] sm:$0xff]
  %v195 = vld [vmem:[%s0 + $0x5d8] sm:$0xff]
  %v196 = vld [vmem:[%s0 + $0x5e0] sm:$0xff]
  %v197 = vld [vmem:[%s0 + $0x5e8] sm:$0xff]
  %v198 = vld [vmem:[%s0 + $0x5f0] sm:$0xff]
  %v199 = vld [vmem:[%s0 + $0x5f8] sm:$0xff]
  %v200 = vmax.f32 %v8, %v24
  %v201 = vmax.f32 %v200, %v40
  %v202 = vrot.slane %v201, 4
  %v203 = vmax.f32 %v201, %v202
  %v204 = vrot.slane %v203, 2
  %v205 = vmax.f32 %v203, %v204
  %v206 = vrot.slane %v205, 1
  %v207 = vmax.f32 %v205, %v206
  %v208 = vmax.f32 %v9, %v25
  %v209 = vmax.f32 %v208, %v41
  %v210 = vrot.slane %v209, 4
  %v211 = vmax.f32 %v209, %v210
  %v212 = vrot.slane %v211, 2
  %v213 = vmax.f32 %v211, %v212
  %v214 = vrot.slane %v213, 1
  %v215 = vmax.f32 %v213, %v214
  %v216 = vmax.f32 %v10, %v26
  %v217 = vmax.f32 %v216, %v42
  %v218 = vrot.slane %v217, 4
  %v219 = vmax.f32 %v217, %v218
  %v220 = vrot.slane %v219, 2
  %v221 = vmax.f32 %v219, %v220
  %v222 = vrot.slane %v221, 1
  %v223 = vmax.f32 %v221, %v222
  %v224 = vmax.f32 %v11, %v27
  %v225 = vmax.f32 %v224, %v43
  %v226 = vrot.slane %v225, 4
  %v227 = vmax.f32 %v225, %v226
  %v228 = vrot.slane %v227, 2
  %v229 = vmax.f32 %v227, %v228
  %v230 = vrot.slane %v229, 1
  %v231 = vmax.f32 %v229, %v230
  %v232 = vmax.f32 %v12, %v28
  %v233 = vmax.f32 %v232, %v44
  %v234 = vrot.slane %v233, 4
  %v235 = vmax.f32 %v233, %v234
  %v236 = vrot.slane %v235, 2
  %v237 = vmax.f32 %v235, %v236
  %v238 = vrot.slane %v237, 1
  %v239 = vmax.f32 %v237, %v238
  %v240 = vmax.f32 %v13, %v29
  %v241 = vmax.f32 %v240, %v45
  %v242 = vrot.slane %v241, 4
  %v243 = vmax.f32 %v241, %v242
  %v244 = vrot.slane %v243, 2
  %v245 = vmax.f32 %v243, %v244
  %v246 = vrot.slane %v245, 1
  %v247 = vmax.f32 %v245, %v246
  %v248 = vmax.f32 %v14, %v30
  %v249 = vmax.f32 %v248, %v46
  %v250 = vrot.slane %v249, 4
  %v251 = vmax.f32 %v249, %v250
  %v252 = vrot.slane %v251, 2
  %v253 = vmax.f32 %v251, %v252
  %v254 = vrot.slane %v253, 1
  %v255 = vmax.f32 %v253, %v254
  %v256 = vmax.f32 %v15, %v31
  %v257 = vmax.f32 %v256, %v47
  %v258 = vrot.slane %v257, 4
  %v259 = vmax.f32 %v257, %v258
  %v260 = vrot.slane %v259, 2
  %v261 = vmax.f32 %v259, %v260
  %v262 = vrot.slane %v261, 1
  %v263 = vmax.f32 %v261, %v262
  %v264 = vmax.f32 %v16, %v32
  %v265 = vmax.f32 %v264, %v48
  %v266 = vrot.slane %v265, 4
  %v267 = vmax.f32 %v265, %v266
  %v268 = vrot.slane %v267, 2
  %v269 = vmax.f32 %v267, %v268
  %v270 = vrot.slane %v269, 1
  %v271 = vmax.f32 %v269, %v270
  %v272 = vmax.f32 %v17, %v33
  %v273 = vmax.f32 %v272, %v49
  %v274 = vrot.slane %v273, 4
  %v275 = vmax.f32 %v273, %v274
  %v276 = vrot.slane %v275, 2
  %v277 = vmax.f32 %v275, %v276
  %v278 = vrot.slane %v277, 1
  %v279 = vmax.f32 %v277, %v278
  %v280 = vmax.f32 %v18, %v34
  %v281 = vmax.f32 %v280, %v50
  %v282 = vrot.slane %v281, 4
  %v283 = vmax.f32 %v281, %v282
  %v284 = vrot.slane %v283, 2
  %v285 = vmax.f32 %v283, %v284
  %v286 = vrot.slane %v285, 1
  %v287 = vmax.f32 %v285, %v286
  %v288 = vmax.f32 %v19, %v35
  %v289 = vmax.f32 %v288, %v51
  %v290 = vrot.slane %v289, 4
  %v291 = vmax.f32 %v289, %v290
  %v292 = vrot.slane %v291, 2
  %v293 = vmax.f32 %v291, %v292
  %v294 = vrot.slane %v293, 1
  %v295 = vmax.f32 %v293, %v294
  %v296 = vmax.f32 %v20, %v36
  %v297 = vmax.f32 %v296, %v52
  %v298 = vrot.slane %v297, 4
  %v299 = vmax.f32 %v297, %v298
  %v300 = vrot.slane %v299, 2
  %v301 = vmax.f32 %v299, %v300
  %v302 = vrot.slane %v301, 1
  %v303 = vmax.f32 %v301, %v302
  %v304 = vmax.f32 %v21, %v37
  %v305 = vmax.f32 %v304, %v53
  %v306 = vrot.slane %v305, 4
  %v307 = vmax.f32 %v305, %v306
  %v308 = vrot.slane %v307, 2
  %v309 = vmax.f32 %v307, %v308
  %v310 = vrot.slane %v309, 1
  %v311 = vmax.f32 %v309, %v310
  %v312 = vmax.f32 %v22, %v38
  %v313 = vmax.f32 %v312, %v54
  %v314 = vrot.slane %v313, 4
  %v315 = vmax.f32 %v313, %v314
  %v316 = vrot.slane %v315, 2
  %v317 = vmax.f32 %v315, %v316
  %v318 = vrot.slane %v317, 1
  %v319 = vmax.f32 %v317, %v318
  %v320 = vmax.f32 %v23, %v39
  %v321 = vmax.f32 %v320, %v55
  %v322 = vrot.slane %v321, 4
  %v323 = vmax.f32 %v321, %v322
  %v324 = vrot.slane %v323, 2
  %v325 = vmax.f32 %v323, %v324
  %v326 = vrot.slane %v325, 1
  %v327 = vmax.f32 %v325, %v326
  %v328 = vmax.f32 %v56, %v72
  %v329 = vmax.f32 %v328, %v88
  %v330 = vrot.slane %v329, 4
  %v331 = vmax.f32 %v329, %v330
  %v332 = vrot.slane %v331, 2
  %v333 = vmax.f32 %v331, %v332
  %v334 = vrot.slane %v333, 1
  %v335 = vmax.f32 %v333, %v334
  %v336 = vmax.f32 %v57, %v73
  %v337 = vmax.f32 %v336, %v89
  %v338 = vrot.slane %v337, 4
  %v339 = vmax.f32 %v337, %v338
  %v340 = vrot.slane %v339, 2
  %v341 = vmax.f32 %v339, %v340
  %v342 = vrot.slane %v341, 1
  %v343 = vmax.f32 %v341, %v342
  %v344 = vmax.f32 %v58, %v74
  %v345 = vmax.f32 %v344, %v90
  %v346 = vrot.slane %v345, 4
  %v347 = vmax.f32 %v345, %v346
  %v348 = vrot.slane %v347, 2
  %v349 = vmax.f32 %v347, %v348
  %v350 = vrot.slane %v349, 1
  %v351 = vmax.f32 %v349, %v350
  %v352 = vmax.f32 %v59, %v75
  %v353 = vmax.f32 %v352, %v91
  %v354 = vrot.slane %v353, 4
  %v355 = vmax.f32 %v353, %v354
  %v356 = vrot.slane %v355, 2
  %v357 = vmax.f32 %v355, %v356
  %v358 = vrot.slane %v357, 1
  %v359 = vmax.f32 %v357, %v358
  %v360 = vmax.f32 %v60, %v76
  %v361 = vmax.f32 %v360, %v92
  %v362 = vrot.slane %v361, 4
  %v363 = vmax.f32 %v361, %v362
  %v364 = vrot.slane %v363, 2
  %v365 = vmax.f32 %v363, %v364
  %v366 = vrot.slane %v365, 1
  %v367 = vmax.f32 %v365, %v366
  %v368 = vmax.f32 %v61, %v77
  %v369 = vmax.f32 %v368, %v93
  %v370 = vrot.slane %v369, 4
  %v371 = vmax.f32 %v369, %v370
  %v372 = vrot.slane %v371, 2
  %v373 = vmax.f32 %v371, %v372
  %v374 = vrot.slane %v373, 1
  %v375 = vmax.f32 %v373, %v374
  %v376 = vmax.f32 %v62, %v78
  %v377 = vmax.f32 %v376, %v94
  %v378 = vrot.slane %v377, 4
  %v379 = vmax.f32 %v377, %v378
  %v380 = vrot.slane %v379, 2
  %v381 = vmax.f32 %v379, %v380
  %v382 = vrot.slane %v381, 1
  %v383 = vmax.f32 %v381, %v382
  %v384 = vmax.f32 %v63, %v79
  %v385 = vmax.f32 %v384, %v95
  %v386 = vrot.slane %v385, 4
  %v387 = vmax.f32 %v385, %v386
  %v388 = vrot.slane %v387, 2
  %v389 = vmax.f32 %v387, %v388
  %v390 = vrot.slane %v389, 1
  %v391 = vmax.f32 %v389, %v390
  %v392 = vmax.f32 %v64, %v80
  %v393 = vmax.f32 %v392, %v96
  %v394 = vrot.slane %v393, 4
  %v395 = vmax.f32 %v393, %v394
  %v396 = vrot.slane %v395, 2
  %v397 = vmax.f32 %v395, %v396
  %v398 = vrot.slane %v397, 1
  %v399 = vmax.f32 %v397, %v398
  %v400 = vmax.f32 %v65, %v81
  %v401 = vmax.f32 %v400, %v97
  %v402 = vrot.slane %v401, 4
  %v403 = vmax.f32 %v401, %v402
  %v404 = vrot.slane %v403, 2
  %v405 = vmax.f32 %v403, %v404
  %v406 = vrot.slane %v405, 1
  %v407 = vmax.f32 %v405, %v406
  %v408 = vmax.f32 %v66, %v82
  %v409 = vmax.f32 %v408, %v98
  %v410 = vrot.slane %v409, 4
  %v411 = vmax.f32 %v409, %v410
  %v412 = vrot.slane %v411, 2
  %v413 = vmax.f32 %v411, %v412
  %v414 = vrot.slane %v413, 1
  %v415 = vmax.f32 %v413, %v414
  %v416 = vmax.f32 %v67, %v83
  %v417 = vmax.f32 %v416, %v99
  %v418 = vrot.slane %v417, 4
  %v419 = vmax.f32 %v417, %v418
  %v420 = vrot.slane %v419, 2
  %v421 = vmax.f32 %v419, %v420
  %v422 = vrot.slane %v421, 1
  %v423 = vmax.f32 %v421, %v422
  %v424 = vmax.f32 %v68, %v84
  %v425 = vmax.f32 %v424, %v100
  %v426 = vrot.slane %v425, 4
  %v427 = vmax.f32 %v425, %v426
  %v428 = vrot.slane %v427, 2
  %v429 = vmax.f32 %v427, %v428
  %v430 = vrot.slane %v429, 1
  %v431 = vmax.f32 %v429, %v430
  %v432 = vmax.f32 %v69, %v85
  %v433 = vmax.f32 %v432, %v101
  %v434 = vrot.slane %v433, 4
  %v435 = vmax.f32 %v433, %v434
  %v436 = vrot.slane %v435, 2
  %v437 = vmax.f32 %v435, %v436
  %v438 = vrot.slane %v437, 1
  %v439 = vmax.f32 %v437, %v438
  %v440 = vmax.f32 %v70, %v86
  %v441 = vmax.f32 %v440, %v102
  %v442 = vrot.slane %v441, 4
  %v443 = vmax.f32 %v441, %v442
  %v444 = vrot.slane %v443, 2
  %v445 = vmax.f32 %v443, %v444
  %v446 = vrot.slane %v445, 1
  %v447 = vmax.f32 %v445, %v446
  %v448 = vmax.f32 %v71, %v87
  %v449 = vmax.f32 %v448, %v103
  %v450 = vrot.slane %v449, 4
  %v451 = vmax.f32 %v449, %v450
  %v452 = vrot.slane %v451, 2
  %v453 = vmax.f32 %v451, %v452
  %v454 = vrot.slane %v453, 1
  %v455 = vmax.f32 %v453, %v454
  %v456 = vmax.f32 %v104, %v120
  %v457 = vmax.f32 %v456, %v136
  %v458 = vrot.slane %v457, 4
  %v459 = vmax.f32 %v457, %v458
  %v460 = vrot.slane %v459, 2
  %v461 = vmax.f32 %v459, %v460
  %v462 = vrot.slane %v461, 1
  %v463 = vmax.f32 %v461, %v462
  %v464 = vmax.f32 %v105, %v121
  %v465 = vmax.f32 %v464, %v137
  %v466 = vrot.slane %v465, 4
  %v467 = vmax.f32 %v465, %v466
  %v468 = vrot.slane %v467, 2
  %v469 = vmax.f32 %v467, %v468
  %v470 = vrot.slane %v469, 1
  %v471 = vmax.f32 %v469, %v470
  %v472 = vmax.f32 %v106, %v122
  %v473 = vmax.f32 %v472, %v138
  %v474 = vrot.slane %v473, 4
  %v475 = vmax.f32 %v473, %v474
  %v476 = vrot.slane %v475, 2
  %v477 = vmax.f32 %v475, %v476
  %v478 = vrot.slane %v477, 1
  %v479 = vmax.f32 %v477, %v478
  %v480 = vmax.f32 %v107, %v123
  %v481 = vmax.f32 %v480, %v139
  %v482 = vrot.slane %v481, 4
  %v483 = vmax.f32 %v481, %v482
  %v484 = vrot.slane %v483, 2
  %v485 = vmax.f32 %v483, %v484
  %v486 = vrot.slane %v485, 1
  %v487 = vmax.f32 %v485, %v486
  %v488 = vmax.f32 %v108, %v124
  %v489 = vmax.f32 %v488, %v140
  %v490 = vrot.slane %v489, 4
  %v491 = vmax.f32 %v489, %v490
  %v492 = vrot.slane %v491, 2
  %v493 = vmax.f32 %v491, %v492
  %v494 = vrot.slane %v493, 1
  %v495 = vmax.f32 %v493, %v494
  %v496 = vmax.f32 %v109, %v125
  %v497 = vmax.f32 %v496, %v141
  %v498 = vrot.slane %v497, 4
  %v499 = vmax.f32 %v497, %v498
  %v500 = vrot.slane %v499, 2
  %v501 = vmax.f32 %v499, %v500
  %v502 = vrot.slane %v501, 1
  %v503 = vmax.f32 %v501, %v502
  %v504 = vmax.f32 %v110, %v126
  %v505 = vmax.f32 %v504, %v142
  %v506 = vrot.slane %v505, 4
  %v507 = vmax.f32 %v505, %v506
  %v508 = vrot.slane %v507, 2
  %v509 = vmax.f32 %v507, %v508
  %v510 = vrot.slane %v509, 1
  %v511 = vmax.f32 %v509, %v510
  %v512 = vmax.f32 %v111, %v127
  %v513 = vmax.f32 %v512, %v143
  %v514 = vrot.slane %v513, 4
  %v515 = vmax.f32 %v513, %v514
  %v516 = vrot.slane %v515, 2
  %v517 = vmax.f32 %v515, %v516
  %v518 = vrot.slane %v517, 1
  %v519 = vmax.f32 %v517, %v518
  %v520 = vmax.f32 %v112, %v128
  %v521 = vmax.f32 %v520, %v144
  %v522 = vrot.slane %v521, 4
  %v523 = vmax.f32 %v521, %v522
  %v524 = vrot.slane %v523, 2
  %v525 = vmax.f32 %v523, %v524
  %v526 = vrot.slane %v525, 1
  %v527 = vmax.f32 %v525, %v526
  %v528 = vmax.f32 %v113, %v129
  %v529 = vmax.f32 %v528, %v145
  %v530 = vrot.slane %v529, 4
  %v531 = vmax.f32 %v529, %v530
  %v532 = vrot.slane %v531, 2
  %v533 = vmax.f32 %v531, %v532
  %v534 = vrot.slane %v533, 1
  %v535 = vmax.f32 %v533, %v534
  %v536 = vmax.f32 %v114, %v130
  %v537 = vmax.f32 %v536, %v146
  %v538 = vrot.slane %v537, 4
  %v539 = vmax.f32 %v537, %v538
  %v540 = vrot.slane %v539, 2
  %v541 = vmax.f32 %v539, %v540
  %v542 = vrot.slane %v541, 1
  %v543 = vmax.f32 %v541, %v542
  %v544 = vmax.f32 %v115, %v131
  %v545 = vmax.f32 %v544, %v147
  %v546 = vrot.slane %v545, 4
  %v547 = vmax.f32 %v545, %v546
  %v548 = vrot.slane %v547, 2
  %v549 = vmax.f32 %v547, %v548
  %v550 = vrot.slane %v549, 1
  %v551 = vmax.f32 %v549, %v550
  %v552 = vmax.f32 %v116, %v132
  %v553 = vmax.f32 %v552, %v148
  %v554 = vrot.slane %v553, 4
  %v555 = vmax.f32 %v553, %v554
  %v556 = vrot.slane %v555, 2
  %v557 = vmax.f32 %v555, %v556
  %v558 = vrot.slane %v557, 1
  %v559 = vmax.f32 %v557, %v558
  %v560 = vmax.f32 %v117, %v133
  %v561 = vmax.f32 %v560, %v149
  %v562 = vrot.slane %v561, 4
  %v563 = vmax.f32 %v561, %v562
  %v564 = vrot.slane %v563, 2
  %v565 = vmax.f32 %v563, %v564
  %v566 = vrot.slane %v565, 1
  %v567 = vmax.f32 %v565, %v566
  %v568 = vmax.f32 %v118, %v134
  %v569 = vmax.f32 %v568, %v150
  %v570 = vrot.slane %v569, 4
  %v571 = vmax.f32 %v569, %v570
  %v572 = vrot.slane %v571, 2
  %v573 = vmax.f32 %v571, %v572
  %v574 = vrot.slane %v573, 1
  %v575 = vmax.f32 %v573, %v574
  %v576 = vmax.f32 %v119, %v135
  %v577 = vmax.f32 %v576, %v151
  %v578 = vrot.slane %v577, 4
  %v579 = vmax.f32 %v577, %v578
  %v580 = vrot.slane %v579, 2
  %v581 = vmax.f32 %v579, %v580
  %v582 = vrot.slane %v581, 1
  %v583 = vmax.f32 %v581, %v582
  %v584 = vmax.f32 %v152, %v168
  %v585 = vmax.f32 %v584, %v184
  %v586 = vrot.slane %v585, 4
  %v587 = vmax.f32 %v585, %v586
  %v588 = vrot.slane %v587, 2
  %v589 = vmax.f32 %v587, %v588
  %v590 = vrot.slane %v589, 1
  %v591 = vmax.f32 %v589, %v590
  %v592 = vmax.f32 %v153, %v169
  %v593 = vmax.f32 %v592, %v185
  %v594 = vrot.slane %v593, 4
  %v595 = vmax.f32 %v593, %v594
  %v596 = vrot.slane %v595, 2
  %v597 = vmax.f32 %v595, %v596
  %v598 = vrot.slane %v597, 1
  %v599 = vmax.f32 %v597, %v598
  %v600 = vmax.f32 %v154, %v170
  %v601 = vmax.f32 %v600, %v186
  %v602 = vrot.slane %v601, 4
  %v603 = vmax.f32 %v601, %v602
  %v604 = vrot.slane %v603, 2
  %v605 = vmax.f32 %v603, %v604
  %v606 = vrot.slane %v605, 1
  %v607 = vmax.f32 %v605, %v606
  %v608 = vmax.f32 %v155, %v171
  %v609 = vmax.f32 %v608, %v187
  %v610 = vrot.slane %v609, 4
  %v611 = vmax.f32 %v609, %v610
  %v612 = vrot.slane %v611, 2
  %v613 = vmax.f32 %v611, %v612
  %v614 = vrot.slane %v613, 1
  %v615 = vmax.f32 %v613, %v614
  %v616 = vmax.f32 %v156, %v172
  %v617 = vmax.f32 %v616, %v188
  %v618 = vrot.slane %v617, 4
  %v619 = vmax.f32 %v617, %v618
  %v620 = vrot.slane %v619, 2
  %v621 = vmax.f32 %v619, %v620
  %v622 = vrot.slane %v621, 1
  %v623 = vmax.f32 %v621, %v622
  %v624 = vmax.f32 %v157, %v173
  %v625 = vmax.f32 %v624, %v189
  %v626 = vrot.slane %v625, 4
  %v627 = vmax.f32 %v625, %v626
  %v628 = vrot.slane %v627, 2
  %v629 = vmax.f32 %v627, %v628
  %v630 = vrot.slane %v629, 1
  %v631 = vmax.f32 %v629, %v630
  %v632 = vmax.f32 %v158, %v174
  %v633 = vmax.f32 %v632, %v190
  %v634 = vrot.slane %v633, 4
  %v635 = vmax.f32 %v633, %v634
  %v636 = vrot.slane %v635, 2
  %v637 = vmax.f32 %v635, %v636
  %v638 = vrot.slane %v637, 1
  %v639 = vmax.f32 %v637, %v638
  %v640 = vmax.f32 %v159, %v175
  %v641 = vmax.f32 %v640, %v191
  %v642 = vrot.slane %v641, 4
  %v643 = vmax.f32 %v641, %v642
  %v644 = vrot.slane %v643, 2
  %v645 = vmax.f32 %v643, %v644
  %v646 = vrot.slane %v645, 1
  %v647 = vmax.f32 %v645, %v646
  %v648 = vmax.f32 %v160, %v176
  %v649 = vmax.f32 %v648, %v192
  %v650 = vrot.slane %v649, 4
  %v651 = vmax.f32 %v649, %v650
  %v652 = vrot.slane %v651, 2
  %v653 = vmax.f32 %v651, %v652
  %v654 = vrot.slane %v653, 1
  %v655 = vmax.f32 %v653, %v654
  %v656 = vmax.f32 %v161, %v177
  %v657 = vmax.f32 %v656, %v193
  %v658 = vrot.slane %v657, 4
  %v659 = vmax.f32 %v657, %v658
  %v660 = vrot.slane %v659, 2
  %v661 = vmax.f32 %v659, %v660
  %v662 = vrot.slane %v661, 1
  %v663 = vmax.f32 %v661, %v662
  %v664 = vmax.f32 %v162, %v178
  %v665 = vmax.f32 %v664, %v194
  %v666 = vrot.slane %v665, 4
  %v667 = vmax.f32 %v665, %v666
  %v668 = vrot.slane %v667, 2
  %v669 = vmax.f32 %v667, %v668
  %v670 = vrot.slane %v669, 1
  %v671 = vmax.f32 %v669, %v670
  %v672 = vmax.f32 %v163, %v179
  %v673 = vmax.f32 %v672, %v195
  %v674 = vrot.slane %v673, 4
  %v675 = vmax.f32 %v673, %v674
  %v676 = vrot.slane %v675, 2
  %v677 = vmax.f32 %v675, %v676
  %v678 = vrot.slane %v677, 1
  %v679 = vmax.f32 %v677, %v678
  %v680 = vmax.f32 %v164, %v180
  %v681 = vmax.f32 %v680, %v196
  %v682 = vrot.slane %v681, 4
  %v683 = vmax.f32 %v681, %v682
  %v684 = vrot.slane %v683, 2
  %v685 = vmax.f32 %v683, %v684
  %v686 = vrot.slane %v685, 1
  %v687 = vmax.f32 %v685, %v686
  %v688 = vmax.f32 %v165, %v181
  %v689 = vmax.f32 %v688, %v197
  %v690 = vrot.slane %v689, 4
  %v691 = vmax.f32 %v689, %v690
  %v692 = vrot.slane %v691, 2
  %v693 = vmax.f32 %v691, %v692
  %v694 = vrot.slane %v693, 1
  %v695 = vmax.f32 %v693, %v694
  %v696 = vmax.f32 %v166, %v182
  %v697 = vmax.f32 %v696, %v198
  %v698 = vrot.slane %v697, 4
  %v699 = vmax.f32 %v697, %v698
  %v700 = vrot.slane %v699, 2
  %v701 = vmax.f32 %v699, %v700
  %v702 = vrot.slane %v701, 1
  %v703 = vmax.f32 %v701, %v702
  %v704 = vmax.f32 %v167, %v183
  %v705 = vmax.f32 %v704, %v199
  %v706 = vrot.slane %v705, 4
  %v707 = vmax.f32 %v705, %v706
  %v708 = vrot.slane %v707, 2
  %v709 = vmax.f32 %v707, %v708
  %v710 = vrot.slane %v709, 1
  %v711 = vmax.f32 %v709, %v710
  %v776 = vrot.slane %v215, 4
  %v777 = vrot.slane %v231, 4
  %v778 = vrot.slane %v247, 4
  %v779 = vrot.slane %v263, 4
  %v780 = vrot.slane %v279, 4
  %v781 = vrot.slane %v295, 4
  %v782 = vrot.slane %v311, 4
  %v783 = vrot.slane %v327, 4
  %v784 = vrot.slane %v343, 4
  %v785 = vrot.slane %v359, 4
  %v786 = vrot.slane %v375, 4
  %v787 = vrot.slane %v391, 4
  %v788 = vrot.slane %v407, 4
  %v789 = vrot.slane %v423, 4
  %v790 = vrot.slane %v439, 4
  %v791 = vrot.slane %v455, 4
  %v792 = vrot.slane %v471, 4
  %v793 = vrot.slane %v487, 4
  %v794 = vrot.slane %v503, 4
  %v795 = vrot.slane %v519, 4
  %v796 = vrot.slane %v535, 4
  %v797 = vrot.slane %v551, 4
  %v798 = vrot.slane %v567, 4
  %v799 = vrot.slane %v583, 4
  %v800 = vrot.slane %v599, 4
  %v801 = vrot.slane %v615, 4
  %v802 = vrot.slane %v631, 4
  %v803 = vrot.slane %v647, 4
  %v804 = vrot.slane %v663, 4
  %v805 = vrot.slane %v679, 4
  %v806 = vrot.slane %v695, 4
  %v807 = vrot.slane %v711, 4
  %vm808 = vcmask 1043456
  %v809 = vsel %vm808, %v207, %v776
  %v810 = vsel %vm808, %v223, %v777
  %v811 = vsel %vm808, %v239, %v778
  %v812 = vsel %vm808, %v255, %v779
  %v813 = vsel %vm808, %v271, %v780
  %v814 = vsel %vm808, %v287, %v781
  %v815 = vsel %vm808, %v303, %v782
  %v816 = vsel %vm808, %v319, %v783
  %v817 = vsel %vm808, %v335, %v784
  %v818 = vsel %vm808, %v351, %v785
  %v819 = vsel %vm808, %v367, %v786
  %v820 = vsel %vm808, %v383, %v787
  %v821 = vsel %vm808, %v399, %v788
  %v822 = vsel %vm808, %v415, %v789
  %v823 = vsel %vm808, %v431, %v790
  %v824 = vsel %vm808, %v447, %v791
  %v825 = vsel %vm808, %v463, %v792
  %v826 = vsel %vm808, %v479, %v793
  %v827 = vsel %vm808, %v495, %v794
  %v828 = vsel %vm808, %v511, %v795
  %v829 = vsel %vm808, %v527, %v796
  %v830 = vsel %vm808, %v543, %v797
  %v831 = vsel %vm808, %v559, %v798
  %v832 = vsel %vm808, %v575, %v799
  %v833 = vsel %vm808, %v591, %v800
  %v834 = vsel %vm808, %v607, %v801
  %v835 = vsel %vm808, %v623, %v802
  %v836 = vsel %vm808, %v639, %v803
  %v837 = vsel %vm808, %v655, %v804
  %v838 = vsel %vm808, %v671, %v805
  %v839 = vsel %vm808, %v687, %v806
  %v840 = vsel %vm808, %v703, %v807
  %v841 = vrot.slane %v817, 7
  %vm842 = vcmask 1041409
  %v843 = vsel %vm842, %v841, %v809
  %vm844 = vcmask 1045509
  %v845 = vsel %vm844, %v841, %v843
  %v846 = vrot.slane %v825, 6
  %vm847 = vcmask 1042434
  %v848 = vsel %vm847, %v846, %v845
  %vm849 = vcmask 1046534
  %v850 = vsel %vm849, %v846, %v848
  %v851 = vrot.slane %v833, 5
  %vm852 = vcmask 1043459
  %v853 = vsel %vm852, %v851, %v850
  %vm854 = vcmask 1047559
  %v855 = vsel %vm854, %v851, %v853
  %v856 = vrot.slane %v818, 7
  %v857 = vsel %vm842, %v856, %v810
  %v858 = vsel %vm844, %v856, %v857
  %v859 = vrot.slane %v826, 6
  %v860 = vsel %vm847, %v859, %v858
  %v861 = vsel %vm849, %v859, %v860
  %v862 = vrot.slane %v834, 5
  %v863 = vsel %vm852, %v862, %v861
  %v864 = vsel %vm854, %v862, %v863
  %v865 = vrot.slane %v819, 7
  %v866 = vsel %vm842, %v865, %v811
  %v867 = vsel %vm844, %v865, %v866
  %v868 = vrot.slane %v827, 6
  %v869 = vsel %vm847, %v868, %v867
  %v870 = vsel %vm849, %v868, %v869
  %v871 = vrot.slane %v835, 5
  %v872 = vsel %vm852, %v871, %v870
  %v873 = vsel %vm854, %v871, %v872
  %v874 = vrot.slane %v820, 7
  %v875 = vsel %vm842, %v874, %v812
  %v876 = vsel %vm844, %v874, %v875
  %v877 = vrot.slane %v828, 6
  %v878 = vsel %vm847, %v877, %v876
  %v879 = vsel %vm849, %v877, %v878
  %v880 = vrot.slane %v836, 5
  %v881 = vsel %vm852, %v880, %v879
  %v882 = vsel %vm854, %v880, %v881
  %v883 = vrot.slane %v821, 7
  %v884 = vsel %vm842, %v883, %v813
  %v885 = vsel %vm844, %v883, %v884
  %v886 = vrot.slane %v829, 6
  %v887 = vsel %vm847, %v886, %v885
  %v888 = vsel %vm849, %v886, %v887
  %v889 = vrot.slane %v837, 5
  %v890 = vsel %vm852, %v889, %v888
  %v891 = vsel %vm854, %v889, %v890
  %v892 = vrot.slane %v822, 7
  %v893 = vsel %vm842, %v892, %v814
  %v894 = vsel %vm844, %v892, %v893
  %v895 = vrot.slane %v830, 6
  %v896 = vsel %vm847, %v895, %v894
  %v897 = vsel %vm849, %v895, %v896
  %v898 = vrot.slane %v838, 5
  %v899 = vsel %vm852, %v898, %v897
  %v900 = vsel %vm854, %v898, %v899
  %v901 = vrot.slane %v823, 7
  %v902 = vsel %vm842, %v901, %v815
  %v903 = vsel %vm844, %v901, %v902
  %v904 = vrot.slane %v831, 6
  %v905 = vsel %vm847, %v904, %v903
  %v906 = vsel %vm849, %v904, %v905
  %v907 = vrot.slane %v839, 5
  %v908 = vsel %vm852, %v907, %v906
  %v909 = vsel %vm854, %v907, %v908
  %v910 = vrot.slane %v824, 7
  %v911 = vsel %vm842, %v910, %v816
  %v912 = vsel %vm844, %v910, %v911
  %v913 = vrot.slane %v832, 6
  %v914 = vsel %vm847, %v913, %v912
  %v915 = vsel %vm849, %v913, %v914
  %v916 = vrot.slane %v840, 5
  %v917 = vsel %vm852, %v916, %v915
  %v918 = vsel %vm854, %v916, %v917
  %927 = vst [vmem:[%s1] sm:$0xff] %v855
  %928 = vst [vmem:[%s1 + $0x8] sm:$0xff] %v864
  %929 = vst [vmem:[%s1 + $0x10] sm:$0xff] %v873
  %930 = vst [vmem:[%s1 + $0x18] sm:$0xff] %v882
  %931 = vst [vmem:[%s1 + $0x20] sm:$0xff] %v891
  %932 = vst [vmem:[%s1 + $0x28] sm:$0xff] %v900
  %933 = vst [vmem:[%s1 + $0x30] sm:$0xff] %v909
  %934 = vst [vmem:[%s1 + $0x38] sm:$0xff] %v918
  // Predicated region
  $region6: #{mgn_forward.5} parent=0 // pred_check
    _
  $region7: #{mgn_forward.5} parent=0 // pred_check_branch
    %936 = sbr.rel (0) target = $region9
  $region8: #{mgn_forward.5} parent=0 // pred_region
    _
  $region9: #{mgn_forward.5} parent=0 // pred_fallthru
    _
  // Predicated region
  $region10: #{mgn_forward.5} parent=0 // pred_check
    _
  $region11: #{mgn_forward.5} parent=0 // pred_check_branch
    %938 = sbr.rel (0) target = $region13
  $region12: #{mgn_forward.5} parent=0 // pred_region
    _
  $region13: #{mgn_forward.5} parent=0 // pred_fallthru
    _

// kernel: mgn_forward.4
$region0: #{mgn_forward.4}
  #allocation0 [shape = 'u32[]', space=smem, size = 0x4, offset = 0x4, fixed_abs, tag = 'smem constant byte address 0x4 - core index']
  #allocation1 [shape = 'u32[72,128]{1,0:T(1,128)}', space=vmem, size = 0x9000, scoped, tag = 'internal scratch']
  %s0 = inlined_call_operand.vmem [shape: f32[2,12,2048], index: 0, kind: input, shape index: {}]
  %s1 = inlined_call_operand.vmem [shape: f32[2,2048], index: 1, kind: output, shape index: {}]
  %s2 = sld [smem:[#allocation0]]
  $region14: #{mgn_forward.4} parent=0
    _
  %s4 = ssub.s32 1, %s2
  %s5 = scalar_select 0, %s4, %s2
  // Predicated region
  $region2: #{mgn_forward.4} parent=0 // pred_check
    _
  $region3: #{mgn_forward.4} parent=0 // pred_check_branch
    %7 = sbr.rel (0) target = $region5
  $region4: #{mgn_forward.4} parent=0 // pred_region
    _
  $region5: #{mgn_forward.4} parent=0 // pred_fallthru
    _
  %v8 = vld [vmem:[%s0] sm:$0xff]
  %v9 = vld [vmem:[%s0 + $0x8] sm:$0xff]
  %v10 = vld [vmem:[%s0 + $0x10] sm:$0xff]
  %v11 = vld [vmem:[%s0 + $0x18] sm:$0xff]
  %v12 = vld [vmem:[%s0 + $0x20] sm:$0xff]
  %v13 = vld [vmem:[%s0 + $0x28] sm:$0xff]
  %v14 = vld [vmem:[%s0 + $0x30] sm:$0xff]
  %v15 = vld [vmem:[%s0 + $0x38] sm:$0xff]
  %v16 = vld [vmem:[%s0 + $0x40] sm:$0xff]
  %v17 = vld [vmem:[%s0 + $0x48] sm:$0xff]
  %v18 = vld [vmem:[%s0 + $0x50] sm:$0xff]
  %v19 = vld [vmem:[%s0 + $0x58] sm:$0xff]
  %v20 = vld [vmem:[%s0 + $0x60] sm:$0xff]
  %v21 = vld [vmem:[%s0 + $0x68] sm:$0xff]
  %v22 = vld [vmem:[%s0 + $0x70] sm:$0xff]
  %v23 = vld [vmem:[%s0 + $0x78] sm:$0xff]
  %v24 = vld [vmem:[%s0 + $0x80] sm:$0xf]
  %v25 = vld [vmem:[%s0 + $0x88] sm:$0xf]
  %v26 = vld [vmem:[%s0 + $0x90] sm:$0xf]
  %v27 = vld [vmem:[%s0 + $0x98] sm:$0xf]
  %v28 = vld [vmem:[%s0 + $0xa0] sm:$0xf]
  %v29 = vld [vmem:[%s0 + $0xa8] sm:$0xf]
  %v30 = vld [vmem:[%s0 + $0xb0] sm:$0xf]
  %v31 = vld [vmem:[%s0 + $0xb8] sm:$0xf]
  %v32 = vld [vmem:[%s0 + $0xc0] sm:$0xf]
  %v33 = vld [vmem:[%s0 + $0xc8] sm:$0xf]
  %v34 = vld [vmem:[%s0 + $0xd0] sm:$0xf]
  %v35 = vld [vmem:[%s0 + $0xd8] sm:$0xf]
  %v36 = vld [vmem:[%s0 + $0xe0] sm:$0xf]
  %v37 = vld [vmem:[%s0 + $0xe8] sm:$0xf]
  %v38 = vld [vmem:[%s0 + $0xf0] sm:$0xf]
  %v39 = vld [vmem:[%s0 + $0xf8] sm:$0xf]
  %v40 = vld [vmem:[%s0 + $0x100] sm:$0xff]
  %v41 = vld [vmem:[%s0 + $0x108] sm:$0xff]
  %v42 = vld [vmem:[%s0 + $0x110] sm:$0xff]
  %v43 = vld [vmem:[%s0 + $0x118] sm:$0xff]
  %v44 = vld [vmem:[%s0 + $0x120] sm:$0xff]
  %v45 = vld [vmem:[%s0 + $0x128] sm:$0xff]
  %v46 = vld [vmem:[%s0 + $0x130] sm:$0xff]
  %v47 = vld [vmem:[%s0 + $0x138] sm:$0xff]
  %v48 = vld [vmem:[%s0 + $0x140] sm:$0xff]
  %v49 = vld [vmem:[%s0 + $0x148] sm:$0xff]
  %v50 = vld [vmem:[%s0 + $0x150] sm:$0xff]
  %v51 = vld [vmem:[%s0 + $0x158] sm:$0xff]
  %v52 = vld [vmem:[%s0 + $0x160] sm:$0xff]
  %v53 = vld [vmem:[%s0 + $0x168] sm:$0xff]
  %v54 = vld [vmem:[%s0 + $0x170] sm:$0xff]
  %v55 = vld [vmem:[%s0 + $0x178] sm:$0xff]
  %v56 = vld [vmem:[%s0 + $0x180] sm:$0xf]
  %v57 = vld [vmem:[%s0 + $0x188] sm:$0xf]
  %v58 = vld [vmem:[%s0 + $0x190] sm:$0xf]
  %v59 = vld [vmem:[%s0 + $0x198] sm:$0xf]
  %v60 = vld [vmem:[%s0 + $0x1a0] sm:$0xf]
  %v61 = vld [vmem:[%s0 + $0x1a8] sm:$0xf]
  %v62 = vld [vmem:[%s0 + $0x1b0] sm:$0xf]
  %v63 = vld [vmem:[%s0 + $0x1b8] sm:$0xf]
  %v64 = vld [vmem:[%s0 + $0x1c0] sm:$0xf]
  %v65 = vld [vmem:[%s0 + $0x1c8] sm:$0xf]
  %v66 = vld [vmem:[%s0 + $0x1d0] sm:$0xf]
  %v67 = vld [vmem:[%s0 + $0x1d8] sm:$0xf]
  %v68 = vld [vmem:[%s0 + $0x1e0] sm:$0xf]
  %v69 = vld [vmem:[%s0 + $0x1e8] sm:$0xf]
  %v70 = vld [vmem:[%s0 + $0x1f0] sm:$0xf]
  %v71 = vld [vmem:[%s0 + $0x1f8] sm:$0xf]
  %vm72 = vcmask 1043456
  %v73 = vsel %vm72, %v24, -inf
  %v74 = vmax.f32 %v8, %v73
  %v75 = vrot.slane %v74, 4
  %v76 = vmax.f32 %v74, %v75
  %v77 = vrot.slane %v76, 2
  %v78 = vmax.f32 %v76, %v77
  %v79 = vrot.slane %v78, 1
  %v80 = vmax.f32 %v78, %v79
  %v81 = vsel %vm72, %v25, -inf
  %v82 = vmax.f32 %v9, %v81
  %v83 = vrot.slane %v82, 4
  %v84 = vmax.f32 %v82, %v83
  %v85 = vrot.slane %v84, 2
  %v86 = vmax.f32 %v84, %v85
  %v87 = vrot.slane %v86, 1
  %v88 = vmax.f32 %v86, %v87
  %v89 = vsel %vm72, %v26, -inf
  %v90 = vmax.f32 %v10, %v89
  %v91 = vrot.slane %v90, 4
  %v92 = vmax.f32 %v90, %v91
  %v93 = vrot.slane %v92, 2
  %v94 = vmax.f32 %v92, %v93
  %v95 = vrot.slane %v94, 1
  %v96 = vmax.f32 %v94, %v95
  %v97 = vsel %vm72, %v27, -inf
  %v98 = vmax.f32 %v11, %v97
  %v99 = vrot.slane %v98, 4
  %v100 = vmax.f32 %v98, %v99
  %v101 = vrot.slane %v100, 2
  %v102 = vmax.f32 %v100, %v101
  %v103 = vrot.slane %v102, 1
  %v104 = vmax.f32 %v102, %v103
  %v105 = vsel %vm72, %v28, -inf
  %v106 = vmax.f32 %v12, %v105
  %v107 = vrot.slane %v106, 4
  %v108 = vmax.f32 %v106, %v107
  %v109 = vrot.slane %v108, 2
  %v110 = vmax.f32 %v108, %v109
  %v111 = vrot.slane %v110, 1
  %v112 = vmax.f32 %v110, %v111
  %v113 = vsel %vm72, %v29, -inf
  %v114 = vmax.f32 %v13, %v113
  %v115 = vrot.slane %v114, 4
  %v116 = vmax.f32 %v114, %v115
  %v117 = vrot.slane %v116, 2
  %v118 = vmax.f32 %v116, %v117
  %v119 = vrot.slane %v118, 1
  %v120 = vmax.f32 %v118, %v119
  %v121 = vsel %vm72, %v30, -inf
  %v122 = vmax.f32 %v14, %v121
  %v123 = vrot.slane %v122, 4
  %v124 = vmax.f32 %v122, %v123
  %v125 = vrot.slane %v124, 2
  %v126 = vmax.f32 %v124, %v125
  %v127 = vrot.slane %v126, 1
  %v128 = vmax.f32 %v126, %v127
  %v129 = vsel %vm72, %v31, -inf
  %v130 = vmax.f32 %v15, %v129
  %v131 = vrot.slane %v130, 4
  %v132 = vmax.f32 %v130, %v131
  %v133 = vrot.slane %v132, 2
  %v134 = vmax.f32 %v132, %v133
  %v135 = vrot.slane %v134, 1
  %v136 = vmax.f32 %v134, %v135
  %v137 = vsel %vm72, %v32, -inf
  %v138 = vmax.f32 %v16, %v137
  %v139 = vrot.slane %v138, 4
  %v140 = vmax.f32 %v138, %v139
  %v141 = vrot.slane %v140, 2
  %v142 = vmax.f32 %v140, %v141
  %v143 = vrot.slane %v142, 1
  %v144 = vmax.f32 %v142, %v143
  %v145 = vsel %vm72, %v33, -inf
  %v146 = vmax.f32 %v17, %v145
  %v147 = vrot.slane %v146, 4
  %v148 = vmax.f32 %v146, %v147
  %v149 = vrot.slane %v148, 2
  %v150 = vmax.f32 %v148, %v149
  %v151 = vrot.slane %v150, 1
  %v152 = vmax.f32 %v150, %v151
  %v153 = vsel %vm72, %v34, -inf
  %v154 = vmax.f32 %v18, %v153
  %v155 = vrot.slane %v154, 4
  %v156 = vmax.f32 %v154, %v155
  %v157 = vrot.slane %v156, 2
  %v158 = vmax.f32 %v156, %v157
  %v159 = vrot.slane %v158, 1
  %v160 = vmax.f32 %v158, %v159
  %v161 = vsel %vm72, %v35, -inf
  %v162 = vmax.f32 %v19, %v161
  %v163 = vrot.slane %v162, 4
  %v164 = vmax.f32 %v162, %v163
  %v165 = vrot.slane %v164, 2
  %v166 = vmax.f32 %v164, %v165
  %v167 = vrot.slane %v166, 1
  %v168 = vmax.f32 %v166, %v167
  %v169 = vsel %vm72, %v36, -inf
  %v170 = vmax.f32 %v20, %v169
  %v171 = vrot.slane %v170, 4
  %v172 = vmax.f32 %v170, %v171
  %v173 = vrot.slane %v172, 2
  %v174 = vmax.f32 %v172, %v173
  %v175 = vrot.slane %v174, 1
  %v176 = vmax.f32 %v174, %v175
  %v177 = vsel %vm72, %v37, -inf
  %v178 = vmax.f32 %v21, %v177
  %v179 = vrot.slane %v178, 4
  %v180 = vmax.f32 %v178, %v179
  %v181 = vrot.slane %v180, 2
  %v182 = vmax.f32 %v180, %v181
  %v183 = vrot.slane %v182, 1
  %v184 = vmax.f32 %v182, %v183
  %v185 = vsel %vm72, %v38, -inf
  %v186 = vmax.f32 %v22, %v185
  %v187 = vrot.slane %v186, 4
  %v188 = vmax.f32 %v186, %v187
  %v189 = vrot.slane %v188, 2
  %v190 = vmax.f32 %v188, %v189
  %v191 = vrot.slane %v190, 1
  %v192 = vmax.f32 %v190, %v191
  %v193 = vsel %vm72, %v39, -inf
  %v194 = vmax.f32 %v23, %v193
  %v195 = vrot.slane %v194, 4
  %v196 = vmax.f32 %v194, %v195
  %v197 = vrot.slane %v196, 2
  %v198 = vmax.f32 %v196, %v197
  %v199 = vrot.slane %v198, 1
  %v200 = vmax.f32 %v198, %v199
  %v201 = vsel %vm72, %v56, -inf
  %v202 = vmax.f32 %v40, %v201
  %v203 = vrot.slane %v202, 4
  %v204 = vmax.f32 %v202, %v203
  %v205 = vrot.slane %v204, 2
  %v206 = vmax.f32 %v204, %v205
  %v207 = vrot.slane %v206, 1
  %v208 = vmax.f32 %v206, %v207
  %v209 = vsel %vm72, %v57, -inf
  %v210 = vmax.f32 %v41, %v209
  %v211 = vrot.slane %v210, 4
  %v212 = vmax.f32 %v210, %v211
  %v213 = vrot.slane %v212, 2
  %v214 = vmax.f32 %v212, %v213
  %v215 = vrot.slane %v214, 1
  %v216 = vmax.f32 %v214, %v215
  %v217 = vsel %vm72, %v58, -inf
  %v218 = vmax.f32 %v42, %v217
  %v219 = vrot.slane %v218, 4
  %v220 = vmax.f32 %v218, %v219
  %v221 = vrot.slane %v220, 2
  %v222 = vmax.f32 %v220, %v221
  %v223 = vrot.slane %v222, 1
  %v224 = vmax.f32 %v222, %v223
  %v225 = vsel %vm72, %v59, -inf
  %v226 = vmax.f32 %v43, %v225
  %v227 = vrot.slane %v226, 4
  %v228 = vmax.f32 %v226, %v227
  %v229 = vrot.slane %v228, 2
  %v230 = vmax.f32 %v228, %v229
  %v231 = vrot.slane %v230, 1
  %v232 = vmax.f32 %v230, %v231
  %v233 = vsel %vm72, %v60, -inf
  %v234 = vmax.f32 %v44, %v233
  %v235 = vrot.slane %v234, 4
  %v236 = vmax.f32 %v234, %v235
  %v237 = vrot.slane %v236, 2
  %v238 = vmax.f32 %v236, %v237
  %v239 = vrot.slane %v238, 1
  %v240 = vmax.f32 %v238, %v239
  %v241 = vsel %vm72, %v61, -inf
  %v242 = vmax.f32 %v45, %v241
  %v243 = vrot.slane %v242, 4
  %v244 = vmax.f32 %v242, %v243
  %v245 = vrot.slane %v244, 2
  %v246 = vmax.f32 %v244, %v245
  %v247 = vrot.slane %v246, 1
  %v248 = vmax.f32 %v246, %v247
  %v249 = vsel %vm72, %v62, -inf
  %v250 = vmax.f32 %v46, %v249
  %v251 = vrot.slane %v250, 4
  %v252 = vmax.f32 %v250, %v251
  %v253 = vrot.slane %v252, 2
  %v254 = vmax.f32 %v252, %v253
  %v255 = vrot.slane %v254, 1
  %v256 = vmax.f32 %v254, %v255
  %v257 = vsel %vm72, %v63, -inf
  %v258 = vmax.f32 %v47, %v257
  %v259 = vrot.slane %v258, 4
  %v260 = vmax.f32 %v258, %v259
  %v261 = vrot.slane %v260, 2
  %v262 = vmax.f32 %v260, %v261
  %v263 = vrot.slane %v262, 1
  %v264 = vmax.f32 %v262, %v263
  %v265 = vsel %vm72, %v64, -inf
  %v266 = vmax.f32 %v48, %v265
  %v267 = vrot.slane %v266, 4
  %v268 = vmax.f32 %v266, %v267
  %v269 = vrot.slane %v268, 2
  %v270 = vmax.f32 %v268, %v269
  %v271 = vrot.slane %v270, 1
  %v272 = vmax.f32 %v270, %v271
  %v273 = vsel %vm72, %v65, -inf
  %v274 = vmax.f32 %v49, %v273
  %v275 = vrot.slane %v274, 4
  %v276 = vmax.f32 %v274, %v275
  %v277 = vrot.slane %v276, 2
  %v278 = vmax.f32 %v276, %v277
  %v279 = vrot.slane %v278, 1
  %v280 = vmax.f32 %v278, %v279
  %v281 = vsel %vm72, %v66, -inf
  %v282 = vmax.f32 %v50, %v281
  %v283 = vrot.slane %v282, 4
  %v284 = vmax.f32 %v282, %v283
  %v285 = vrot.slane %v284, 2
  %v286 = vmax.f32 %v284, %v285
  %v287 = vrot.slane %v286, 1
  %v288 = vmax.f32 %v286, %v287
  %v289 = vsel %vm72, %v67, -inf
  %v290 = vmax.f32 %v51, %v289
  %v291 = vrot.slane %v290, 4
  %v292 = vmax.f32 %v290, %v291
  %v293 = vrot.slane %v292, 2
  %v294 = vmax.f32 %v292, %v293
  %v295 = vrot.slane %v294, 1
  %v296 = vmax.f32 %v294, %v295
  %v297 = vsel %vm72, %v68, -inf
  %v298 = vmax.f32 %v52, %v297
  %v299 = vrot.slane %v298, 4
  %v300 = vmax.f32 %v298, %v299
  %v301 = vrot.slane %v300, 2
  %v302 = vmax.f32 %v300, %v301
  %v303 = vrot.slane %v302, 1
  %v304 = vmax.f32 %v302, %v303
  %v305 = vsel %vm72, %v69, -inf
  %v306 = vmax.f32 %v53, %v305
  %v307 = vrot.slane %v306, 4
  %v308 = vmax.f32 %v306, %v307
  %v309 = vrot.slane %v308, 2
  %v310 = vmax.f32 %v308, %v309
  %v311 = vrot.slane %v310, 1
  %v312 = vmax.f32 %v310, %v311
  %v313 = vsel %vm72, %v70, -inf
  %v314 = vmax.f32 %v54, %v313
  %v315 = vrot.slane %v314, 4
  %v316 = vmax.f32 %v314, %v315
  %v317 = vrot.slane %v316, 2
  %v318 = vmax.f32 %v316, %v317
  %v319 = vrot.slane %v318, 1
  %v320 = vmax.f32 %v318, %v319
  %v321 = vsel %vm72, %v71, -inf
  %v322 = vmax.f32 %v55, %v321
  %v323 = vrot.slane %v322, 4
  %v324 = vmax.f32 %v322, %v323
  %v325 = vrot.slane %v324, 2
  %v326 = vmax.f32 %v324, %v325
  %v327 = vrot.slane %v326, 1
  %v328 = vmax.f32 %v326, %v327
  %v361 = vrot.slane %v88, 6
  %v362 = vrot.slane %v96, 4
  %v363 = vrot.slane %v104, 2
  %v364 = vrot.slane %v120, 6
  %v365 = vrot.slane %v128, 4
  %v366 = vrot.slane %v136, 2
  %v367 = vrot.slane %v152, 6
  %v368 = vrot.slane %v160, 4
  %v369 = vrot.slane %v168, 2
  %v370 = vrot.slane %v184, 6
  %v371 = vrot.slane %v192, 4
  %v372 = vrot.slane %v200, 2
  %v373 = vrot.slane %v216, 6
  %v374 = vrot.slane %v224, 4
  %v375 = vrot.slane %v232, 2
  %v376 = vrot.slane %v248, 6
  %v377 = vrot.slane %v256, 4
  %v378 = vrot.slane %v264, 2
  %v379 = vrot.slane %v280, 6
  %v380 = vrot.slane %v288, 4
  %v381 = vrot.slane %v296, 2
  %v382 = vrot.slane %v312, 6
  %v383 = vrot.slane %v320, 4
  %v384 = vrot.slane %v328, 2
  %vm385 = vcmask 1041408
  %v386 = vsel %vm385, %v80, %v361
  %vm387 = vcmask 1045508
  %v388 = vsel %vm387, %v362, %v363
  %v389 = vsel %vm72, %v386, %v388
  %v390 = vsel %vm385, %v112, %v364
  %v391 = vsel %vm387, %v365, %v366
  %v392 = vsel %vm72, %v390, %v391
  %v393 = vsel %vm385, %v144, %v367
  %v394 = vsel %vm387, %v368, %v369
  %v395 = vsel %vm72, %v393, %v394
  %v396 = vsel %vm385, %v176, %v370
  %v397 = vsel %vm387, %v371, %v372
  %v398 = vsel %vm72, %v396, %v397
  %v399 = vsel %vm385, %v208, %v373
  %v400 = vsel %vm387, %v374, %v375
  %v401 = vsel %vm72, %v399, %v400
  %v402 = vsel %vm385, %v240, %v376
  %v403 = vsel %vm387, %v377, %v378
  %v404 = vsel %vm72, %v402, %v403
  %v405 = vsel %vm385, %v272, %v379
  %v406 = vsel %vm387, %v380, %v381
  %v407 = vsel %vm72, %v405, %v406
  %v408 = vsel %vm385, %v304, %v382
  %v409 = vsel %vm387, %v383, %v384
  %v410 = vsel %vm72, %v408, %v409
  %vm411 = vcmask 1044484
  %v412 = vsel %vm411, %v389, %v389
  %vm413 = vcmask 1046534
  %v414 = vsel %vm413, %v389, %v412
  %v415 = vrot.slane %v401, 7
  %vm416 = vcmask 1041409
  %v417 = vsel %vm416, %v415, %v414
  %vm418 = vcmask 1043459
  %v419 = vsel %vm418, %v415, %v417
  %vm420 = vcmask 1045509
  %v421 = vsel %vm420, %v415, %v419
  %vm422 = vcmask 1047559
  %v423 = vsel %vm422, %v415, %v421
  %v424 = vsel %vm411, %v392, %v392
  %v425 = vsel %vm413, %v392, %v424
  %v426 = vrot.slane %v404, 7
  %v427 = vsel %vm416, %v426, %v425
  %v428 = vsel %vm418, %v426, %v427
  %v429 = vsel %vm420, %v426, %v428
  %v430 = vsel %vm422, %v426, %v429
  %v431 = vsel %vm411, %v395, %v395
  %v432 = vsel %vm413, %v395, %v431
  %v433 = vrot.slane %v407, 7
  %v434 = vsel %vm416, %v433, %v432
  %v435 = vsel %vm418, %v433, %v434
  %v436 = vsel %vm420, %v433, %v435
  %v437 = vsel %vm422, %v433, %v436
  %v438 = vsel %vm411, %v398, %v398
  %v439 = vsel %vm413, %v398, %v438
  %v440 = vrot.slane %v410, 7
  %v441 = vsel %vm416, %v440, %v439
  %v442 = vsel %vm418, %v440, %v441
  %v443 = vsel %vm420, %v440, %v442
  %v444 = vsel %vm422, %v440, %v443
  %449 = vst [vmem:[%s1] sm:$0xff] %v423
  %450 = vst [vmem:[%s1 + $0x8] sm:$0xff] %v430
  %451 = vst [vmem:[%s1 + $0x10] sm:$0xff] %v437
  %452 = vst [vmem:[%s1 + $0x18] sm:$0xff] %v444
  // Predicated region
  $region6: #{mgn_forward.4} parent=0 // pred_check
    _
  $region7: #{mgn_forward.4} parent=0 // pred_check_branch
    %454 = sbr.rel (0) target = $region9
  $region8: #{mgn_forward.4} parent=0 // pred_region
    _
  $region9: #{mgn_forward.4} parent=0 // pred_fallthru
    _
  // Predicated region
  $region10: #{mgn_forward.4} parent=0 // pred_check
    _
  $region11: #{mgn_forward.4} parent=0 // pred_check_branch
    %456 = sbr.rel (0) target = $region13
  $region12: #{mgn_forward.4} parent=0 // pred_region
    _
  $region13: #{mgn_forward.4} parent=0 // pred_fallthru
    _

// kernel: mgn_forward.6
$region0: #{mgn_forward.6}
  #allocation0 [shape = 'u32[]', space=smem, size = 0x4, offset = 0x4, fixed_abs, tag = 'smem constant byte address 0x4 - core index']
  #allocation1 [shape = 'u32[72,128]{1,0:T(1,128)}', space=vmem, size = 0x9000, scoped, tag = 'internal scratch']
  %s0 = inlined_call_operand.vmem [shape: f32[6,16,2048], index: 0, kind: input, shape index: {}]
  %s1 = inlined_call_operand.vmem [shape: f32[6,2048], index: 1, kind: output, shape index: {}]
  %s2 = sld [smem:[#allocation0]]
  $region14: #{mgn_forward.6} parent=0
    _
  %s4 = ssub.s32 1, %s2
  %s5 = scalar_select 0, %s4, %s2
  // Predicated region
  $region2: #{mgn_forward.6} parent=0 // pred_check
    _
  $region3: #{mgn_forward.6} parent=0 // pred_check_branch
    %7 = sbr.rel (0) target = $region5
  $region4: #{mgn_forward.6} parent=0 // pred_region
    _
  $region5: #{mgn_forward.6} parent=0 // pred_fallthru
    _
  %v8 = vld [vmem:[%s0] sm:$0xff]
  %v9 = vld [vmem:[%s0 + $0x8] sm:$0xff]
  %v10 = vld [vmem:[%s0 + $0x10] sm:$0xff]
  %v11 = vld [vmem:[%s0 + $0x18] sm:$0xff]
  %v12 = vld [vmem:[%s0 + $0x20] sm:$0xff]
  %v13 = vld [vmem:[%s0 + $0x28] sm:$0xff]
  %v14 = vld [vmem:[%s0 + $0x30] sm:$0xff]
  %v15 = vld [vmem:[%s0 + $0x38] sm:$0xff]
  %v16 = vld [vmem:[%s0 + $0x40] sm:$0xff]
  %v17 = vld [vmem:[%s0 + $0x48] sm:$0xff]
  %v18 = vld [vmem:[%s0 + $0x50] sm:$0xff]
  %v19 = vld [vmem:[%s0 + $0x58] sm:$0xff]
  %v20 = vld [vmem:[%s0 + $0x60] sm:$0xff]
  %v21 = vld [vmem:[%s0 + $0x68] sm:$0xff]
  %v22 = vld [vmem:[%s0 + $0x70] sm:$0xff]
  %v23 = vld [vmem:[%s0 + $0x78] sm:$0xff]
  %v24 = vld [vmem:[%s0 + $0x80] sm:$0xff]
  %v25 = vld [vmem:[%s0 + $0x88] sm:$0xff]
  %v26 = vld [vmem:[%s0 + $0x90] sm:$0xff]
  %v27 = vld [vmem:[%s0 + $0x98] sm:$0xff]
  %v28 = vld [vmem:[%s0 + $0xa0] sm:$0xff]
  %v29 = vld [vmem:[%s0 + $0xa8] sm:$0xff]
  %v30 = vld [vmem:[%s0 + $0xb0] sm:$0xff]
  %v31 = vld [vmem:[%s0 + $0xb8] sm:$0xff]
  %v32 = vld [vmem:[%s0 + $0xc0] sm:$0xff]
  %v33 = vld [vmem:[%s0 + $0xc8] sm:$0xff]
  %v34 = vld [vmem:[%s0 + $0xd0] sm:$0xff]
  %v35 = vld [vmem:[%s0 + $0xd8] sm:$0xff]
  %v36 = vld [vmem:[%s0 + $0xe0] sm:$0xff]
  %v37 = vld [vmem:[%s0 + $0xe8] sm:$0xff]
  %v38 = vld [vmem:[%s0 + $0xf0] sm:$0xff]
  %v39 = vld [vmem:[%s0 + $0xf8] sm:$0xff]
  %v40 = vld [vmem:[%s0 + $0x100] sm:$0xff]
  %v41 = vld [vmem:[%s0 + $0x108] sm:$0xff]
  %v42 = vld [vmem:[%s0 + $0x110] sm:$0xff]
  %v43 = vld [vmem:[%s0 + $0x118] sm:$0xff]
  %v44 = vld [vmem:[%s0 + $0x120] sm:$0xff]
  %v45 = vld [vmem:[%s0 + $0x128] sm:$0xff]
  %v46 = vld [vmem:[%s0 + $0x130] sm:$0xff]
  %v47 = vld [vmem:[%s0 + $0x138] sm:$0xff]
  %v48 = vld [vmem:[%s0 + $0x140] sm:$0xff]
  %v49 = vld [vmem:[%s0 + $0x148] sm:$0xff]
  %v50 = vld [vmem:[%s0 + $0x150] sm:$0xff]
  %v51 = vld [vmem:[%s0 + $0x158] sm:$0xff]
  %v52 = vld [vmem:[%s0 + $0x160] sm:$0xff]
  %v53 = vld [vmem:[%s0 + $0x168] sm:$0xff]
  %v54 = vld [vmem:[%s0 + $0x170] sm:$0xff]
  %v55 = vld [vmem:[%s0 + $0x178] sm:$0xff]
  %v56 = vld [vmem:[%s0 + $0x180] sm:$0xff]
  %v57 = vld [vmem:[%s0 + $0x188] sm:$0xff]
  %v58 = vld [vmem:[%s0 + $0x190] sm:$0xff]
  %v59 = vld [vmem:[%s0 + $0x198] sm:$0xff]
  %v60 = vld [vmem:[%s0 + $0x1a0] sm:$0xff]
  %v61 = vld [vmem:[%s0 + $0x1a8] sm:$0xff]
  %v62 = vld [vmem:[%s0 + $0x1b0] sm:$0xff]
  %v63 = vld [vmem:[%s0 + $0x1b8] sm:$0xff]
  %v64 = vld [vmem:[%s0 + $0x1c0] sm:$0xff]
  %v65 = vld [vmem:[%s0 + $0x1c8] sm:$0xff]
  %v66 = vld [vmem:[%s0 + $0x1d0] sm:$0xff]
  %v67 = vld [vmem:[%s0 + $0x1d8] sm:$0xff]
  %v68 = vld [vmem:[%s0 + $0x1e0] sm:$0xff]
  %v69 = vld [vmem:[%s0 + $0x1e8] sm:$0xff]
  %v70 = vld [vmem:[%s0 + $0x1f0] sm:$0xff]
  %v71 = vld [vmem:[%s0 + $0x1f8] sm:$0xff]
  %v72 = vld [vmem:[%s0 + $0x200] sm:$0xff]
  %v73 = vld [vmem:[%s0 + $0x208] sm:$0xff]
  %v74 = vld [vmem:[%s0 + $0x210] sm:$0xff]
  %v75 = vld [vmem:[%s0 + $0x218] sm:$0xff]
  %v76 = vld [vmem:[%s0 + $0x220] sm:$0xff]
  %v77 = vld [vmem:[%s0 + $0x228] sm:$0xff]
  %v78 = vld [vmem:[%s0 + $0x230] sm:$0xff]
  %v79 = vld [vmem:[%s0 + $0x238] sm:$0xff]
  %v80 = vld [vmem:[%s0 + $0x240] sm:$0xff]
  %v81 = vld [vmem:[%s0 + $0x248] sm:$0xff]
  %v82 = vld [vmem:[%s0 + $0x250] sm:$0xff]
  %v83 = vld [vmem:[%s0 + $0x258] sm:$0xff]
  %v84 = vld [vmem:[%s0 + $0x260] sm:$0xff]
  %v85 = vld [vmem:[%s0 + $0x268] sm:$0xff]
  %v86 = vld [vmem:[%s0 + $0x270] sm:$0xff]
  %v87 = vld [vmem:[%s0 + $0x278] sm:$0xff]
  %v88 = vld [vmem:[%s0 + $0x280] sm:$0xff]
  %v89 = vld [vmem:[%s0 + $0x288] sm:$0xff]
  %v90 = vld [vmem:[%s0 + $0x290] sm:$0xff]
  %v91 = vld [vmem:[%s0 + $0x298] sm:$0xff]
  %v92 = vld [vmem:[%s0 + $0x2a0] sm:$0xff]
  %v93 = vld [vmem:[%s0 + $0x2a8] sm:$0xff]
  %v94 = vld [vmem:[%s0 + $0x2b0] sm:$0xff]
  %v95 = vld [vmem:[%s0 + $0x2b8] sm:$0xff]
  %v96 = vld [vmem:[%s0 + $0x2c0] sm:$0xff]
  %v97 = vld [vmem:[%s0 + $0x2c8] sm:$0xff]
  %v98 = vld [vmem:[%s0 + $0x2d0] sm:$0xff]
  %v99 = vld [vmem:[%s0 + $0x2d8] sm:$0xff]
  %v100 = vld [vmem:[%s0 + $0x2e0] sm:$0xff]
  %v101 = vld [vmem:[%s0 + $0x2e8] sm:$0xff]
  %v102 = vld [vmem:[%s0 + $0x2f0] sm:$0xff]
  %v103 = vld [vmem:[%s0 + $0x2f8] sm:$0xff]
  %v104 = vld [vmem:[%s0 + $0x300] sm:$0xff]
  %v105 = vld [vmem:[%s0 + $0x308] sm:$0xff]
  %v106 = vld [vmem:[%s0 + $0x310] sm:$0xff]
  %v107 = vld [vmem:[%s0 + $0x318] sm:$0xff]
  %v108 = vld [vmem:[%s0 + $0x320] sm:$0xff]
  %v109 = vld [vmem:[%s0 + $0x328] sm:$0xff]
  %v110 = vld [vmem:[%s0 + $0x330] sm:$0xff]
  %v111 = vld [vmem:[%s0 + $0x338] sm:$0xff]
  %v112 = vld [vmem:[%s0 + $0x340] sm:$0xff]
  %v113 = vld [vmem:[%s0 + $0x348] sm:$0xff]
  %v114 = vld [vmem:[%s0 + $0x350] sm:$0xff]
  %v115 = vld [vmem:[%s0 + $0x358] sm:$0xff]
  %v116 = vld [vmem:[%s0 + $0x360] sm:$0xff]
  %v117 = vld [vmem:[%s0 + $0x368] sm:$0xff]
  %v118 = vld [vmem:[%s0 + $0x370] sm:$0xff]
  %v119 = vld [vmem:[%s0 + $0x378] sm:$0xff]
  %v120 = vld [vmem:[%s0 + $0x380] sm:$0xff]
  %v121 = vld [vmem:[%s0 + $0x388] sm:$0xff]
  %v122 = vld [vmem:[%s0 + $0x390] sm:$0xff]
  %v123 = vld [vmem:[%s0 + $0x398] sm:$0xff]
  %v124 = vld [vmem:[%s0 + $0x3a0] sm:$0xff]
  %v125 = vld [vmem:[%s0 + $0x3a8] sm:$0xff]
  %v126 = vld [vmem:[%s0 + $0x3b0] sm:$0xff]
  %v127 = vld [vmem:[%s0 + $0x3b8] sm:$0xff]
  %v128 = vld [vmem:[%s0 + $0x3c0] sm:$0xff]
  %v129 = vld [vmem:[%s0 + $0x3c8] sm:$0xff]
  %v130 = vld [vmem:[%s0 + $0x3d0] sm:$0xff]
  %v131 = vld [vmem:[%s0 + $0x3d8] sm:$0xff]
  %v132 = vld [vmem:[%s0 + $0x3e0] sm:$0xff]
  %v133 = vld [vmem:[%s0 + $0x3e8] sm:$0xff]
  %v134 = vld [vmem:[%s0 + $0x3f0] sm:$0xff]
  %v135 = vld [vmem:[%s0 + $0x3f8] sm:$0xff]
  %v136 = vld [vmem:[%s0 + $0x400] sm:$0xff]
  %v137 = vld [vmem:[%s0 + $0x408] sm:$0xff]
  %v138 = vld [vmem:[%s0 + $0x410] sm:$0xff]
  %v139 = vld [vmem:[%s0 + $0x418] sm:$0xff]
  %v140 = vld [vmem:[%s0 + $0x420] sm:$0xff]
  %v141 = vld [vmem:[%s0 + $0x428] sm:$0xff]
  %v142 = vld [vmem:[%s0 + $0x430] sm:$0xff]
  %v143 = vld [vmem:[%s0 + $0x438] sm:$0xff]
  %v144 = vld [vmem:[%s0 + $0x440] sm:$0xff]
  %v145 = vld [vmem:[%s0 + $0x448] sm:$0xff]
  %v146 = vld [vmem:[%s0 + $0x450] sm:$0xff]
  %v147 = vld [vmem:[%s0 + $0x458] sm:$0xff]
  %v148 = vld [vmem:[%s0 + $0x460] sm:$0xff]
  %v149 = vld [vmem:[%s0 + $0x468] sm:$0xff]
  %v150 = vld [vmem:[%s0 + $0x470] sm:$0xff]
  %v151 = vld [vmem:[%s0 + $0x478] sm:$0xff]
  %v152 = vld [vmem:[%s0 + $0x480] sm:$0xff]
  %v153 = vld [vmem:[%s0 + $0x488] sm:$0xff]
  %v154 = vld [vmem:[%s0 + $0x490] sm:$0xff]
  %v155 = vld [vmem:[%s0 + $0x498] sm:$0xff]
  %v156 = vld [vmem:[%s0 + $0x4a0] sm:$0xff]
  %v157 = vld [vmem:[%s0 + $0x4a8] sm:$0xff]
  %v158 = vld [vmem:[%s0 + $0x4b0] sm:$0xff]
  %v159 = vld [vmem:[%s0 + $0x4b8] sm:$0xff]
  %v160 = vld [vmem:[%s0 + $0x4c0] sm:$0xff]
  %v161 = vld [vmem:[%s0 + $0x4c8] sm:$0xff]
  %v162 = vld [vmem:[%s0 + $0x4d0] sm:$0xff]
  %v163 = vld [vmem:[%s0 + $0x4d8] sm:$0xff]
  %v164 = vld [vmem:[%s0 + $0x4e0] sm:$0xff]
  %v165 = vld [vmem:[%s0 + $0x4e8] sm:$0xff]
  %v166 = vld [vmem:[%s0 + $0x4f0] sm:$0xff]
  %v167 = vld [vmem:[%s0 + $0x4f8] sm:$0xff]
  %v168 = vld [vmem:[%s0 + $0x500] sm:$0xff]
  %v169 = vld [vmem:[%s0 + $0x508] sm:$0xff]
  %v170 = vld [vmem:[%s0 + $0x510] sm:$0xff]
  %v171 = vld [vmem:[%s0 + $0x518] sm:$0xff]
  %v172 = vld [vmem:[%s0 + $0x520] sm:$0xff]
  %v173 = vld [vmem:[%s0 + $0x528] sm:$0xff]
  %v174 = vld [vmem:[%s0 + $0x530] sm:$0xff]
  %v175 = vld [vmem:[%s0 + $0x538] sm:$0xff]
  %v176 = vld [vmem:[%s0 + $0x540] sm:$0xff]
  %v177 = vld [vmem:[%s0 + $0x548] sm:$0xff]
  %v178 = vld [vmem:[%s0 + $0x550] sm:$0xff]
  %v179 = vld [vmem:[%s0 + $0x558] sm:$0xff]
  %v180 = vld [vmem:[%s0 + $0x560] sm:$0xff]
  %v181 = vld [vmem:[%s0 + $0x568] sm:$0xff]
  %v182 = vld [vmem:[%s0 + $0x570] sm:$0xff]
  %v183 = vld [vmem:[%s0 + $0x578] sm:$0xff]
  %v184 = vld [vmem:[%s0 + $0x580] sm:$0xff]
  %v185 = vld [vmem:[%s0 + $0x588] sm:$0xff]
  %v186 = vld [vmem:[%s0 + $0x590] sm:$0xff]
  %v187 = vld [vmem:[%s0 + $0x598] sm:$0xff]
  %v188 = vld [vmem:[%s0 + $0x5a0] sm:$0xff]
  %v189 = vld [vmem:[%s0 + $0x5a8] sm:$0xff]
  %v190 = vld [vmem:[%s0 + $0x5b0] sm:$0xff]
  %v191 = vld [vmem:[%s0 + $0x5b8] sm:$0xff]
  %v192 = vld [vmem:[%s0 + $0x5c0] sm:$0xff]
  %v193 = vld [vmem:[%s0 + $0x5c8] sm:$0xff]
  %v194 = vld [vmem:[%s0 + $0x5d0] sm:$0xff]
  %v195 = vld [vmem:[%s0 + $0x5d8] sm:$0xff]
  %v196 = vld [vmem:[%s0 + $0x5e0] sm:$0xff]
  %v197 = vld [vmem:[%s0 + $0x5e8] sm:$0xff]
  %v198 = vld [vmem:[%s0 + $0x5f0] sm:$0xff]
  %v199 = vld [vmem:[%s0 + $0x5f8] sm:$0xff]
  %v200 = vmax.f32 %v8, %v24
  %v201 = vrot.slane %v200, 4
  %v202 = vmax.f32 %v200, %v201
  %v203 = vrot.slane %v202, 2
  %v204 = vmax.f32 %v202, %v203
  %v205 = vrot.slane %v204, 1
  %v206 = vmax.f32 %v204, %v205
  %v207 = vmax.f32 %v9, %v25
  %v208 = vrot.slane %v207, 4
  %v209 = vmax.f32 %v207, %v208
  %v210 = vrot.slane %v209, 2
  %v211 = vmax.f32 %v209, %v210
  %v212 = vrot.slane %v211, 1
  %v213 = vmax.f32 %v211, %v212
  %v214 = vmax.f32 %v10, %v26
  %v215 = vrot.slane %v214, 4
  %v216 = vmax.f32 %v214, %v215
  %v217 = vrot.slane %v216, 2
  %v218 = vmax.f32 %v216, %v217
  %v219 = vrot.slane %v218, 1
  %v220 = vmax.f32 %v218, %v219
  %v221 = vmax.f32 %v11, %v27
  %v222 = vrot.slane %v221, 4
  %v223 = vmax.f32 %v221, %v222
  %v224 = vrot.slane %v223, 2
  %v225 = vmax.f32 %v223, %v224
  %v226 = vrot.slane %v225, 1
  %v227 = vmax.f32 %v225, %v226
  %v228 = vmax.f32 %v12, %v28
  %v229 = vrot.slane %v228, 4
  %v230 = vmax.f32 %v228, %v229
  %v231 = vrot.slane %v230, 2
  %v232 = vmax.f32 %v230, %v231
  %v233 = vrot.slane %v232, 1
  %v234 = vmax.f32 %v232, %v233
  %v235 = vmax.f32 %v13, %v29
  %v236 = vrot.slane %v235, 4
  %v237 = vmax.f32 %v235, %v236
  %v238 = vrot.slane %v237, 2
  %v239 = vmax.f32 %v237, %v238
  %v240 = vrot.slane %v239, 1
  %v241 = vmax.f32 %v239, %v240
  %v242 = vmax.f32 %v14, %v30
  %v243 = vrot.slane %v242, 4
  %v244 = vmax.f32 %v242, %v243
  %v245 = vrot.slane %v244, 2
  %v246 = vmax.f32 %v244, %v245
  %v247 = vrot.slane %v246, 1
  %v248 = vmax.f32 %v246, %v247
  %v249 = vmax.f32 %v15, %v31
  %v250 = vrot.slane %v249, 4
  %v251 = vmax.f32 %v249, %v250
  %v252 = vrot.slane %v251, 2
  %v253 = vmax.f32 %v251, %v252
  %v254 = vrot.slane %v253, 1
  %v255 = vmax.f32 %v253, %v254
  %v256 = vmax.f32 %v16, %v32
  %v257 = vrot.slane %v256, 4
  %v258 = vmax.f32 %v256, %v257
  %v259 = vrot.slane %v258, 2
  %v260 = vmax.f32 %v258, %v259
  %v261 = vrot.slane %v260, 1
  %v262 = vmax.f32 %v260, %v261
  %v263 = vmax.f32 %v17, %v33
  %v264 = vrot.slane %v263, 4
  %v265 = vmax.f32 %v263, %v264
  %v266 = vrot.slane %v265, 2
  %v267 = vmax.f32 %v265, %v266
  %v268 = vrot.slane %v267, 1
  %v269 = vmax.f32 %v267, %v268
  %v270 = vmax.f32 %v18, %v34
  %v271 = vrot.slane %v270, 4
  %v272 = vmax.f32 %v270, %v271
  %v273 = vrot.slane %v272, 2
  %v274 = vmax.f32 %v272, %v273
  %v275 = vrot.slane %v274, 1
  %v276 = vmax.f32 %v274, %v275
  %v277 = vmax.f32 %v19, %v35
  %v278 = vrot.slane %v277, 4
  %v279 = vmax.f32 %v277, %v278
  %v280 = vrot.slane %v279, 2
  %v281 = vmax.f32 %v279, %v280
  %v282 = vrot.slane %v281, 1
  %v283 = vmax.f32 %v281, %v282
  %v284 = vmax.f32 %v20, %v36
  %v285 = vrot.slane %v284, 4
  %v286 = vmax.f32 %v284, %v285
  %v287 = vrot.slane %v286, 2
  %v288 = vmax.f32 %v286, %v287
  %v289 = vrot.slane %v288, 1
  %v290 = vmax.f32 %v288, %v289
  %v291 = vmax.f32 %v21, %v37
  %v292 = vrot.slane %v291, 4
  %v293 = vmax.f32 %v291, %v292
  %v294 = vrot.slane %v293, 2
  %v295 = vmax.f32 %v293, %v294
  %v296 = vrot.slane %v295, 1
  %v297 = vmax.f32 %v295, %v296
  %v298 = vmax.f32 %v22, %v38
  %v299 = vrot.slane %v298, 4
  %v300 = vmax.f32 %v298, %v299
  %v301 = vrot.slane %v300, 2
  %v302 = vmax.f32 %v300, %v301
  %v303 = vrot.slane %v302, 1
  %v304 = vmax.f32 %v302, %v303
  %v305 = vmax.f32 %v23, %v39
  %v306 = vrot.slane %v305, 4
  %v307 = vmax.f32 %v305, %v306
  %v308 = vrot.slane %v307, 2
  %v309 = vmax.f32 %v307, %v308
  %v310 = vrot.slane %v309, 1
  %v311 = vmax.f32 %v309, %v310
  %v312 = vmax.f32 %v40, %v56
  %v313 = vrot.slane %v312, 4
  %v314 = vmax.f32 %v312, %v313
  %v315 = vrot.slane %v314, 2
  %v316 = vmax.f32 %v314, %v315
  %v317 = vrot.slane %v316, 1
  %v318 = vmax.f32 %v316, %v317
  %v319 = vmax.f32 %v41, %v57
  %v320 = vrot.slane %v319, 4
  %v321 = vmax.f32 %v319, %v320
  %v322 = vrot.slane %v321, 2
  %v323 = vmax.f32 %v321, %v322
  %v324 = vrot.slane %v323, 1
  %v325 = vmax.f32 %v323, %v324
  %v326 = vmax.f32 %v42, %v58
  %v327 = vrot.slane %v326, 4
  %v328 = vmax.f32 %v326, %v327
  %v329 = vrot.slane %v328, 2
  %v330 = vmax.f32 %v328, %v329
  %v331 = vrot.slane %v330, 1
  %v332 = vmax.f32 %v330, %v331
  %v333 = vmax.f32 %v43, %v59
  %v334 = vrot.slane %v333, 4
  %v335 = vmax.f32 %v333, %v334
  %v336 = vrot.slane %v335, 2
  %v337 = vmax.f32 %v335, %v336
  %v338 = vrot.slane %v337, 1
  %v339 = vmax.f32 %v337, %v338
  %v340 = vmax.f32 %v44, %v60
  %v341 = vrot.slane %v340, 4
  %v342 = vmax.f32 %v340, %v341
  %v343 = vrot.slane %v342, 2
  %v344 = vmax.f32 %v342, %v343
  %v345 = vrot.slane %v344, 1
  %v346 = vmax.f32 %v344, %v345
  %v347 = vmax.f32 %v45, %v61
  %v348 = vrot.slane %v347, 4
  %v349 = vmax.f32 %v347, %v348
  %v350 = vrot.slane %v349, 2
  %v351 = vmax.f32 %v349, %v350
  %v352 = vrot.slane %v351, 1
  %v353 = vmax.f32 %v351, %v352
  %v354 = vmax.f32 %v46, %v62
  %v355 = vrot.slane %v354, 4
  %v356 = vmax.f32 %v354, %v355
  %v357 = vrot.slane %v356, 2
  %v358 = vmax.f32 %v356, %v357
  %v359 = vrot.slane %v358, 1
  %v360 = vmax.f32 %v358, %v359
  %v361 = vmax.f32 %v47, %v63
  %v362 = vrot.slane %v361, 4
  %v363 = vmax.f32 %v361, %v362
  %v364 = vrot.slane %v363, 2
  %v365 = vmax.f32 %v363, %v364
  %v366 = vrot.slane %v365, 1
  %v367 = vmax.f32 %v365, %v366
  %v368 = vmax.f32 %v48, %v64
  %v369 = vrot.slane %v368, 4
  %v370 = vmax.f32 %v368, %v369
  %v371 = vrot.slane %v370, 2
  %v372 = vmax.f32 %v370, %v371
  %v373 = vrot.slane %v372, 1
  %v374 = vmax.f32 %v372, %v373
  %v375 = vmax.f32 %v49, %v65
  %v376 = vrot.slane %v375, 4
  %v377 = vmax.f32 %v375, %v376
  %v378 = vrot.slane %v377, 2
  %v379 = vmax.f32 %v377, %v378
  %v380 = vrot.slane %v379, 1
  %v381 = vmax.f32 %v379, %v380
  %v382 = vmax.f32 %v50, %v66
  %v383 = vrot.slane %v382, 4
  %v384 = vmax.f32 %v382, %v383
  %v385 = vrot.slane %v384, 2
  %v386 = vmax.f32 %v384, %v385
  %v387 = vrot.slane %v386, 1
  %v388 = vmax.f32 %v386, %v387
  %v389 = vmax.f32 %v51, %v67
  %v390 = vrot.slane %v389, 4
  %v391 = vmax.f32 %v389, %v390
  %v392 = vrot.slane %v391, 2
  %v393 = vmax.f32 %v391, %v392
  %v394 = vrot.slane %v393, 1
  %v395 = vmax.f32 %v393, %v394
  %v396 = vmax.f32 %v52, %v68
  %v397 = vrot.slane %v396, 4
  %v398 = vmax.f32 %v396, %v397
  %v399 = vrot.slane %v398, 2
  %v400 = vmax.f32 %v398, %v399
  %v401 = vrot.slane %v400, 1
  %v402 = vmax.f32 %v400, %v401
  %v403 = vmax.f32 %v53, %v69
  %v404 = vrot.slane %v403, 4
  %v405 = vmax.f32 %v403, %v404
  %v406 = vrot.slane %v405, 2
  %v407 = vmax.f32 %v405, %v406
  %v408 = vrot.slane %v407, 1
  %v409 = vmax.f32 %v407, %v408
  %v410 = vmax.f32 %v54, %v70
  %v411 = vrot.slane %v410, 4
  %v412 = vmax.f32 %v410, %v411
  %v413 = vrot.slane %v412, 2
  %v414 = vmax.f32 %v412, %v413
  %v415 = vrot.slane %v414, 1
  %v416 = vmax.f32 %v414, %v415
  %v417 = vmax.f32 %v55, %v71
  %v418 = vrot.slane %v417, 4
  %v419 = vmax.f32 %v417, %v418
  %v420 = vrot.slane %v419, 2
  %v421 = vmax.f32 %v419, %v420
  %v422 = vrot.slane %v421, 1
  %v423 = vmax.f32 %v421, %v422
  %v424 = vmax.f32 %v72, %v88
  %v425 = vrot.slane %v424, 4
  %v426 = vmax.f32 %v424, %v425
  %v427 = vrot.slane %v426, 2
  %v428 = vmax.f32 %v426, %v427
  %v429 = vrot.slane %v428, 1
  %v430 = vmax.f32 %v428, %v429
  %v431 = vmax.f32 %v73, %v89
  %v432 = vrot.slane %v431, 4
  %v433 = vmax.f32 %v431, %v432
  %v434 = vrot.slane %v433, 2
  %v435 = vmax.f32 %v433, %v434
  %v436 = vrot.slane %v435, 1
  %v437 = vmax.f32 %v435, %v436
  %v438 = vmax.f32 %v74, %v90
  %v439 = vrot.slane %v438, 4
  %v440 = vmax.f32 %v438, %v439
  %v441 = vrot.slane %v440, 2
  %v442 = vmax.f32 %v440, %v441
  %v443 = vrot.slane %v442, 1
  %v444 = vmax.f32 %v442, %v443
  %v445 = vmax.f32 %v75, %v91
  %v446 = vrot.slane %v445, 4
  %v447 = vmax.f32 %v445, %v446
  %v448 = vrot.slane %v447, 2
  %v449 = vmax.f32 %v447, %v448
  %v450 = vrot.slane %v449, 1
  %v451 = vmax.f32 %v449, %v450
  %v452 = vmax.f32 %v76, %v92
  %v453 = vrot.slane %v452, 4
  %v454 = vmax.f32 %v452, %v453
  %v455 = vrot.slane %v454, 2
  %v456 = vmax.f32 %v454, %v455
  %v457 = vrot.slane %v456, 1
  %v458 = vmax.f32 %v456, %v457
  %v459 = vmax.f32 %v77, %v93
  %v460 = vrot.slane %v459, 4
  %v461 = vmax.f32 %v459, %v460
  %v462 = vrot.slane %v461, 2
  %v463 = vmax.f32 %v461, %v462
  %v464 = vrot.slane %v463, 1
  %v465 = vmax.f32 %v463, %v464
  %v466 = vmax.f32 %v78, %v94
  %v467 = vrot.slane %v466, 4
  %v468 = vmax.f32 %v466, %v467
  %v469 = vrot.slane %v468, 2
  %v470 = vmax.f32 %v468, %v469
  %v471 = vrot.slane %v470, 1
  %v472 = vmax.f32 %v470, %v471
  %v473 = vmax.f32 %v79, %v95
  %v474 = vrot.slane %v473, 4
  %v475 = vmax.f32 %v473, %v474
  %v476 = vrot.slane %v475, 2
  %v477 = vmax.f32 %v475, %v476
  %v478 = vrot.slane %v477, 1
  %v479 = vmax.f32 %v477, %v478
  %v480 = vmax.f32 %v80, %v96
  %v481 = vrot.slane %v480, 4
  %v482 = vmax.f32 %v480, %v481
  %v483 = vrot.slane %v482, 2
  %v484 = vmax.f32 %v482, %v483
  %v485 = vrot.slane %v484, 1
  %v486 = vmax.f32 %v484, %v485
  %v487 = vmax.f32 %v81, %v97
  %v488 = vrot.slane %v487, 4
  %v489 = vmax.f32 %v487, %v488
  %v490 = vrot.slane %v489, 2
  %v491 = vmax.f32 %v489, %v490
  %v492 = vrot.slane %v491, 1
  %v493 = vmax.f32 %v491, %v492
  %v494 = vmax.f32 %v82, %v98
  %v495 = vrot.slane %v494, 4
  %v496 = vmax.f32 %v494, %v495
  %v497 = vrot.slane %v496, 2
  %v498 = vmax.f32 %v496, %v497
  %v499 = vrot.slane %v498, 1
  %v500 = vmax.f32 %v498, %v499
  %v501 = vmax.f32 %v83, %v99
  %v502 = vrot.slane %v501, 4
  %v503 = vmax.f32 %v501, %v502
  %v504 = vrot.slane %v503, 2
  %v505 = vmax.f32 %v503, %v504
  %v506 = vrot.slane %v505, 1
  %v507 = vmax.f32 %v505, %v506
  %v508 = vmax.f32 %v84, %v100
  %v509 = vrot.slane %v508, 4
  %v510 = vmax.f32 %v508, %v509
  %v511 = vrot.slane %v510, 2
  %v512 = vmax.f32 %v510, %v511
  %v513 = vrot.slane %v512, 1
  %v514 = vmax.f32 %v512, %v513
  %v515 = vmax.f32 %v85, %v101
  %v516 = vrot.slane %v515, 4
  %v517 = vmax.f32 %v515, %v516
  %v518 = vrot.slane %v517, 2
  %v519 = vmax.f32 %v517, %v518
  %v520 = vrot.slane %v519, 1
  %v521 = vmax.f32 %v519, %v520
  %v522 = vmax.f32 %v86, %v102
  %v523 = vrot.slane %v522, 4
  %v524 = vmax.f32 %v522, %v523
  %v525 = vrot.slane %v524, 2
  %v526 = vmax.f32 %v524, %v525
  %v527 = vrot.slane %v526, 1
  %v528 = vmax.f32 %v526, %v527
  %v529 = vmax.f32 %v87, %v103
  %v530 = vrot.slane %v529, 4
  %v531 = vmax.f32 %v529, %v530
  %v532 = vrot.slane %v531, 2
  %v533 = vmax.f32 %v531, %v532
  %v534 = vrot.slane %v533, 1
  %v535 = vmax.f32 %v533, %v534
  %v536 = vmax.f32 %v104, %v120
  %v537 = vrot.slane %v536, 4
  %v538 = vmax.f32 %v536, %v537
  %v539 = vrot.slane %v538, 2
  %v540 = vmax.f32 %v538, %v539
  %v541 = vrot.slane %v540, 1
  %v542 = vmax.f32 %v540, %v541
  %v543 = vmax.f32 %v105, %v121
  %v544 = vrot.slane %v543, 4
  %v545 = vmax.f32 %v543, %v544
  %v546 = vrot.slane %v545, 2
  %v547 = vmax.f32 %v545, %v546
  %v548 = vrot.slane %v547, 1
  %v549 = vmax.f32 %v547, %v548
  %v550 = vmax.f32 %v106, %v122
  %v551 = vrot.slane %v550, 4
  %v552 = vmax.f32 %v550, %v551
  %v553 = vrot.slane %v552, 2
  %v554 = vmax.f32 %v552, %v553
  %v555 = vrot.slane %v554, 1
  %v556 = vmax.f32 %v554, %v555
  %v557 = vmax.f32 %v107, %v123
  %v558 = vrot.slane %v557, 4
  %v559 = vmax.f32 %v557, %v558
  %v560 = vrot.slane %v559, 2
  %v561 = vmax.f32 %v559, %v560
  %v562 = vrot.slane %v561, 1
  %v563 = vmax.f32 %v561, %v562
  %v564 = vmax.f32 %v108, %v124
  %v565 = vrot.slane %v564, 4
  %v566 = vmax.f32 %v564, %v565
  %v567 = vrot.slane %v566, 2
  %v568 = vmax.f32 %v566, %v567
  %v569 = vrot.slane %v568, 1
  %v570 = vmax.f32 %v568, %v569
  %v571 = vmax.f32 %v109, %v125
  %v572 = vrot.slane %v571, 4
  %v573 = vmax.f32 %v571, %v572
  %v574 = vrot.slane %v573, 2
  %v575 = vmax.f32 %v573, %v574
  %v576 = vrot.slane %v575, 1
  %v577 = vmax.f32 %v575, %v576
  %v578 = vmax.f32 %v110, %v126
  %v579 = vrot.slane %v578, 4
  %v580 = vmax.f32 %v578, %v579
  %v581 = vrot.slane %v580, 2
  %v582 = vmax.f32 %v580, %v581
  %v583 = vrot.slane %v582, 1
  %v584 = vmax.f32 %v582, %v583
  %v585 = vmax.f32 %v111, %v127
  %v586 = vrot.slane %v585, 4
  %v587 = vmax.f32 %v585, %v586
  %v588 = vrot.slane %v587, 2
  %v589 = vmax.f32 %v587, %v588
  %v590 = vrot.slane %v589, 1
  %v591 = vmax.f32 %v589, %v590
  %v592 = vmax.f32 %v112, %v128
  %v593 = vrot.slane %v592, 4
  %v594 = vmax.f32 %v592, %v593
  %v595 = vrot.slane %v594, 2
  %v596 = vmax.f32 %v594, %v595
  %v597 = vrot.slane %v596, 1
  %v598 = vmax.f32 %v596, %v597
  %v599 = vmax.f32 %v113, %v129
  %v600 = vrot.slane %v599, 4
  %v601 = vmax.f32 %v599, %v600
  %v602 = vrot.slane %v601, 2
  %v603 = vmax.f32 %v601, %v602
  %v604 = vrot.slane %v603, 1
  %v605 = vmax.f32 %v603, %v604
  %v606 = vmax.f32 %v114, %v130
  %v607 = vrot.slane %v606, 4
  %v608 = vmax.f32 %v606, %v607
  %v609 = vrot.slane %v608, 2
  %v610 = vmax.f32 %v608, %v609
  %v611 = vrot.slane %v610, 1
  %v612 = vmax.f32 %v610, %v611
  %v613 = vmax.f32 %v115, %v131
  %v614 = vrot.slane %v613, 4
  %v615 = vmax.f32 %v613, %v614
  %v616 = vrot.slane %v615, 2
  %v617 = vmax.f32 %v615, %v616
  %v618 = vrot.slane %v617, 1
  %v619 = vmax.f32 %v617, %v618
  %v620 = vmax.f32 %v116, %v132
  %v621 = vrot.slane %v620, 4
  %v622 = vmax.f32 %v620, %v621
  %v623 = vrot.slane %v622, 2
  %v624 = vmax.f32 %v622, %v623
  %v625 = vrot.slane %v624, 1
  %v626 = vmax.f32 %v624, %v625
  %v627 = vmax.f32 %v117, %v133
  %v628 = vrot.slane %v627, 4
  %v629 = vmax.f32 %v627, %v628
  %v630 = vrot.slane %v629, 2
  %v631 = vmax.f32 %v629, %v630
  %v632 = vrot.slane %v631, 1
  %v633 = vmax.f32 %v631, %v632
  %v634 = vmax.f32 %v118, %v134
  %v635 = vrot.slane %v634, 4
  %v636 = vmax.f32 %v634, %v635
  %v637 = vrot.slane %v636, 2
  %v638 = vmax.f32 %v636, %v637
  %v639 = vrot.slane %v638, 1
  %v640 = vmax.f32 %v638, %v639
  %v641 = vmax.f32 %v119, %v135
  %v642 = vrot.slane %v641, 4
  %v643 = vmax.f32 %v641, %v642
  %v644 = vrot.slane %v643, 2
  %v645 = vmax.f32 %v643, %v644
  %v646 = vrot.slane %v645, 1
  %v647 = vmax.f32 %v645, %v646
  %v648 = vmax.f32 %v136, %v152
  %v649 = vrot.slane %v648, 4
  %v650 = vmax.f32 %v648, %v649
  %v651 = vrot.slane %v650, 2
  %v652 = vmax.f32 %v650, %v651
  %v653 = vrot.slane %v652, 1
  %v654 = vmax.f32 %v652, %v653
  %v655 = vmax.f32 %v137, %v153
  %v656 = vrot.slane %v655, 4
  %v657 = vmax.f32 %v655, %v656
  %v658 = vrot.slane %v657, 2
  %v659 = vmax.f32 %v657, %v658
  %v660 = vrot.slane %v659, 1
  %v661 = vmax.f32 %v659, %v660
  %v662 = vmax.f32 %v138, %v154
  %v663 = vrot.slane %v662, 4
  %v664 = vmax.f32 %v662, %v663
  %v665 = vrot.slane %v664, 2
  %v666 = vmax.f32 %v664, %v665
  %v667 = vrot.slane %v666, 1
  %v668 = vmax.f32 %v666, %v667
  %v669 = vmax.f32 %v139, %v155
  %v670 = vrot.slane %v669, 4
  %v671 = vmax.f32 %v669, %v670
  %v672 = vrot.slane %v671, 2
  %v673 = vmax.f32 %v671, %v672
  %v674 = vrot.slane %v673, 1
  %v675 = vmax.f32 %v673, %v674
  %v676 = vmax.f32 %v140, %v156
  %v677 = vrot.slane %v676, 4
  %v678 = vmax.f32 %v676, %v677
  %v679 = vrot.slane %v678, 2
  %v680 = vmax.f32 %v678, %v679
  %v681 = vrot.slane %v680, 1
  %v682 = vmax.f32 %v680, %v681
  %v683 = vmax.f32 %v141, %v157
  %v684 = vrot.slane %v683, 4
  %v685 = vmax.f32 %v683, %v684
  %v686 = vrot.slane %v685, 2
  %v687 = vmax.f32 %v685, %v686
  %v688 = vrot.slane %v687, 1
  %v689 = vmax.f32 %v687, %v688
  %v690 = vmax.f32 %v142, %v158
  %v691 = vrot.slane %v690, 4
  %v692 = vmax.f32 %v690, %v691
  %v693 = vrot.slane %v692, 2
  %v694 = vmax.f32 %v692, %v693
  %v695 = vrot.slane %v694, 1
  %v696 = vmax.f32 %v694, %v695
  %v697 = vmax.f32 %v143, %v159
  %v698 = vrot.slane %v697, 4
  %v699 = vmax.f32 %v697, %v698
  %v700 = vrot.slane %v699, 2
  %v701 = vmax.f32 %v699, %v700
  %v702 = vrot.slane %v701, 1
  %v703 = vmax.f32 %v701, %v702
  %v704 = vmax.f32 %v144, %v160
  %v705 = vrot.slane %v704, 4
  %v706 = vmax.f32 %v704, %v705
  %v707 = vrot.slane %v706, 2
  %v708 = vmax.f32 %v706, %v707
  %v709 = vrot.slane %v708, 1
  %v710 = vmax.f32 %v708, %v709
  %v711 = vmax.f32 %v145, %v161
  %v712 = vrot.slane %v711, 4
  %v713 = vmax.f32 %v711, %v712
  %v714 = vrot.slane %v713, 2
  %v715 = vmax.f32 %v713, %v714
  %v716 = vrot.slane %v715, 1
  %v717 = vmax.f32 %v715, %v716
  %v718 = vmax.f32 %v146, %v162
  %v719 = vrot.slane %v718, 4
  %v720 = vmax.f32 %v718, %v719
  %v721 = vrot.slane %v720, 2
  %v722 = vmax.f32 %v720, %v721
  %v723 = vrot.slane %v722, 1
  %v724 = vmax.f32 %v722, %v723
  %v725 = vmax.f32 %v147, %v163
  %v726 = vrot.slane %v725, 4
  %v727 = vmax.f32 %v725, %v726
  %v728 = vrot.slane %v727, 2
  %v729 = vmax.f32 %v727, %v728
  %v730 = vrot.slane %v729, 1
  %v731 = vmax.f32 %v729, %v730
  %v732 = vmax.f32 %v148, %v164
  %v733 = vrot.slane %v732, 4
  %v734 = vmax.f32 %v732, %v733
  %v735 = vrot.slane %v734, 2
  %v736 = vmax.f32 %v734, %v735
  %v737 = vrot.slane %v736, 1
  %v738 = vmax.f32 %v736, %v737
  %v739 = vmax.f32 %v149, %v165
  %v740 = vrot.slane %v739, 4
  %v741 = vmax.f32 %v739, %v740
  %v742 = vrot.slane %v741, 2
  %v743 = vmax.f32 %v741, %v742
  %v744 = vrot.slane %v743, 1
  %v745 = vmax.f32 %v743, %v744
  %v746 = vmax.f32 %v150, %v166
  %v747 = vrot.slane %v746, 4
  %v748 = vmax.f32 %v746, %v747
  %v749 = vrot.slane %v748, 2
  %v750 = vmax.f32 %v748, %v749
  %v751 = vrot.slane %v750, 1
  %v752 = vmax.f32 %v750, %v751
  %v753 = vmax.f32 %v151, %v167
  %v754 = vrot.slane %v753, 4
  %v755 = vmax.f32 %v753, %v754
  %v756 = vrot.slane %v755, 2
  %v757 = vmax.f32 %v755, %v756
  %v758 = vrot.slane %v757, 1
  %v759 = vmax.f32 %v757, %v758
  %v760 = vmax.f32 %v168, %v184
  %v761 = vrot.slane %v760, 4
  %v762 = vmax.f32 %v760, %v761
  %v763 = vrot.slane %v762, 2
  %v764 = vmax.f32 %v762, %v763
  %v765 = vrot.slane %v764, 1
  %v766 = vmax.f32 %v764, %v765
  %v767 = vmax.f32 %v169, %v185
  %v768 = vrot.slane %v767, 4
  %v769 = vmax.f32 %v767, %v768
  %v770 = vrot.slane %v769, 2
  %v771 = vmax.f32 %v769, %v770
  %v772 = vrot.slane %v771, 1
  %v773 = vmax.f32 %v771, %v772
  %v774 = vmax.f32 %v170, %v186
  %v775 = vrot.slane %v774, 4
  %v776 = vmax.f32 %v774, %v775
  %v777 = vrot.slane %v776, 2
  %v778 = vmax.f32 %v776, %v777
  %v779 = vrot.slane %v778, 1
  %v780 = vmax.f32 %v778, %v779
  %v781 = vmax.f32 %v171, %v187
  %v782 = vrot.slane %v781, 4
  %v783 = vmax.f32 %v781, %v782
  %v784 = vrot.slane %v783, 2
  %v785 = vmax.f32 %v783, %v784
  %v786 = vrot.slane %v785, 1
  %v787 = vmax.f32 %v785, %v786
  %v788 = vmax.f32 %v172, %v188
  %v789 = vrot.slane %v788, 4
  %v790 = vmax.f32 %v788, %v789
  %v791 = vrot.slane %v790, 2
  %v792 = vmax.f32 %v790, %v791
  %v793 = vrot.slane %v792, 1
  %v794 = vmax.f32 %v792, %v793
  %v795 = vmax.f32 %v173, %v189
  %v796 = vrot.slane %v795, 4
  %v797 = vmax.f32 %v795, %v796
  %v798 = vrot.slane %v797, 2
  %v799 = vmax.f32 %v797, %v798
  %v800 = vrot.slane %v799, 1
  %v801 = vmax.f32 %v799, %v800
  %v802 = vmax.f32 %v174, %v190
  %v803 = vrot.slane %v802, 4
  %v804 = vmax.f32 %v802, %v803
  %v805 = vrot.slane %v804, 2
  %v806 = vmax.f32 %v804, %v805
  %v807 = vrot.slane %v806, 1
  %v808 = vmax.f32 %v806, %v807
  %v809 = vmax.f32 %v175, %v191
  %v810 = vrot.slane %v809, 4
  %v811 = vmax.f32 %v809, %v810
  %v812 = vrot.slane %v811, 2
  %v813 = vmax.f32 %v811, %v812
  %v814 = vrot.slane %v813, 1
  %v815 = vmax.f32 %v813, %v814
  %v816 = vmax.f32 %v176, %v192
  %v817 = vrot.slane %v816, 4
  %v818 = vmax.f32 %v816, %v817
  %v819 = vrot.slane %v818, 2
  %v820 = vmax.f32 %v818, %v819
  %v821 = vrot.slane %v820, 1
  %v822 = vmax.f32 %v820, %v821
  %v823 = vmax.f32 %v177, %v193
  %v824 = vrot.slane %v823, 4
  %v825 = vmax.f32 %v823, %v824
  %v826 = vrot.slane %v825, 2
  %v827 = vmax.f32 %v825, %v826
  %v828 = vrot.slane %v827, 1
  %v829 = vmax.f32 %v827, %v828
  %v830 = vmax.f32 %v178, %v194
  %v831 = vrot.slane %v830, 4
  %v832 = vmax.f32 %v830, %v831
  %v833 = vrot.slane %v832, 2
  %v834 = vmax.f32 %v832, %v833
  %v835 = vrot.slane %v834, 1
  %v836 = vmax.f32 %v834, %v835
  %v837 = vmax.f32 %v179, %v195
  %v838 = vrot.slane %v837, 4
  %v839 = vmax.f32 %v837, %v838
  %v840 = vrot.slane %v839, 2
  %v841 = vmax.f32 %v839, %v840
  %v842 = vrot.slane %v841, 1
  %v843 = vmax.f32 %v841, %v842
  %v844 = vmax.f32 %v180, %v196
  %v845 = vrot.slane %v844, 4
  %v846 = vmax.f32 %v844, %v845
  %v847 = vrot.slane %v846, 2
  %v848 = vmax.f32 %v846, %v847
  %v849 = vrot.slane %v848, 1
  %v850 = vmax.f32 %v848, %v849
  %v851 = vmax.f32 %v181, %v197
  %v852 = vrot.slane %v851, 4
  %v853 = vmax.f32 %v851, %v852
  %v854 = vrot.slane %v853, 2
  %v855 = vmax.f32 %v853, %v854
  %v856 = vrot.slane %v855, 1
  %v857 = vmax.f32 %v855, %v856
  %v858 = vmax.f32 %v182, %v198
  %v859 = vrot.slane %v858, 4
  %v860 = vmax.f32 %v858, %v859
  %v861 = vrot.slane %v860, 2
  %v862 = vmax.f32 %v860, %v861
  %v863 = vrot.slane %v862, 1
  %v864 = vmax.f32 %v862, %v863
  %v865 = vmax.f32 %v183, %v199
  %v866 = vrot.slane %v865, 4
  %v867 = vmax.f32 %v865, %v866
  %v868 = vrot.slane %v867, 2
  %v869 = vmax.f32 %v867, %v868
  %v870 = vrot.slane %v869, 1
  %v871 = vmax.f32 %v869, %v870
  %vm968 = vcmask 1041409
  %v969 = vsel %vm968, %v318, %v206
  %vm970 = vcmask 1042434
  %v971 = vsel %vm970, %v430, %v969
  %vm972 = vcmask 1043459
  %v973 = vsel %vm972, %v542, %v971
  %vm974 = vcmask 1044484
  %v975 = vsel %vm974, %v654, %v973
  %vm976 = vcmask 1045509
  %v977 = vsel %vm976, %v766, %v975
  %v978 = vsel %vm968, %v325, %v213
  %v979 = vsel %vm970, %v437, %v978
  %v980 = vsel %vm972, %v549, %v979
  %v981 = vsel %vm974, %v661, %v980
  %v982 = vsel %vm976, %v773, %v981
  %v983 = vsel %vm968, %v332, %v220
  %v984 = vsel %vm970, %v444, %v983
  %v985 = vsel %vm972, %v556, %v984
  %v986 = vsel %vm974, %v668, %v985
  %v987 = vsel %vm976, %v780, %v986
  %v988 = vsel %vm968, %v339, %v227
  %v989 = vsel %vm970, %v451, %v988
  %v990 = vsel %vm972, %v563, %v989
  %v991 = vsel %vm974, %v675, %v990
  %v992 = vsel %vm976, %v787, %v991
  %v993 = vsel %vm968, %v346, %v234
  %v994 = vsel %vm970, %v458, %v993
  %v995 = vsel %vm972, %v570, %v994
  %v996 = vsel %vm974, %v682, %v995
  %v997 = vsel %vm976, %v794, %v996
  %v998 = vsel %vm968, %v353, %v241
  %v999 = vsel %vm970, %v465, %v998
  %v1000 = vsel %vm972, %v577, %v999
  %v1001 = vsel %vm974, %v689, %v1000
  %v1002 = vsel %vm976, %v801, %v1001
  %v1003 = vsel %vm968, %v360, %v248
  %v1004 = vsel %vm970, %v472, %v1003
  %v1005 = vsel %vm972, %v584, %v1004
  %v1006 = vsel %vm974, %v696, %v1005
  %v1007 = vsel %vm976, %v808, %v1006
  %v1008 = vsel %vm968, %v367, %v255
  %v1009 = vsel %vm970, %v479, %v1008
  %v1010 = vsel %vm972, %v591, %v1009
  %v1011 = vsel %vm974, %v703, %v1010
  %v1012 = vsel %vm976, %v815, %v1011
  %v1013 = vsel %vm968, %v374, %v262
  %v1014 = vsel %vm970, %v486, %v1013
  %v1015 = vsel %vm972, %v598, %v1014
  %v1016 = vsel %vm974, %v710, %v1015
  %v1017 = vsel %vm976, %v822, %v1016
  %v1018 = vsel %vm968, %v381, %v269
  %v1019 = vsel %vm970, %v493, %v1018
  %v1020 = vsel %vm972, %v605, %v1019
  %v1021 = vsel %vm974, %v717, %v1020
  %v1022 = vsel %vm976, %v829, %v1021
  %v1023 = vsel %vm968, %v388, %v276
  %v1024 = vsel %vm970, %v500, %v1023
  %v1025 = vsel %vm972, %v612, %v1024
  %v1026 = vsel %vm974, %v724, %v1025
  %v1027 = vsel %vm976, %v836, %v1026
  %v1028 = vsel %vm968, %v395, %v283
  %v1029 = vsel %vm970, %v507, %v1028
  %v1030 = vsel %vm972, %v619, %v1029
  %v1031 = vsel %vm974, %v731, %v1030
  %v1032 = vsel %vm976, %v843, %v1031
  %v1033 = vsel %vm968, %v402, %v290
  %v1034 = vsel %vm970, %v514, %v1033
  %v1035 = vsel %vm972, %v626, %v1034
  %v1036 = vsel %vm974, %v738, %v1035
  %v1037 = vsel %vm976, %v850, %v1036
  %v1038 = vsel %vm968, %v409, %v297
  %v1039 = vsel %vm970, %v521, %v1038
  %v1040 = vsel %vm972, %v633, %v1039
  %v1041 = vsel %vm974, %v745, %v1040
  %v1042 = vsel %vm976, %v857, %v1041
  %v1043 = vsel %vm968, %v416, %v304
  %v1044 = vsel %vm970, %v528, %v1043
  %v1045 = vsel %vm972, %v640, %v1044
  %v1046 = vsel %vm974, %v752, %v1045
  %v1047 = vsel %vm976, %v864, %v1046
  %v1048 = vsel %vm968, %v423, %v311
  %v1049 = vsel %vm970, %v535, %v1048
  %v1050 = vsel %vm972, %v647, %v1049
  %v1051 = vsel %vm974, %v759, %v1050
  %v1052 = vsel %vm976, %v871, %v1051
  %1069 = vst [vmem:[%s1] sm:$0x3f] %v977
  %1070 = vst [vmem:[%s1 + $0x8] sm:$0x3f] %v982
  %1071 = vst [vmem:[%s1 + $0x10] sm:$0x3f] %v987
  %1072 = vst [vmem:[%s1 + $0x18] sm:$0x3f] %v992
  %1073 = vst [vmem:[%s1 + $0x20] sm:$0x3f] %v997
  %1074 = vst [vmem:[%s1 + $0x28] sm:$0x3f] %v1002
  %1075 = vst [vmem:[%s1 + $0x30] sm:$0x3f] %v1007
  %1076 = vst [vmem:[%s1 + $0x38] sm:$0x3f] %v1012
  %1077 = vst [vmem:[%s1 + $0x40] sm:$0x3f] %v1017
  %1078 = vst [vmem:[%s1 + $0x48] sm:$0x3f] %v1022
  %1079 = vst [vmem:[%s1 + $0x50] sm:$0x3f] %v1027
  %1080 = vst [vmem:[%s1 + $0x58] sm:$0x3f] %v1032
  %1081 = vst [vmem:[%s1 + $0x60] sm:$0x3f] %v1037
  %1082 = vst [vmem:[%s1 + $0x68] sm:$0x3f] %v1042
  %1083 = vst [vmem:[%s1 + $0x70] sm:$0x3f] %v1047
  %1084 = vst [vmem:[%s1 + $0x78] sm:$0x3f] %v1052
  // Predicated region
  $region6: #{mgn_forward.6} parent=0 // pred_check
    _
  $region7: #{mgn_forward.6} parent=0 // pred_check_branch
    %1086 = sbr.rel (0) target = $region9
  $region8: #{mgn_forward.6} parent=0 // pred_region
    _
  $region9: #{mgn_forward.6} parent=0 // pred_fallthru
    _
  // Predicated region
  $region10: #{mgn_forward.6} parent=0 // pred_check
    _
  $region11: #{mgn_forward.6} parent=0 // pred_check_branch
    %1088 = sbr.rel (0) target = $region13
  $region12: #{mgn_forward.6} parent=0 // pred_region
    _
  $region13: #{mgn_forward.6} parent=0 // pred_fallthru
    _

// kernel: mgn_forward.7
$region0: #{mgn_forward.7}
  #allocation0 [shape = 'u32[]', space=smem, size = 0x4, offset = 0x4, fixed_abs, tag = 'smem constant byte address 0x4 - core index']
  #allocation1 [shape = 'u32[72,128]{1,0:T(1,128)}', space=vmem, size = 0x9000, scoped, tag = 'internal scratch']
  %s0 = inlined_call_operand.vmem [shape: bf16[8,2,2048], index: 0, kind: input, shape index: {}]
  %s1 = inlined_call_operand.vmem [shape: bf16[2048,256], index: 1, kind: input, shape index: {}]
  %s2 = inlined_call_operand.vmem [shape: f32[1,256], index: 2, kind: input, shape index: {}]
  %s3 = inlined_call_operand.vmem [shape: bf16[8,256,768], index: 3, kind: input, shape index: {}]
  %s4 = inlined_call_operand.vmem [shape: f32[8,1,768], index: 4, kind: input, shape index: {}]
  %s5 = inlined_call_operand.vmem [shape: f32[8,2,256], index: 5, kind: output, shape index: {0}]
  %s6 = inlined_call_operand.vmem [shape: f32[8,2,768], index: 6, kind: output, shape index: {1}]
  %7 = xla_tuple %s5, %s6
  %s8 = sld [smem:[#allocation0]]
  $region61: #{mgn_forward.7} parent=0
    _
  %s10 = ssub.s32 1, %s8
  %s11 = scalar_select 0, %s10, %s8
  loop: start=0, step=1, limit=10
  $region2: #{mgn_forward.7} parent=0 // loop_pre_header
    _
  $region3: #{mgn_forward.7} parent=0 // loop_header
    %s13 = sphi 0, %s17
    %p14 = scmp.ge.s32.totalorder %s13, 10
    %s23 = sphi 0, %s25
    %s26 = sphi 0, %s23
    %s27 = sphi 0, %s26
    %s43 = sphi 0, %s27
    %s47 = sphi 0, %s47
    %s49 = sphi 0, %s47
    %s50 = sphi 0, %s49
    %s64 = sphi 0, %s50
    %s68 = sphi 0, %s68
    %s70 = sphi 0, %s68
    %s71 = sphi 0, %s70
    %s85 = sphi 0, %s71
    %s91 = sphi 0, %s93
    %s94 = sphi 0, %s91
    %s95 = sphi 0, %s94
    %s111 = sphi 0, %s95
    %s117 = sphi 0, %s119
    %s120 = sphi 0, %s117
    %s121 = sphi 0, %s120
    %s137 = sphi 0, %s121
    %s143 = sphi 0, %s145
    %s146 = sphi 0, %s143
    %s147 = sphi 0, %s146
    %s163 = sphi 0, %s147
    %s169 = sphi 0, %s171
    %s172 = sphi 0, %s169
    %s173 = sphi 0, %s172
    %s189 = sphi 0, %s173
  $region4: #{mgn_forward.7} parent=0 // loop_header_branch
    %16 = sbr.rel (%p14) target = $region8
  $region5: #{mgn_forward.7} parent=0 // loop_body
    %s18 = ssub.s32 %s13, 1
    %s19 = ssub.s32 %s13, 2
    %s20 = sadd.s32 %s13, 1
    %s21 = ssub.s32 %s13, %s20
    %p22 = scmp.eq.s32.totalorder %s21, 0
    %s24 = sadd.s32 %s23, 1
    %s25 = scalar_select %p22, %s23, %s24
    %p28 = pneg %p22
    %p29 = scmp.eq.s32.totalorder %s13, 7
    %p30 = por %p28, %p29
    %p31 = scmp.ne.s32.totalorder %s23, %s26
    %p32 = scmp.eq.s32.totalorder %s13, 0
    %p33 = por %p31, %p32
    %p34 = scmp.ne.s32.totalorder %s23, %s26
    %p35 = scmp.eq.s32.totalorder %s18, 7
    %p36 = por %p34, %p35
    %p37 = scmp.ne.s32.totalorder %s26, %s27
    %p38 = scmp.eq.s32.totalorder %s18, 0
    %p39 = por %p37, %p38
    %p40 = scmp.ne.s32.totalorder %s26, %s27
    %p41 = scmp.eq.s32.totalorder %s19, 7
    %p42 = por %p40, %p41
    %p44 = scmp.ne.s32.totalorder %s27, %s43
    %p45 = scmp.eq.s32.totalorder %s19, 0
    %p46 = por %p44, %p45
    %s48 = sadd.s32 %s47, 1
    %p51 = scmp.eq.s32.totalorder %s13, 7
    %p52 = scmp.ne.s32.totalorder %s47, %s49
    %p53 = scmp.eq.s32.totalorder %s13, 0
    %p54 = por %p52, %p53
    %p55 = scmp.ne.s32.totalorder %s47, %s49
    %p56 = scmp.eq.s32.totalorder %s18, 7
    %p57 = por %p55, %p56
    %p58 = scmp.ne.s32.totalorder %s49, %s50
    %p59 = scmp.eq.s32.totalorder %s18, 0
    %p60 = por %p58, %p59
    %p61 = scmp.ne.s32.totalorder %s49, %s50
    %p62 = scmp.eq.s32.totalorder %s19, 7
    %p63 = por %p61, %p62
    %p65 = scmp.ne.s32.totalorder %s50, %s64
    %p66 = scmp.eq.s32.totalorder %s19, 0
    %p67 = por %p65, %p66
    %s69 = sadd.s32 %s68, 1
    %p72 = scmp.eq.s32.totalorder %s13, 7
    %p73 = scmp.ne.s32.totalorder %s68, %s70
    %p74 = scmp.eq.s32.totalorder %s13, 0
    %p75 = por %p73, %p74
    %p76 = scmp.ne.s32.totalorder %s68, %s70
    %p77 = scmp.eq.s32.totalorder %s18, 7
    %p78 = por %p76, %p77
    %p79 = scmp.ne.s32.totalorder %s70, %s71
    %p80 = scmp.eq.s32.totalorder %s18, 0
    %p81 = por %p79, %p80
    %p82 = scmp.ne.s32.totalorder %s70, %s71
    %p83 = scmp.eq.s32.totalorder %s19, 7
    %p84 = por %p82, %p83
    %p86 = scmp.ne.s32.totalorder %s71, %s85
    %p87 = scmp.eq.s32.totalorder %s19, 0
    %p88 = por %p86, %p87
    %s89 = ssub.s32 %s13, %s20
    %p90 = scmp.eq.s32.totalorder %s89, 0
    %s92 = sadd.s32 %s91, 1
    %s93 = scalar_select %p90, %s91, %s92
    %p96 = pneg %p90
    %p97 = scmp.eq.s32.totalorder %s13, 7
    %p98 = por %p96, %p97
    %p99 = scmp.ne.s32.totalorder %s91, %s94
    %p100 = scmp.eq.s32.totalorder %s13, 0
    %p101 = por %p99, %p100
    %p102 = scmp.ne.s32.totalorder %s91, %s94
    %p103 = scmp.eq.s32.totalorder %s18, 7
    %p104 = por %p102, %p103
    %p105 = scmp.ne.s32.totalorder %s94, %s95
    %p106 = scmp.eq.s32.totalorder %s18, 0
    %p107 = por %p105, %p106
    %p108 = scmp.ne.s32.totalorder %s94, %s95
    %p109 = scmp.eq.s32.totalorder %s19, 7
    %p110 = por %p108, %p109
    %p112 = scmp.ne.s32.totalorder %s95, %s111
    %p113 = scmp.eq.s32.totalorder %s19, 0
    %p114 = por %p112, %p113
    %s115 = ssub.s32 %s13, %s20
    %p116 = scmp.eq.s32.totalorder %s115, 0
    %s118 = sadd.s32 %s117, 1
    %s119 = scalar_select %p116, %s117, %s118
    %p122 = pneg %p116
    %p123 = scmp.eq.s32.totalorder %s13, 7
    %p124 = por %p122, %p123
    %p125 = scmp.ne.s32.totalorder %s117, %s120
    %p126 = scmp.eq.s32.totalorder %s13, 0
    %p127 = por %p125, %p126
    %p128 = scmp.ne.s32.totalorder %s117, %s120
    %p129 = scmp.eq.s32.totalorder %s18, 7
    %p130 = por %p128, %p129
    %p131 = scmp.ne.s32.totalorder %s120, %s121
    %p132 = scmp.eq.s32.totalorder %s18, 0
    %p133 = por %p131, %p132
    %p134 = scmp.ne.s32.totalorder %s120, %s121
    %p135 = scmp.eq.s32.totalorder %s19, 7
    %p136 = por %p134, %p135
    %p138 = scmp.ne.s32.totalorder %s121, %s137
    %p139 = scmp.eq.s32.totalorder %s19, 0
    %p140 = por %p138, %p139
    %s141 = ssub.s32 %s13, %s20
    %p142 = scmp.eq.s32.totalorder %s141, 0
    %s144 = sadd.s32 %s143, 1
    %s145 = scalar_select %p142, %s143, %s144
    %p148 = pneg %p142
    %p149 = scmp.eq.s32.totalorder %s13, 7
    %p150 = por %p148, %p149
    %p151 = scmp.ne.s32.totalorder %s143, %s146
    %p152 = scmp.eq.s32.totalorder %s13, 0
    %p153 = por %p151, %p152
    %p154 = scmp.ne.s32.totalorder %s143, %s146
    %p155 = scmp.eq.s32.totalorder %s18, 7
    %p156 = por %p154, %p155
    %p157 = scmp.ne.s32.totalorder %s146, %s147
    %p158 = scmp.eq.s32.totalorder %s18, 0
    %p159 = por %p157, %p158
    %p160 = scmp.ne.s32.totalorder %s146, %s147
    %p161 = scmp.eq.s32.totalorder %s19, 7
    %p162 = por %p160, %p161
    %p164 = scmp.ne.s32.totalorder %s147, %s163
    %p165 = scmp.eq.s32.totalorder %s19, 0
    %p166 = por %p164, %p165
    %s167 = ssub.s32 %s13, %s20
    %p168 = scmp.eq.s32.totalorder %s167, 0
    %s170 = sadd.s32 %s169, 1
    %s171 = scalar_select %p168, %s169, %s170
    %p174 = pneg %p168
    %p175 = scmp.eq.s32.totalorder %s13, 7
    %p176 = por %p174, %p175
    %p177 = scmp.ne.s32.totalorder %s169, %s172
    %p178 = scmp.eq.s32.totalorder %s13, 0
    %p179 = por %p177, %p178
    %p180 = scmp.ne.s32.totalorder %s169, %s172
    %p181 = scmp.eq.s32.totalorder %s18, 7
    %p182 = por %p180, %p181
    %p183 = scmp.ne.s32.totalorder %s172, %s173
    %p184 = scmp.eq.s32.totalorder %s18, 0
    %p185 = por %p183, %p184
    %p186 = scmp.ne.s32.totalorder %s172, %s173
    %p187 = scmp.eq.s32.totalorder %s19, 7
    %p188 = por %p186, %p187
    %p190 = scmp.ne.s32.totalorder %s173, %s189
    %p191 = scmp.eq.s32.totalorder %s19, 0
    %p192 = por %p190, %p191
    %p193 = scmp.le.s32.totalorder 1, %s13
    %p194 = scmp.lt.s32.totalorder %s13, 9
    %p195 = pnand %p193, %p194
    %p196 = pneg %p195
    // Predicated region
    $region9: #{mgn_forward.7} parent=5 // pred_check
      _
    $region10: #{mgn_forward.7} parent=5 // pred_check_branch
      %198 = sbr.rel (%p195) target = $region12
    $region11: #{mgn_forward.7} parent=5 // pred_region
      %s199 = ssub.s32 %s13, 1
      // Predicated region
      $region13: #{mgn_forward.7} parent=11 // pred_check
        %p200 = pneg %p60
      $region14: #{mgn_forward.7} parent=11 // pred_check_branch
        %202 = sbr.rel (%p200) target = $region16
      $region15: #{mgn_forward.7} parent=11 // pred_region
        _
      $region16: #{mgn_forward.7} parent=11 // pred_fallthru
        _
      // Predicated region
      $region17: #{mgn_forward.7} parent=11 // pred_check
        %p203 = pneg %p81
      $region18: #{mgn_forward.7} parent=11 // pred_check_branch
        %205 = sbr.rel (%p203) target = $region20
      $region19: #{mgn_forward.7} parent=11 // pred_region
        _
      $region20: #{mgn_forward.7} parent=11 // pred_fallthru
        _
    $region12: #{mgn_forward.7} parent=5 // pred_fallthru
      _
    %p206 = scmp.lt.s32.totalorder %s13, 8
    // Predicated region
    $region21: #{mgn_forward.7} parent=5 // pred_check
      %p207 = pneg %p206
    $region22: #{mgn_forward.7} parent=5 // pred_check_branch
      %209 = sbr.rel (%p207) target = $region24
    $region23: #{mgn_forward.7} parent=5 // pred_region
      // Predicated region
      $region25: #{mgn_forward.7} parent=23 // pred_check
        %p210 = pneg %p33
      $region26: #{mgn_forward.7} parent=23 // pred_check_branch
        %212 = sbr.rel (%p210) target = $region28
      $region27: #{mgn_forward.7} parent=23 // pred_region
        %p213 = scmp.lt.s32.totalorder %s13, 7
        %s214 = scalar_select %p213, %s13, 7
        %s215 = smul.addr %s214, 16
        %s216 = scalar_lea.vmem %s0, %s215
      $region28: #{mgn_forward.7} parent=23 // pred_fallthru
        _
      // Predicated region
      $region29: #{mgn_forward.7} parent=23 // pred_check
        %p217 = pneg %p101
      $region30: #{mgn_forward.7} parent=23 // pred_check_branch
        %219 = sbr.rel (%p217) target = $region32
      $region31: #{mgn_forward.7} parent=23 // pred_region
        %p220 = scmp.lt.s32.totalorder %s13, 7
        %s221 = scalar_select %p220, %s13, 7
        %s222 = smul.addr %s221, 192
        %s223 = smul.addr %s222, 4
        %s224 = scalar_lea.vmem %s3, %s223
      $region32: #{mgn_forward.7} parent=23 // pred_fallthru
        _
      // Predicated region
      $region33: #{mgn_forward.7} parent=23 // pred_check
        %p225 = pneg %p127
      $region34: #{mgn_forward.7} parent=23 // pred_check_branch
        %227 = sbr.rel (%p225) target = $region36
      $region35: #{mgn_forward.7} parent=23 // pred_region
        %p228 = scmp.lt.s32.totalorder %s13, 7
        %s229 = scalar_select %p228, %s13, 7
        %s230 = smul.addr %s229, 6
        %s231 = scalar_lea.vmem %s4, %s230
      $region36: #{mgn_forward.7} parent=23 // pred_fallthru
        _
    $region24: #{mgn_forward.7} parent=5 // pred_fallthru
      _
    %p232 = scmp.le.s32.totalorder 1, %s13
    %p233 = scmp.lt.s32.totalorder %s13, 9
    %p234 = pnand %p232, %p233
    %p235 = pneg %p234
    // Predicated region
    $region37: #{mgn_forward.7} parent=5 // pred_check
      _
    $region38: #{mgn_forward.7} parent=5 // pred_check_branch
      %237 = sbr.rel (%p234) target = $region40
    $region39: #{mgn_forward.7} parent=5 // pred_region
      %s238 = ssub.s32 %s13, 1
      %p239 = scmp.lt.s32.totalorder %s18, 7
      %s240 = scalar_select %p239, %s18, 7
      %s241 = smul.addr %s240, 16
      %s242 = scalar_lea.vmem %s0, %s241
      %p243 = pneg %p39
      %p244 = pneg %p36
      %p245 = pneg %p60
      %p246 = pneg %p57
      %p247 = pneg %p81
      %p248 = pneg %p78
      %p249 = scmp.lt.s32.totalorder %s18, 7
      %s250 = scalar_select %p249, %s18, 7
      %s251 = smul.addr %s250, 192
      %s252 = smul.addr %s251, 4
      %s253 = scalar_lea.vmem %s3, %s252
      %p254 = pneg %p107
      %p255 = pneg %p104
      %p256 = scmp.lt.s32.totalorder %s18, 7
      %s257 = scalar_select %p256, %s18, 7
      %s258 = smul.addr %s257, 6
      %s259 = scalar_lea.vmem %s4, %s258
      %p260 = pneg %p133
      %p261 = pneg %p130
      %p262 = pneg %p159
      %p263 = pneg %p156
      %p264 = scmp.lt.s32.totalorder %s18, 7
      %s265 = scalar_select %p264, %s18, 7
      %s266 = smul.addr %s265, 2
      %s267 = smul.addr %s266, 2
      %s268 = scalar_lea.vmem %s5, %s267
      %p269 = pneg %p185
      %p270 = pneg %p182
      %p271 = scmp.lt.s32.totalorder %s18, 7
      %s272 = scalar_select %p271, %s18, 7
      %s273 = smul.addr %s272, 6
      %s274 = smul.addr %s273, 2
      %s275 = scalar_lea.vmem %s6, %s274
      %p276 = scmp.lt.s32.totalorder %s18, 7
      %s277 = scalar_select %p276, %s18, 7
      %s278 = smul.addr %s277, 16
      %s279 = scalar_lea.vmem %s0, %s278
      %p280 = scmp.lt.s32.totalorder %s18, 7
      %s281 = scalar_select %p280, %s18, 7
      %s282 = smul.addr %s281, 192
      %s283 = smul.addr %s282, 4
      %s284 = scalar_lea.vmem %s3, %s283
      %p285 = scmp.lt.s32.totalorder %s18, 7
      %s286 = scalar_select %p285, %s18, 7
      %s287 = smul.addr %s286, 6
      %s288 = scalar_lea.vmem %s4, %s287
      %p289 = scmp.lt.s32.totalorder %s18, 7
      %s290 = scalar_select %p289, %s18, 7
      %s291 = smul.addr %s290, 2
      %s292 = smul.addr %s291, 2
      %s293 = scalar_lea.vmem %s5, %s292
      %p294 = scmp.lt.s32.totalorder %s18, 7
      %s295 = scalar_select %p294, %s18, 7
      %s296 = smul.addr %s295, 6
      %s297 = smul.addr %s296, 2
      %s298 = scalar_lea.vmem %s6, %s297
      %v299 = vld [vmem:[%s279] sm:$0xff]
      %v300 = vld [vmem:[%s279 + $0x8] sm:$0xff]
      %v301 = vld [vmem:[%s1] sm:$0xff]
      %v302 = vld [vmem:[%s1 + $0x8] sm:$0xff]
      %v303 = vld [vmem:[%s1 + $0x10] sm:$0xff]
      %v304 = vld [vmem:[%s1 + $0x18] sm:$0xff]
      %v305 = vld [vmem:[%s1 + $0x20] sm:$0xff]
      %v306 = vld [vmem:[%s1 + $0x28] sm:$0xff]
      %v307 = vld [vmem:[%s1 + $0x30] sm:$0xff]
      %v308 = vld [vmem:[%s1 + $0x38] sm:$0xff]
      %v309 = vld [vmem:[%s1 + $0x40] sm:$0xff]
      %v310 = vld [vmem:[%s1 + $0x48] sm:$0xff]
      %v311 = vld [vmem:[%s1 + $0x50] sm:$0xff]
      %v312 = vld [vmem:[%s1 + $0x58] sm:$0xff]
      %v313 = vld [vmem:[%s1 + $0x60] sm:$0xff]
      %v314 = vld [vmem:[%s1 + $0x68] sm:$0xff]
      %v315 = vld [vmem:[%s1 + $0x70] sm:$0xff]
      %v316 = vld [vmem:[%s1 + $0x78] sm:$0xff]
      %v317 = vld [vmem:[%s1 + $0x80] sm:$0xff]
      %v318 = vld [vmem:[%s1 + $0x88] sm:$0xff]
      %v319 = vld [vmem:[%s1 + $0x90] sm:$0xff]
      %v320 = vld [vmem:[%s1 + $0x98] sm:$0xff]
      %v321 = vld [vmem:[%s1 + $0xa0] sm:$0xff]
      %v322 = vld [vmem:[%s1 + $0xa8] sm:$0xff]
      %v323 = vld [vmem:[%s1 + $0xb0] sm:$0xff]
      %v324 = vld [vmem:[%s1 + $0xb8] sm:$0xff]
      %v325 = vld [vmem:[%s1 + $0xc0] sm:$0xff]
      %v326 = vld [vmem:[%s1 + $0xc8] sm:$0xff]
      %v327 = vld [vmem:[%s1 + $0xd0] sm:$0xff]
      %v328 = vld [vmem:[%s1 + $0xd8] sm:$0xff]
      %v329 = vld [vmem:[%s1 + $0xe0] sm:$0xff]
      %v330 = vld [vmem:[%s1 + $0xe8] sm:$0xff]
      %v331 = vld [vmem:[%s1 + $0xf0] sm:$0xff]
      %v332 = vld [vmem:[%s1 + $0xf8] sm:$0xff]
      %v333 = vld [vmem:[%s1 + $0x100] sm:$0xff]
      %v334 = vld [vmem:[%s1 + $0x108] sm:$0xff]
      %v335 = vld [vmem:[%s1 + $0x110] sm:$0xff]
      %v336 = vld [vmem:[%s1 + $0x118] sm:$0xff]
      %v337 = vld [vmem:[%s1 + $0x120] sm:$0xff]
      %v338 = vld [vmem:[%s1 + $0x128] sm:$0xff]
      %v339 = vld [vmem:[%s1 + $0x130] sm:$0xff]
      %v340 = vld [vmem:[%s1 + $0x138] sm:$0xff]
      %v341 = vld [vmem:[%s1 + $0x140] sm:$0xff]
      %v342 = vld [vmem:[%s1 + $0x148] sm:$0xff]
      %v343 = vld [vmem:[%s1 + $0x150] sm:$0xff]
      %v344 = vld [vmem:[%s1 + $0x158] sm:$0xff]
      %v345 = vld [vmem:[%s1 + $0x160] sm:$0xff]
      %v346 = vld [vmem:[%s1 + $0x168] sm:$0xff]
      %v347 = vld [vmem:[%s1 + $0x170] sm:$0xff]
      %v348 = vld [vmem:[%s1 + $0x178] sm:$0xff]
      %v349 = vld [vmem:[%s1 + $0x180] sm:$0xff]
      %v350 = vld [vmem:[%s1 + $0x188] sm:$0xff]
      %v351 = vld [vmem:[%s1 + $0x190] sm:$0xff]
      %v352 = vld [vmem:[%s1 + $0x198] sm:$0xff]
      %v353 = vld [vmem:[%s1 + $0x1a0] sm:$0xff]
      %v354 = vld [vmem:[%s1 + $0x1a8] sm:$0xff]
      %v355 = vld [vmem:[%s1 + $0x1b0] sm:$0xff]
      %v356 = vld [vmem:[%s1 + $0x1b8] sm:$0xff]
      %v357 = vld [vmem:[%s1 + $0x1c0] sm:$0xff]
      %v358 = vld [vmem:[%s1 + $0x1c8] sm:$0xff]
      %v359 = vld [vmem:[%s1 + $0x1d0] sm:$0xff]
      %v360 = vld [vmem:[%s1 + $0x1d8] sm:$0xff]
      %v361 = vld [vmem:[%s1 + $0x1e0] sm:$0xff]
      %v362 = vld [vmem:[%s1 + $0x1e8] sm:$0xff]
      %v363 = vld [vmem:[%s1 + $0x1f0] sm:$0xff]
      %v364 = vld [vmem:[%s1 + $0x1f8] sm:$0xff]
      %v365 = vld [vmem:[%s1 + $0x200] sm:$0xff]
      %v366 = vld [vmem:[%s1 + $0x208] sm:$0xff]
      %v367 = vld [vmem:[%s1 + $0x210] sm:$0xff]
      %v368 = vld [vmem:[%s1 + $0x218] sm:$0xff]
      %v369 = vld [vmem:[%s1 + $0x220] sm:$0xff]
      %v370 = vld [vmem:[%s1 + $0x228] sm:$0xff]
      %v371 = vld [vmem:[%s1 + $0x230] sm:$0xff]
      %v372 = vld [vmem:[%s1 + $0x238] sm:$0xff]
      %v373 = vld [vmem:[%s1 + $0x240] sm:$0xff]
      %v374 = vld [vmem:[%s1 + $0x248] sm:$0xff]
      %v375 = vld [vmem:[%s1 + $0x250] sm:$0xff]
      %v376 = vld [vmem:[%s1 + $0x258] sm:$0xff]
      %v377 = vld [vmem:[%s1 + $0x260] sm:$0xff]
      %v378 = vld [vmem:[%s1 + $0x268] sm:$0xff]
      %v379 = vld [vmem:[%s1 + $0x270] sm:$0xff]
      %v380 = vld [vmem:[%s1 + $0x278] sm:$0xff]
      %v381 = vld [vmem:[%s1 + $0x280] sm:$0xff]
      %v382 = vld [vmem:[%s1 + $0x288] sm:$0xff]
      %v383 = vld [vmem:[%s1 + $0x290] sm:$0xff]
      %v384 = vld [vmem:[%s1 + $0x298] sm:$0xff]
      %v385 = vld [vmem:[%s1 + $0x2a0] sm:$0xff]
      %v386 = vld [vmem:[%s1 + $0x2a8] sm:$0xff]
      %v387 = vld [vmem:[%s1 + $0x2b0] sm:$0xff]
      %v388 = vld [vmem:[%s1 + $0x2b8] sm:$0xff]
      %v389 = vld [vmem:[%s1 + $0x2c0] sm:$0xff]
      %v390 = vld [vmem:[%s1 + $0x2c8] sm:$0xff]
      %v391 = vld [vmem:[%s1 + $0x2d0] sm:$0xff]
      %v392 = vld [vmem:[%s1 + $0x2d8] sm:$0xff]
      %v393 = vld [vmem:[%s1 + $0x2e0] sm:$0xff]
      %v394 = vld [vmem:[%s1 + $0x2e8] sm:$0xff]
      %v395 = vld [vmem:[%s1 + $0x2f0] sm:$0xff]
      %v396 = vld [vmem:[%s1 + $0x2f8] sm:$0xff]
      %v397 = vld [vmem:[%s1 + $0x300] sm:$0xff]
      %v398 = vld [vmem:[%s1 + $0x308] sm:$0xff]
      %v399 = vld [vmem:[%s1 + $0x310] sm:$0xff]
      %v400 = vld [vmem:[%s1 + $0x318] sm:$0xff]
      %v401 = vld [vmem:[%s1 + $0x320] sm:$0xff]
      %v402 = vld [vmem:[%s1 + $0x328] sm:$0xff]
      %v403 = vld [vmem:[%s1 + $0x330] sm:$0xff]
      %v404 = vld [vmem:[%s1 + $0x338] sm:$0xff]
      %v405 = vld [vmem:[%s1 + $0x340] sm:$0xff]
      %v406 = vld [vmem:[%s1 + $0x348] sm:$0xff]
      %v407 = vld [vmem:[%s1 + $0x350] sm:$0xff]
      %v408 = vld [vmem:[%s1 + $0x358] sm:$0xff]
      %v409 = vld [vmem:[%s1 + $0x360] sm:$0xff]
      %v410 = vld [vmem:[%s1 + $0x368] sm:$0xff]
      %v411 = vld [vmem:[%s1 + $0x370] sm:$0xff]
      %v412 = vld [vmem:[%s1 + $0x378] sm:$0xff]
      %v413 = vld [vmem:[%s1 + $0x380] sm:$0xff]
      %v414 = vld [vmem:[%s1 + $0x388] sm:$0xff]
      %v415 = vld [vmem:[%s1 + $0x390] sm:$0xff]
      %v416 = vld [vmem:[%s1 + $0x398] sm:$0xff]
      %v417 = vld [vmem:[%s1 + $0x3a0] sm:$0xff]
      %v418 = vld [vmem:[%s1 + $0x3a8] sm:$0xff]
      %v419 = vld [vmem:[%s1 + $0x3b0] sm:$0xff]
      %v420 = vld [vmem:[%s1 + $0x3b8] sm:$0xff]
      %v421 = vld [vmem:[%s1 + $0x3c0] sm:$0xff]
      %v422 = vld [vmem:[%s1 + $0x3c8] sm:$0xff]
      %v423 = vld [vmem:[%s1 + $0x3d0] sm:$0xff]
      %v424 = vld [vmem:[%s1 + $0x3d8] sm:$0xff]
      %v425 = vld [vmem:[%s1 + $0x3e0] sm:$0xff]
      %v426 = vld [vmem:[%s1 + $0x3e8] sm:$0xff]
      %v427 = vld [vmem:[%s1 + $0x3f0] sm:$0xff]
      %v428 = vld [vmem:[%s1 + $0x3f8] sm:$0xff]
      %v429 = vld [vmem:[%s1 + $0x400] sm:$0xff]
      %v430 = vld [vmem:[%s1 + $0x408] sm:$0xff]
      %v431 = vld [vmem:[%s1 + $0x410] sm:$0xff]
      %v432 = vld [vmem:[%s1 + $0x418] sm:$0xff]
      %v433 = vld [vmem:[%s1 + $0x420] sm:$0xff]
      %v434 = vld [vmem:[%s1 + $0x428] sm:$0xff]
      %v435 = vld [vmem:[%s1 + $0x430] sm:$0xff]
      %v436 = vld [vmem:[%s1 + $0x438] sm:$0xff]
      %v437 = vld [vmem:[%s1 + $0x440] sm:$0xff]
      %v438 = vld [vmem:[%s1 + $0x448] sm:$0xff]
      %v439 = vld [vmem:[%s1 + $0x450] sm:$0xff]
      %v440 = vld [vmem:[%s1 + $0x458] sm:$0xff]
      %v441 = vld [vmem:[%s1 + $0x460] sm:$0xff]
      %v442 = vld [vmem:[%s1 + $0x468] sm:$0xff]
      %v443 = vld [vmem:[%s1 + $0x470] sm:$0xff]
      %v444 = vld [vmem:[%s1 + $0x478] sm:$0xff]
      %v445 = vld [vmem:[%s1 + $0x480] sm:$0xff]
      %v446 = vld [vmem:[%s1 + $0x488] sm:$0xff]
      %v447 = vld [vmem:[%s1 + $0x490] sm:$0xff]
      %v448 = vld [vmem:[%s1 + $0x498] sm:$0xff]
      %v449 = vld [vmem:[%s1 + $0x4a0] sm:$0xff]
      %v450 = vld [vmem:[%s1 + $0x4a8] sm:$0xff]
      %v451 = vld [vmem:[%s1 + $0x4b0] sm:$0xff]
      %v452 = vld [vmem:[%s1 + $0x4b8] sm:$0xff]
      %v453 = vld [vmem:[%s1 + $0x4c0] sm:$0xff]
      %v454 = vld [vmem:[%s1 + $0x4c8] sm:$0xff]
      %v455 = vld [vmem:[%s1 + $0x4d0] sm:$0xff]
      %v456 = vld [vmem:[%s1 + $0x4d8] sm:$0xff]
      %v457 = vld [vmem:[%s1 + $0x4e0] sm:$0xff]
      %v458 = vld [vmem:[%s1 + $0x4e8] sm:$0xff]
      %v459 = vld [vmem:[%s1 + $0x4f0] sm:$0xff]
      %v460 = vld [vmem:[%s1 + $0x4f8] sm:$0xff]
      %v461 = vld [vmem:[%s1 + $0x500] sm:$0xff]
      %v462 = vld [vmem:[%s1 + $0x508] sm:$0xff]
      %v463 = vld [vmem:[%s1 + $0x510] sm:$0xff]
      %v464 = vld [vmem:[%s1 + $0x518] sm:$0xff]
      %v465 = vld [vmem:[%s1 + $0x520] sm:$0xff]
      %v466 = vld [vmem:[%s1 + $0x528] sm:$0xff]
      %v467 = vld [vmem:[%s1 + $0x530] sm:$0xff]
      %v468 = vld [vmem:[%s1 + $0x538] sm:$0xff]
      %v469 = vld [vmem:[%s1 + $0x540] sm:$0xff]
      %v470 = vld [vmem:[%s1 + $0x548] sm:$0xff]
      %v471 = vld [vmem:[%s1 + $0x550] sm:$0xff]
      %v472 = vld [vmem:[%s1 + $0x558] sm:$0xff]
      %v473 = vld [vmem:[%s1 + $0x560] sm:$0xff]
      %v474 = vld [vmem:[%s1 + $0x568] sm:$0xff]
      %v475 = vld [vmem:[%s1 + $0x570] sm:$0xff]
      %v476 = vld [vmem:[%s1 + $0x578] sm:$0xff]
      %v477 = vld [vmem:[%s1 + $0x580] sm:$0xff]
      %v478 = vld [vmem:[%s1 + $0x588] sm:$0xff]
      %v479 = vld [vmem:[%s1 + $0x590] sm:$0xff]
      %v480 = vld [vmem:[%s1 + $0x598] sm:$0xff]
      %v481 = vld [vmem:[%s1 + $0x5a0] sm:$0xff]
      %v482 = vld [vmem:[%s1 + $0x5a8] sm:$0xff]
      %v483 = vld [vmem:[%s1 + $0x5b0] sm:$0xff]
      %v484 = vld [vmem:[%s1 + $0x5b8] sm:$0xff]
      %v485 = vld [vmem:[%s1 + $0x5c0] sm:$0xff]
      %v486 = vld [vmem:[%s1 + $0x5c8] sm:$0xff]
      %v487 = vld [vmem:[%s1 + $0x5d0] sm:$0xff]
      %v488 = vld [vmem:[%s1 + $0x5d8] sm:$0xff]
      %v489 = vld [vmem:[%s1 + $0x5e0] sm:$0xff]
      %v490 = vld [vmem:[%s1 + $0x5e8] sm:$0xff]
      %v491 = vld [vmem:[%s1 + $0x5f0] sm:$0xff]
      %v492 = vld [vmem:[%s1 + $0x5f8] sm:$0xff]
      %v493 = vld [vmem:[%s1 + $0x600] sm:$0xff]
      %v494 = vld [vmem:[%s1 + $0x608] sm:$0xff]
      %v495 = vld [vmem:[%s1 + $0x610] sm:$0xff]
      %v496 = vld [vmem:[%s1 + $0x618] sm:$0xff]
      %v497 = vld [vmem:[%s1 + $0x620] sm:$0xff]
      %v498 = vld [vmem:[%s1 + $0x628] sm:$0xff]
      %v499 = vld [vmem:[%s1 + $0x630] sm:$0xff]
      %v500 = vld [vmem:[%s1 + $0x638] sm:$0xff]
      %v501 = vld [vmem:[%s1 + $0x640] sm:$0xff]
      %v502 = vld [vmem:[%s1 + $0x648] sm:$0xff]
      %v503 = vld [vmem:[%s1 + $0x650] sm:$0xff]
      %v504 = vld [vmem:[%s1 + $0x658] sm:$0xff]
      %v505 = vld [vmem:[%s1 + $0x660] sm:$0xff]
      %v506 = vld [vmem:[%s1 + $0x668] sm:$0xff]
      %v507 = vld [vmem:[%s1 + $0x670] sm:$0xff]
      %v508 = vld [vmem:[%s1 + $0x678] sm:$0xff]
      %v509 = vld [vmem:[%s1 + $0x680] sm:$0xff]
      %v510 = vld [vmem:[%s1 + $0x688] sm:$0xff]
      %v511 = vld [vmem:[%s1 + $0x690] sm:$0xff]
      %v512 = vld [vmem:[%s1 + $0x698] sm:$0xff]
      %v513 = vld [vmem:[%s1 + $0x6a0] sm:$0xff]
      %v514 = vld [vmem:[%s1 + $0x6a8] sm:$0xff]
      %v515 = vld [vmem:[%s1 + $0x6b0] sm:$0xff]
      %v516 = vld [vmem:[%s1 + $0x6b8] sm:$0xff]
      %v517 = vld [vmem:[%s1 + $0x6c0] sm:$0xff]
      %v518 = vld [vmem:[%s1 + $0x6c8] sm:$0xff]
      %v519 = vld [vmem:[%s1 + $0x6d0] sm:$0xff]
      %v520 = vld [vmem:[%s1 + $0x6d8] sm:$0xff]
      %v521 = vld [vmem:[%s1 + $0x6e0] sm:$0xff]
      %v522 = vld [vmem:[%s1 + $0x6e8] sm:$0xff]
      %v523 = vld [vmem:[%s1 + $0x6f0] sm:$0xff]
      %v524 = vld [vmem:[%s1 + $0x6f8] sm:$0xff]
      %v525 = vld [vmem:[%s1 + $0x700] sm:$0xff]
      %v526 = vld [vmem:[%s1 + $0x708] sm:$0xff]
      %v527 = vld [vmem:[%s1 + $0x710] sm:$0xff]
      %v528 = vld [vmem:[%s1 + $0x718] sm:$0xff]
      %v529 = vld [vmem:[%s1 + $0x720] sm:$0xff]
      %v530 = vld [vmem:[%s1 + $0x728] sm:$0xff]
      %v531 = vld [vmem:[%s1 + $0x730] sm:$0xff]
      %v532 = vld [vmem:[%s1 + $0x738] sm:$0xff]
      %v533 = vld [vmem:[%s1 + $0x740] sm:$0xff]
      %v534 = vld [vmem:[%s1 + $0x748] sm:$0xff]
      %v535 = vld [vmem:[%s1 + $0x750] sm:$0xff]
      %v536 = vld [vmem:[%s1 + $0x758] sm:$0xff]
      %v537 = vld [vmem:[%s1 + $0x760] sm:$0xff]
      %v538 = vld [vmem:[%s1 + $0x768] sm:$0xff]
      %v539 = vld [vmem:[%s1 + $0x770] sm:$0xff]
      %v540 = vld [vmem:[%s1 + $0x778] sm:$0xff]
      %v541 = vld [vmem:[%s1 + $0x780] sm:$0xff]
      %v542 = vld [vmem:[%s1 + $0x788] sm:$0xff]
      %v543 = vld [vmem:[%s1 + $0x790] sm:$0xff]
      %v544 = vld [vmem:[%s1 + $0x798] sm:$0xff]
      %v545 = vld [vmem:[%s1 + $0x7a0] sm:$0xff]
      %v546 = vld [vmem:[%s1 + $0x7a8] sm:$0xff]
      %v547 = vld [vmem:[%s1 + $0x7b0] sm:$0xff]
      %v548 = vld [vmem:[%s1 + $0x7b8] sm:$0xff]
      %v549 = vld [vmem:[%s1 + $0x7c0] sm:$0xff]
      %v550 = vld [vmem:[%s1 + $0x7c8] sm:$0xff]
      %v551 = vld [vmem:[%s1 + $0x7d0] sm:$0xff]
      %v552 = vld [vmem:[%s1 + $0x7d8] sm:$0xff]
      %v553 = vld [vmem:[%s1 + $0x7e0] sm:$0xff]
      %v554 = vld [vmem:[%s1 + $0x7e8] sm:$0xff]
      %v555 = vld [vmem:[%s1 + $0x7f0] sm:$0xff]
      %v556 = vld [vmem:[%s1 + $0x7f8] sm:$0xff]
      %v557 = vld [vmem:[%s2] sm:$0x3]
      %v559 = vperm.slane %v557, 0
      %v560 = vperm.slane %v557, 1
      %564 = vst [vmem:[#allocation1] ss:$9 sm:$0xff] %v299
      %v565 = vld [vmem:[#allocation1] sm:$0xff]
      %v566 = vld [vmem:[#allocation1 + $0x9] sm:$0xff]
      %v567 = vld [vmem:[#allocation1 + $0x12] sm:$0xff]
      %v568 = vld [vmem:[#allocation1 + $0x1b] sm:$0xff]
      %v569 = vld [vmem:[#allocation1 + $0x24] sm:$0xff]
      %v570 = vld [vmem:[#allocation1 + $0x2d] sm:$0xff]
      %v571 = vld [vmem:[#allocation1 + $0x36] sm:$0xff]
      %v572 = vld [vmem:[#allocation1 + $0x3f] sm:$0xff]
      %574 = vst [vmem:[#allocation1] ss:$9 sm:$0xff] %v300
      %v575 = vld [vmem:[#allocation1] sm:$0xff]
      %v576 = vld [vmem:[#allocation1 + $0x9] sm:$0xff]
      %v577 = vld [vmem:[#allocation1 + $0x12] sm:$0xff]
      %v578 = vld [vmem:[#allocation1 + $0x1b] sm:$0xff]
      %v579 = vld [vmem:[#allocation1 + $0x24] sm:$0xff]
      %v580 = vld [vmem:[#allocation1 + $0x2d] sm:$0xff]
      %v581 = vld [vmem:[#allocation1 + $0x36] sm:$0xff]
      %v582 = vld [vmem:[#allocation1 + $0x3f] sm:$0xff]
      %v855 = vunpack.c.l.b16 %v301
      %v856 = vunpack.c.h.b16 %v301
      %v857 = vunpack.c.l.b16 %v302
      %v858 = vunpack.c.h.b16 %v302
      %v859 = vunpack.c.l.b16 %v303
      %v860 = vunpack.c.h.b16 %v303
      %v861 = vunpack.c.l.b16 %v304
      %v862 = vunpack.c.h.b16 %v304
      %v863 = vunpack.c.l.b16 %v305
      %v864 = vunpack.c.h.b16 %v305
      %v865 = vunpack.c.l.b16 %v306
      %v866 = vunpack.c.h.b16 %v306
      %v867 = vunpack.c.l.b16 %v307
      %v868 = vunpack.c.h.b16 %v307
      %v869 = vunpack.c.l.b16 %v308
      %v870 = vunpack.c.h.b16 %v308
      %v871 = vunpack.c.l.b16 %v309
      %v872 = vunpack.c.h.b16 %v309
      %v873 = vunpack.c.l.b16 %v310
      %v874 = vunpack.c.h.b16 %v310
      %v875 = vunpack.c.l.b16 %v311
      %v876 = vunpack.c.h.b16 %v311
      %v877 = vunpack.c.l.b16 %v312
      %v878 = vunpack.c.h.b16 %v312
      %v879 = vunpack.c.l.b16 %v313
      %v880 = vunpack.c.h.b16 %v313
      %v881 = vunpack.c.l.b16 %v314
      %v882 = vunpack.c.h.b16 %v314
      %v883 = vunpack.c.l.b16 %v315
      %v884 = vunpack.c.h.b16 %v315
      %v885 = vunpack.c.l.b16 %v316
      %v886 = vunpack.c.h.b16 %v316
      %v887 = vunpack.c.l.b16 %v317
      %v888 = vunpack.c.h.b16 %v317
      %v889 = vunpack.c.l.b16 %v318
      %v890 = vunpack.c.h.b16 %v318
      %v891 = vunpack.c.l.b16 %v319
      %v892 = vunpack.c.h.b16 %v319
      %v893 = vunpack.c.l.b16 %v320
      %v894 = vunpack.c.h.b16 %v320
      %v895 = vunpack.c.l.b16 %v321
      %v896 = vunpack.c.h.b16 %v321
      %v897 = vunpack.c.l.b16 %v322
      %v898 = vunpack.c.h.b16 %v322
      %v899 = vunpack.c.l.b16 %v323
      %v900 = vunpack.c.h.b16 %v323
      %v901 = vunpack.c.l.b16 %v324
      %v902 = vunpack.c.h.b16 %v324
      %v903 = vunpack.c.l.b16 %v325
      %v904 = vunpack.c.h.b16 %v325
      %v905 = vunpack.c.l.b16 %v326
      %v906 = vunpack.c.h.b16 %v326
      %v907 = vunpack.c.l.b16 %v327
      %v908 = vunpack.c.h.b16 %v327
      %v909 = vunpack.c.l.b16 %v328
      %v910 = vunpack.c.h.b16 %v328
      %v911 = vunpack.c.l.b16 %v329
      %v912 = vunpack.c.h.b16 %v329
      %v913 = vunpack.c.l.b16 %v330
      %v914 = vunpack.c.h.b16 %v330
      %v915 = vunpack.c.l.b16 %v331
      %v916 = vunpack.c.h.b16 %v331
      %v917 = vunpack.c.l.b16 %v332
      %v918 = vunpack.c.h.b16 %v332
      %v919 = vunpack.c.l.b16 %v333
      %v920 = vunpack.c.h.b16 %v333
      %v921 = vunpack.c.l.b16 %v334
      %v922 = vunpack.c.h.b16 %v334
      %v923 = vunpack.c.l.b16 %v335
      %v924 = vunpack.c.h.b16 %v335
      %v925 = vunpack.c.l.b16 %v336
      %v926 = vunpack.c.h.b16 %v336
      %v927 = vunpack.c.l.b16 %v337
      %v928 = vunpack.c.h.b16 %v337
      %v929 = vunpack.c.l.b16 %v338
      %v930 = vunpack.c.h.b16 %v338
      %v931 = vunpack.c.l.b16 %v339
      %v932 = vunpack.c.h.b16 %v339
      %v933 = vunpack.c.l.b16 %v340
      %v934 = vunpack.c.h.b16 %v340
      %v935 = vunpack.c.l.b16 %v341
      %v936 = vunpack.c.h.b16 %v341
      %v937 = vunpack.c.l.b16 %v342
      %v938 = vunpack.c.h.b16 %v342
      %v939 = vunpack.c.l.b16 %v343
      %v940 = vunpack.c.h.b16 %v343
      %v941 = vunpack.c.l.b16 %v344
      %v942 = vunpack.c.h.b16 %v344
      %v943 = vunpack.c.l.b16 %v345
      %v944 = vunpack.c.h.b16 %v345
      %v945 = vunpack.c.l.b16 %v346
      %v946 = vunpack.c.h.b16 %v346
      %v947 = vunpack.c.l.b16 %v347
      %v948 = vunpack.c.h.b16 %v347
      %v949 = vunpack.c.l.b16 %v348
      %v950 = vunpack.c.h.b16 %v348
      %v951 = vunpack.c.l.b16 %v349
      %v952 = vunpack.c.h.b16 %v349
      %v953 = vunpack.c.l.b16 %v350
      %v954 = vunpack.c.h.b16 %v350
      %v955 = vunpack.c.l.b16 %v351
      %v956 = vunpack.c.h.b16 %v351
      %v957 = vunpack.c.l.b16 %v352
      %v958 = vunpack.c.h.b16 %v352
      %v959 = vunpack.c.l.b16 %v353
      %v960 = vunpack.c.h.b16 %v353
      %v961 = vunpack.c.l.b16 %v354
      %v962 = vunpack.c.h.b16 %v354
      %v963 = vunpack.c.l.b16 %v355
      %v964 = vunpack.c.h.b16 %v355
      %v965 = vunpack.c.l.b16 %v356
      %v966 = vunpack.c.h.b16 %v356
      %v967 = vunpack.c.l.b16 %v357
      %v968 = vunpack.c.h.b16 %v357
      %v969 = vunpack.c.l.b16 %v358
      %v970 = vunpack.c.h.b16 %v358
      %v971 = vunpack.c.l.b16 %v359
      %v972 = vunpack.c.h.b16 %v359
      %v973 = vunpack.c.l.b16 %v360
      %v974 = vunpack.c.h.b16 %v360
      %v975 = vunpack.c.l.b16 %v361
      %v976 = vunpack.c.h.b16 %v361
      %v977 = vunpack.c.l.b16 %v362
      %v978 = vunpack.c.h.b16 %v362
      %v979 = vunpack.c.l.b16 %v363
      %v980 = vunpack.c.h.b16 %v363
      %v981 = vunpack.c.l.b16 %v364
      %v982 = vunpack.c.h.b16 %v364
      %v983 = vunpack.c.l.b16 %v365
      %v984 = vunpack.c.h.b16 %v365
      %v985 = vunpack.c.l.b16 %v366
      %v986 = vunpack.c.h.b16 %v366
      %v987 = vunpack.c.l.b16 %v367
      %v988 = vunpack.c.h.b16 %v367
      %v989 = vunpack.c.l.b16 %v368
      %v990 = vunpack.c.h.b16 %v368
      %v991 = vunpack.c.l.b16 %v369
      %v992 = vunpack.c.h.b16 %v369
      %v993 = vunpack.c.l.b16 %v370
      %v994 = vunpack.c.h.b16 %v370
      %v995 = vunpack.c.l.b16 %v371
      %v996 = vunpack.c.h.b16 %v371
      %v997 = vunpack.c.l.b16 %v372
      %v998 = vunpack.c.h.b16 %v372
      %v999 = vunpack.c.l.b16 %v373
      %v1000 = vunpack.c.h.b16 %v373
      %v1001 = vunpack.c.l.b16 %v374
      %v1002 = vunpack.c.h.b16 %v374
      %v1003 = vunpack.c.l.b16 %v375
      %v1004 = vunpack.c.h.b16 %v375
      %v1005 = vunpack.c.l.b16 %v376
      %v1006 = vunpack.c.h.b16 %v376
      %v1007 = vunpack.c.l.b16 %v377
      %v1008 = vunpack.c.h.b16 %v377
      %v1009 = vunpack.c.l.b16 %v378
      %v1010 = vunpack.c.h.b16 %v378
      %v1011 = vunpack.c.l.b16 %v379
      %v1012 = vunpack.c.h.b16 %v379
      %v1013 = vunpack.c.l.b16 %v380
      %v1014 = vunpack.c.h.b16 %v380
      %v1015 = vunpack.c.l.b16 %v381
      %v1016 = vunpack.c.h.b16 %v381
      %v1017 = vunpack.c.l.b16 %v382
      %v1018 = vunpack.c.h.b16 %v382
      %v1019 = vunpack.c.l.b16 %v383
      %v1020 = vunpack.c.h.b16 %v383
      %v1021 = vunpack.c.l.b16 %v384
      %v1022 = vunpack.c.h.b16 %v384
      %v1023 = vunpack.c.l.b16 %v385
      %v1024 = vunpack.c.h.b16 %v385
      %v1025 = vunpack.c.l.b16 %v386
      %v1026 = vunpack.c.h.b16 %v386
      %v1027 = vunpack.c.l.b16 %v387
      %v1028 = vunpack.c.h.b16 %v387
      %v1029 = vunpack.c.l.b16 %v388
      %v1030 = vunpack.c.h.b16 %v388
      %v1031 = vunpack.c.l.b16 %v389
      %v1032 = vunpack.c.h.b16 %v389
      %v1033 = vunpack.c.l.b16 %v390
      %v1034 = vunpack.c.h.b16 %v390
      %v1035 = vunpack.c.l.b16 %v391
      %v1036 = vunpack.c.h.b16 %v391
      %v1037 = vunpack.c.l.b16 %v392
      %v1038 = vunpack.c.h.b16 %v392
      %v1039 = vunpack.c.l.b16 %v393
      %v1040 = vunpack.c.h.b16 %v393
      %v1041 = vunpack.c.l.b16 %v394
      %v1042 = vunpack.c.h.b16 %v394
      %v1043 = vunpack.c.l.b16 %v395
      %v1044 = vunpack.c.h.b16 %v395
      %v1045 = vunpack.c.l.b16 %v396
      %v1046 = vunpack.c.h.b16 %v396
      %v1047 = vunpack.c.l.b16 %v397
      %v1048 = vunpack.c.h.b16 %v397
      %v1049 = vunpack.c.l.b16 %v398
      %v1050 = vunpack.c.h.b16 %v398
      %v1051 = vunpack.c.l.b16 %v399
      %v1052 = vunpack.c.h.b16 %v399
      %v1053 = vunpack.c.l.b16 %v400
      %v1054 = vunpack.c.h.b16 %v400
      %v1055 = vunpack.c.l.b16 %v401
      %v1056 = vunpack.c.h.b16 %v401
      %v1057 = vunpack.c.l.b16 %v402
      %v1058 = vunpack.c.h.b16 %v402
      %v1059 = vunpack.c.l.b16 %v403
      %v1060 = vunpack.c.h.b16 %v403
      %v1061 = vunpack.c.l.b16 %v404
      %v1062 = vunpack.c.h.b16 %v404
      %v1063 = vunpack.c.l.b16 %v405
      %v1064 = vunpack.c.h.b16 %v405
      %v1065 = vunpack.c.l.b16 %v406
      %v1066 = vunpack.c.h.b16 %v406
      %v1067 = vunpack.c.l.b16 %v407
      %v1068 = vunpack.c.h.b16 %v407
      %v1069 = vunpack.c.l.b16 %v408
      %v1070 = vunpack.c.h.b16 %v408
      %v1071 = vunpack.c.l.b16 %v409
      %v1072 = vunpack.c.h.b16 %v409
      %v1073 = vunpack.c.l.b16 %v410
      %v1074 = vunpack.c.h.b16 %v410
      %v1075 = vunpack.c.l.b16 %v411
      %v1076 = vunpack.c.h.b16 %v411
      %v1077 = vunpack.c.l.b16 %v412
      %v1078 = vunpack.c.h.b16 %v412
      %v1079 = vunpack.c.l.b16 %v413
      %v1080 = vunpack.c.h.b16 %v413
      %v1081 = vunpack.c.l.b16 %v414
      %v1082 = vunpack.c.h.b16 %v414
      %v1083 = vunpack.c.l.b16 %v415
      %v1084 = vunpack.c.h.b16 %v415
      %v1085 = vunpack.c.l.b16 %v416
      %v1086 = vunpack.c.h.b16 %v416
      %v1087 = vunpack.c.l.b16 %v417
      %v1088 = vunpack.c.h.b16 %v417
      %v1089 = vunpack.c.l.b16 %v418
      %v1090 = vunpack.c.h.b16 %v418
      %v1091 = vunpack.c.l.b16 %v419
      %v1092 = vunpack.c.h.b16 %v419
      %v1093 = vunpack.c.l.b16 %v420
      %v1094 = vunpack.c.h.b16 %v420
      %v1095 = vunpack.c.l.b16 %v421
      %v1096 = vunpack.c.h.b16 %v421
      %v1097 = vunpack.c.l.b16 %v422
      %v1098 = vunpack.c.h.b16 %v422
      %v1099 = vunpack.c.l.b16 %v423
      %v1100 = vunpack.c.h.b16 %v423
      %v1101 = vunpack.c.l.b16 %v424
      %v1102 = vunpack.c.h.b16 %v424
      %v1103 = vunpack.c.l.b16 %v425
      %v1104 = vunpack.c.h.b16 %v425
      %v1105 = vunpack.c.l.b16 %v426
      %v1106 = vunpack.c.h.b16 %v426
      %v1107 = vunpack.c.l.b16 %v427
      %v1108 = vunpack.c.h.b16 %v427
      %v1109 = vunpack.c.l.b16 %v428
      %v1110 = vunpack.c.h.b16 %v428
      %v1111 = vunpack.c.l.b16 %v429
      %v1112 = vunpack.c.h.b16 %v429
      %v1113 = vunpack.c.l.b16 %v430
      %v1114 = vunpack.c.h.b16 %v430
      %v1115 = vunpack.c.l.b16 %v431
      %v1116 = vunpack.c.h.b16 %v431
      %v1117 = vunpack.c.l.b16 %v432
      %v1118 = vunpack.c.h.b16 %v432
      %v1119 = vunpack.c.l.b16 %v433
      %v1120 = vunpack.c.h.b16 %v433
      %v1121 = vunpack.c.l.b16 %v434
      %v1122 = vunpack.c.h.b16 %v434
      %v1123 = vunpack.c.l.b16 %v435
      %v1124 = vunpack.c.h.b16 %v435
      %v1125 = vunpack.c.l.b16 %v436
      %v1126 = vunpack.c.h.b16 %v436
      %v1127 = vunpack.c.l.b16 %v437
      %v1128 = vunpack.c.h.b16 %v437
      %v1129 = vunpack.c.l.b16 %v438
      %v1130 = vunpack.c.h.b16 %v438
      %v1131 = vunpack.c.l.b16 %v439
      %v1132 = vunpack.c.h.b16 %v439
      %v1133 = vunpack.c.l.b16 %v440
      %v1134 = vunpack.c.h.b16 %v440
      %v1135 = vunpack.c.l.b16 %v441
      %v1136 = vunpack.c.h.b16 %v441
      %v1137 = vunpack.c.l.b16 %v442
      %v1138 = vunpack.c.h.b16 %v442
      %v1139 = vunpack.c.l.b16 %v443
      %v1140 = vunpack.c.h.b16 %v443
      %v1141 = vunpack.c.l.b16 %v444
      %v1142 = vunpack.c.h.b16 %v444
      %v1143 = vunpack.c.l.b16 %v445
      %v1144 = vunpack.c.h.b16 %v445
      %v1145 = vunpack.c.l.b16 %v446
      %v1146 = vunpack.c.h.b16 %v446
      %v1147 = vunpack.c.l.b16 %v447
      %v1148 = vunpack.c.h.b16 %v447
      %v1149 = vunpack.c.l.b16 %v448
      %v1150 = vunpack.c.h.b16 %v448
      %v1151 = vunpack.c.l.b16 %v449
      %v1152 = vunpack.c.h.b16 %v449
      %v1153 = vunpack.c.l.b16 %v450
      %v1154 = vunpack.c.h.b16 %v450
      %v1155 = vunpack.c.l.b16 %v451
      %v1156 = vunpack.c.h.b16 %v451
      %v1157 = vunpack.c.l.b16 %v452
      %v1158 = vunpack.c.h.b16 %v452
      %v1159 = vunpack.c.l.b16 %v453
      %v1160 = vunpack.c.h.b16 %v453
      %v1161 = vunpack.c.l.b16 %v454
      %v1162 = vunpack.c.h.b16 %v454
      %v1163 = vunpack.c.l.b16 %v455
      %v1164 = vunpack.c.h.b16 %v455
      %v1165 = vunpack.c.l.b16 %v456
      %v1166 = vunpack.c.h.b16 %v456
      %v1167 = vunpack.c.l.b16 %v457
      %v1168 = vunpack.c.h.b16 %v457
      %v1169 = vunpack.c.l.b16 %v458
      %v1170 = vunpack.c.h.b16 %v458
      %v1171 = vunpack.c.l.b16 %v459
      %v1172 = vunpack.c.h.b16 %v459
      %v1173 = vunpack.c.l.b16 %v460
      %v1174 = vunpack.c.h.b16 %v460
      %v1175 = vunpack.c.l.b16 %v461
      %v1176 = vunpack.c.h.b16 %v461
      %v1177 = vunpack.c.l.b16 %v462
      %v1178 = vunpack.c.h.b16 %v462
      %v1179 = vunpack.c.l.b16 %v463
      %v1180 = vunpack.c.h.b16 %v463
      %v1181 = vunpack.c.l.b16 %v464
      %v1182 = vunpack.c.h.b16 %v464
      %v1183 = vunpack.c.l.b16 %v465
      %v1184 = vunpack.c.h.b16 %v465
      %v1185 = vunpack.c.l.b16 %v466
      %v1186 = vunpack.c.h.b16 %v466
      %v1187 = vunpack.c.l.b16 %v467
      %v1188 = vunpack.c.h.b16 %v467
      %v1189 = vunpack.c.l.b16 %v468
      %v1190 = vunpack.c.h.b16 %v468
      %v1191 = vunpack.c.l.b16 %v469
      %v1192 = vunpack.c.h.b16 %v469
      %v1193 = vunpack.c.l.b16 %v470
      %v1194 = vunpack.c.h.b16 %v470
      %v1195 = vunpack.c.l.b16 %v471
      %v1196 = vunpack.c.h.b16 %v471
      %v1197 = vunpack.c.l.b16 %v472
      %v1198 = vunpack.c.h.b16 %v472
      %v1199 = vunpack.c.l.b16 %v473
      %v1200 = vunpack.c.h.b16 %v473
      %v1201 = vunpack.c.l.b16 %v474
      %v1202 = vunpack.c.h.b16 %v474
      %v1203 = vunpack.c.l.b16 %v475
      %v1204 = vunpack.c.h.b16 %v475
      %v1205 = vunpack.c.l.b16 %v476
      %v1206 = vunpack.c.h.b16 %v476
      %v1207 = vunpack.c.l.b16 %v477
      %v1208 = vunpack.c.h.b16 %v477
      %v1209 = vunpack.c.l.b16 %v478
      %v1210 = vunpack.c.h.b16 %v478
      %v1211 = vunpack.c.l.b16 %v479
      %v1212 = vunpack.c.h.b16 %v479
      %v1213 = vunpack.c.l.b16 %v480
      %v1214 = vunpack.c.h.b16 %v480
      %v1215 = vunpack.c.l.b16 %v481
      %v1216 = vunpack.c.h.b16 %v481
      %v1217 = vunpack.c.l.b16 %v482
      %v1218 = vunpack.c.h.b16 %v482
      %v1219 = vunpack.c.l.b16 %v483
      %v1220 = vunpack.c.h.b16 %v483
      %v1221 = vunpack.c.l.b16 %v484
      %v1222 = vunpack.c.h.b16 %v484
      %v1223 = vunpack.c.l.b16 %v485
      %v1224 = vunpack.c.h.b16 %v485
      %v1225 = vunpack.c.l.b16 %v486
      %v1226 = vunpack.c.h.b16 %v486
      %v1227 = vunpack.c.l.b16 %v487
      %v1228 = vunpack.c.h.b16 %v487
      %v1229 = vunpack.c.l.b16 %v488
      %v1230 = vunpack.c.h.b16 %v488
      %v1231 = vunpack.c.l.b16 %v489
      %v1232 = vunpack.c.h.b16 %v489
      %v1233 = vunpack.c.l.b16 %v490
      %v1234 = vunpack.c.h.b16 %v490
      %v1235 = vunpack.c.l.b16 %v491
      %v1236 = vunpack.c.h.b16 %v491
      %v1237 = vunpack.c.l.b16 %v492
      %v1238 = vunpack.c.h.b16 %v492
      %v1239 = vunpack.c.l.b16 %v493
      %v1240 = vunpack.c.h.b16 %v493
      %v1241 = vunpack.c.l.b16 %v494
      %v1242 = vunpack.c.h.b16 %v494
      %v1243 = vunpack.c.l.b16 %v495
      %v1244 = vunpack.c.h.b16 %v495
      %v1245 = vunpack.c.l.b16 %v496
      %v1246 = vunpack.c.h.b16 %v496
      %v1247 = vunpack.c.l.b16 %v497
      %v1248 = vunpack.c.h.b16 %v497
      %v1249 = vunpack.c.l.b16 %v498
      %v1250 = vunpack.c.h.b16 %v498
      %v1251 = vunpack.c.l.b16 %v499
      %v1252 = vunpack.c.h.b16 %v499
      %v1253 = vunpack.c.l.b16 %v500
      %v1254 = vunpack.c.h.b16 %v500
      %v1255 = vunpack.c.l.b16 %v501
      %v1256 = vunpack.c.h.b16 %v501
      %v1257 = vunpack.c.l.b16 %v502
      %v1258 = vunpack.c.h.b16 %v502
      %v1259 = vunpack.c.l.b16 %v503
      %v1260 = vunpack.c.h.b16 %v503
      %v1261 = vunpack.c.l.b16 %v504
      %v1262 = vunpack.c.h.b16 %v504
      %v1263 = vunpack.c.l.b16 %v505
      %v1264 = vunpack.c.h.b16 %v505
      %v1265 = vunpack.c.l.b16 %v506
      %v1266 = vunpack.c.h.b16 %v506
      %v1267 = vunpack.c.l.b16 %v507
      %v1268 = vunpack.c.h.b16 %v507
      %v1269 = vunpack.c.l.b16 %v508
      %v1270 = vunpack.c.h.b16 %v508
      %v1271 = vunpack.c.l.b16 %v509
      %v1272 = vunpack.c.h.b16 %v509
      %v1273 = vunpack.c.l.b16 %v510
      %v1274 = vunpack.c.h.b16 %v510
      %v1275 = vunpack.c.l.b16 %v511
      %v1276 = vunpack.c.h.b16 %v511
      %v1277 = vunpack.c.l.b16 %v512
      %v1278 = vunpack.c.h.b16 %v512
      %v1279 = vunpack.c.l.b16 %v513
      %v1280 = vunpack.c.h.b16 %v513
      %v1281 = vunpack.c.l.b16 %v514
      %v1282 = vunpack.c.h.b16 %v514
      %v1283 = vunpack.c.l.b16 %v515
      %v1284 = vunpack.c.h.b16 %v515
      %v1285 = vunpack.c.l.b16 %v516
      %v1286 = vunpack.c.h.b16 %v516
      %v1287 = vunpack.c.l.b16 %v517
      %v1288 = vunpack.c.h.b16 %v517
      %v1289 = vunpack.c.l.b16 %v518
      %v1290 = vunpack.c.h.b16 %v518
      %v1291 = vunpack.c.l.b16 %v519
      %v1292 = vunpack.c.h.b16 %v519
      %v1293 = vunpack.c.l.b16 %v520
      %v1294 = vunpack.c.h.b16 %v520
      %v1295 = vunpack.c.l.b16 %v521
      %v1296 = vunpack.c.h.b16 %v521
      %v1297 = vunpack.c.l.b16 %v522
      %v1298 = vunpack.c.h.b16 %v522
      %v1299 = vunpack.c.l.b16 %v523
      %v1300 = vunpack.c.h.b16 %v523
      %v1301 = vunpack.c.l.b16 %v524
      %v1302 = vunpack.c.h.b16 %v524
      %v1303 = vunpack.c.l.b16 %v525
      %v1304 = vunpack.c.h.b16 %v525
      %v1305 = vunpack.c.l.b16 %v526
      %v1306 = vunpack.c.h.b16 %v526
      %v1307 = vunpack.c.l.b16 %v527
      %v1308 = vunpack.c.h.b16 %v527
      %v1309 = vunpack.c.l.b16 %v528
      %v1310 = vunpack.c.h.b16 %v528
      %v1311 = vunpack.c.l.b16 %v529
      %v1312 = vunpack.c.h.b16 %v529
      %v1313 = vunpack.c.l.b16 %v530
      %v1314 = vunpack.c.h.b16 %v530
      %v1315 = vunpack.c.l.b16 %v531
      %v1316 = vunpack.c.h.b16 %v531
      %v1317 = vunpack.c.l.b16 %v532
      %v1318 = vunpack.c.h.b16 %v532
      %v1319 = vunpack.c.l.b16 %v533
      %v1320 = vunpack.c.h.b16 %v533
      %v1321 = vunpack.c.l.b16 %v534
      %v1322 = vunpack.c.h.b16 %v534
      %v1323 = vunpack.c.l.b16 %v535
      %v1324 = vunpack.c.h.b16 %v535
      %v1325 = vunpack.c.l.b16 %v536
      %v1326 = vunpack.c.h.b16 %v536
      %v1327 = vunpack.c.l.b16 %v537
      %v1328 = vunpack.c.h.b16 %v537
      %v1329 = vunpack.c.l.b16 %v538
      %v1330 = vunpack.c.h.b16 %v538
      %v1331 = vunpack.c.l.b16 %v539
      %v1332 = vunpack.c.h.b16 %v539
      %v1333 = vunpack.c.l.b16 %v540
      %v1334 = vunpack.c.h.b16 %v540
      %v1335 = vunpack.c.l.b16 %v541
      %v1336 = vunpack.c.h.b16 %v541
      %v1337 = vunpack.c.l.b16 %v542
      %v1338 = vunpack.c.h.b16 %v542
      %v1339 = vunpack.c.l.b16 %v543
      %v1340 = vunpack.c.h.b16 %v543
      %v1341 = vunpack.c.l.b16 %v544
      %v1342 = vunpack.c.h.b16 %v544
      %v1343 = vunpack.c.l.b16 %v545
      %v1344 = vunpack.c.h.b16 %v545
      %v1345 = vunpack.c.l.b16 %v546
      %v1346 = vunpack.c.h.b16 %v546
      %v1347 = vunpack.c.l.b16 %v547
      %v1348 = vunpack.c.h.b16 %v547
      %v1349 = vunpack.c.l.b16 %v548
      %v1350 = vunpack.c.h.b16 %v548
      %v1351 = vunpack.c.l.b16 %v549
      %v1352 = vunpack.c.h.b16 %v549
      %v1353 = vunpack.c.l.b16 %v550
      %v1354 = vunpack.c.h.b16 %v550
      %v1355 = vunpack.c.l.b16 %v551
      %v1356 = vunpack.c.h.b16 %v551
      %v1357 = vunpack.c.l.b16 %v552
      %v1358 = vunpack.c.h.b16 %v552
      %v1359 = vunpack.c.l.b16 %v553
      %v1360 = vunpack.c.h.b16 %v553
      %v1361 = vunpack.c.l.b16 %v554
      %v1362 = vunpack.c.h.b16 %v554
      %v1363 = vunpack.c.l.b16 %v555
      %v1364 = vunpack.c.h.b16 %v555
      %v1365 = vunpack.c.l.b16 %v556
      %v1366 = vunpack.c.h.b16 %v556
      %v1367 = vpack.c.b16 %v857, %v855
      %v1368 = vpack.c.b16 %v858, %v856
      %v1369 = vpack.c.b16 %v861, %v859
      %v1370 = vpack.c.b16 %v862, %v860
      %v1371 = vpack.c.b16 %v865, %v863
      %v1372 = vpack.c.b16 %v866, %v864
      %v1373 = vpack.c.b16 %v869, %v867
      %v1374 = vpack.c.b16 %v870, %v868
      %v1375 = vpack.c.b16 %v873, %v871
      %v1376 = vpack.c.b16 %v874, %v872
      %v1377 = vpack.c.b16 %v877, %v875
      %v1378 = vpack.c.b16 %v878, %v876
      %v1379 = vpack.c.b16 %v881, %v879
      %v1380 = vpack.c.b16 %v882, %v880
      %v1381 = vpack.c.b16 %v885, %v883
      %v1382 = vpack.c.b16 %v886, %v884
      %v1383 = vpack.c.b16 %v889, %v887
      %v1384 = vpack.c.b16 %v890, %v888
      %v1385 = vpack.c.b16 %v893, %v891
      %v1386 = vpack.c.b16 %v894, %v892
      %v1387 = vpack.c.b16 %v897, %v895
      %v1388 = vpack.c.b16 %v898, %v896
      %v1389 = vpack.c.b16 %v901, %v899
      %v1390 = vpack.c.b16 %v902, %v900
      %v1391 = vpack.c.b16 %v905, %v903
      %v1392 = vpack.c.b16 %v906, %v904
      %v1393 = vpack.c.b16 %v909, %v907
      %v1394 = vpack.c.b16 %v910, %v908
      %v1395 = vpack.c.b16 %v913, %v911
      %v1396 = vpack.c.b16 %v914, %v912
      %v1397 = vpack.c.b16 %v917, %v915
      %v1398 = vpack.c.b16 %v918, %v916
      %v1399 = vpack.c.b16 %v921, %v919
      %v1400 = vpack.c.b16 %v922, %v920
      %v1401 = vpack.c.b16 %v925, %v923
      %v1402 = vpack.c.b16 %v926, %v924
      %v1403 = vpack.c.b16 %v929, %v927
      %v1404 = vpack.c.b16 %v930, %v928
      %v1405 = vpack.c.b16 %v933, %v931
      %v1406 = vpack.c.b16 %v934, %v932
      %v1407 = vpack.c.b16 %v937, %v935
      %v1408 = vpack.c.b16 %v938, %v936
      %v1409 = vpack.c.b16 %v941, %v939
      %v1410 = vpack.c.b16 %v942, %v940
      %v1411 = vpack.c.b16 %v945, %v943
      %v1412 = vpack.c.b16 %v946, %v944
      %v1413 = vpack.c.b16 %v949, %v947
      %v1414 = vpack.c.b16 %v950, %v948
      %v1415 = vpack.c.b16 %v953, %v951
      %v1416 = vpack.c.b16 %v954, %v952
      %v1417 = vpack.c.b16 %v957, %v955
      %v1418 = vpack.c.b16 %v958, %v956
      %v1419 = vpack.c.b16 %v961, %v959
      %v1420 = vpack.c.b16 %v962, %v960
      %v1421 = vpack.c.b16 %v965, %v963
      %v1422 = vpack.c.b16 %v966, %v964
      %v1423 = vpack.c.b16 %v969, %v967
      %v1424 = vpack.c.b16 %v970, %v968
      %v1425 = vpack.c.b16 %v973, %v971
      %v1426 = vpack.c.b16 %v974, %v972
      %v1427 = vpack.c.b16 %v977, %v975
      %v1428 = vpack.c.b16 %v978, %v976
      %v1429 = vpack.c.b16 %v981, %v979
      %v1430 = vpack.c.b16 %v982, %v980
      %v1431 = vpack.c.b16 %v985, %v983
      %v1432 = vpack.c.b16 %v986, %v984
      %v1433 = vpack.c.b16 %v989, %v987
      %v1434 = vpack.c.b16 %v990, %v988
      %v1435 = vpack.c.b16 %v993, %v991
      %v1436 = vpack.c.b16 %v994, %v992
      %v1437 = vpack.c.b16 %v997, %v995
      %v1438 = vpack.c.b16 %v998, %v996
      %v1439 = vpack.c.b16 %v1001, %v999
      %v1440 = vpack.c.b16 %v1002, %v1000
      %v1441 = vpack.c.b16 %v1005, %v1003
      %v1442 = vpack.c.b16 %v1006, %v1004
      %v1443 = vpack.c.b16 %v1009, %v1007
      %v1444 = vpack.c.b16 %v1010, %v1008
      %v1445 = vpack.c.b16 %v1013, %v1011
      %v1446 = vpack.c.b16 %v1014, %v1012
      %v1447 = vpack.c.b16 %v1017, %v1015
      %v1448 = vpack.c.b16 %v1018, %v1016
      %v1449 = vpack.c.b16 %v1021, %v1019
      %v1450 = vpack.c.b16 %v1022, %v1020
      %v1451 = vpack.c.b16 %v1025, %v1023
      %v1452 = vpack.c.b16 %v1026, %v1024
      %v1453 = vpack.c.b16 %v1029, %v1027
      %v1454 = vpack.c.b16 %v1030, %v1028
      %v1455 = vpack.c.b16 %v1033, %v1031
      %v1456 = vpack.c.b16 %v1034, %v1032
      %v1457 = vpack.c.b16 %v1037, %v1035
      %v1458 = vpack.c.b16 %v1038, %v1036
      %v1459 = vpack.c.b16 %v1041, %v1039
      %v1460 = vpack.c.b16 %v1042, %v1040
      %v1461 = vpack.c.b16 %v1045, %v1043
      %v1462 = vpack.c.b16 %v1046, %v1044
      %v1463 = vpack.c.b16 %v1049, %v1047
      %v1464 = vpack.c.b16 %v1050, %v1048
      %v1465 = vpack.c.b16 %v1053, %v1051
      %v1466 = vpack.c.b16 %v1054, %v1052
      %v1467 = vpack.c.b16 %v1057, %v1055
      %v1468 = vpack.c.b16 %v1058, %v1056
      %v1469 = vpack.c.b16 %v1061, %v1059
      %v1470 = vpack.c.b16 %v1062, %v1060
      %v1471 = vpack.c.b16 %v1065, %v1063
      %v1472 = vpack.c.b16 %v1066, %v1064
      %v1473 = vpack.c.b16 %v1069, %v1067
      %v1474 = vpack.c.b16 %v1070, %v1068
      %v1475 = vpack.c.b16 %v1073, %v1071
      %v1476 = vpack.c.b16 %v1074, %v1072
      %v1477 = vpack.c.b16 %v1077, %v1075
      %v1478 = vpack.c.b16 %v1078, %v1076
      %v1479 = vpack.c.b16 %v1081, %v1079
      %v1480 = vpack.c.b16 %v1082, %v1080
      %v1481 = vpack.c.b16 %v1085, %v1083
      %v1482 = vpack.c.b16 %v1086, %v1084
      %v1483 = vpack.c.b16 %v1089, %v1087
      %v1484 = vpack.c.b16 %v1090, %v1088
      %v1485 = vpack.c.b16 %v1093, %v1091
      %v1486 = vpack.c.b16 %v1094, %v1092
      %v1487 = vpack.c.b16 %v1097, %v1095
      %v1488 = vpack.c.b16 %v1098, %v1096
      %v1489 = vpack.c.b16 %v1101, %v1099
      %v1490 = vpack.c.b16 %v1102, %v1100
      %v1491 = vpack.c.b16 %v1105, %v1103
      %v1492 = vpack.c.b16 %v1106, %v1104
      %v1493 = vpack.c.b16 %v1109, %v1107
      %v1494 = vpack.c.b16 %v1110, %v1108
      %v1495 = vpack.c.b16 %v1113, %v1111
      %v1496 = vpack.c.b16 %v1114, %v1112
      %v1497 = vpack.c.b16 %v1117, %v1115
      %v1498 = vpack.c.b16 %v1118, %v1116
      %v1499 = vpack.c.b16 %v1121, %v1119
      %v1500 = vpack.c.b16 %v1122, %v1120
      %v1501 = vpack.c.b16 %v1125, %v1123
      %v1502 = vpack.c.b16 %v1126, %v1124
      %v1503 = vpack.c.b16 %v1129, %v1127
      %v1504 = vpack.c.b16 %v1130, %v1128
      %v1505 = vpack.c.b16 %v1133, %v1131
      %v1506 = vpack.c.b16 %v1134, %v1132
      %v1507 = vpack.c.b16 %v1137, %v1135
      %v1508 = vpack.c.b16 %v1138, %v1136
      %v1509 = vpack.c.b16 %v1141, %v1139
      %v1510 = vpack.c.b16 %v1142, %v1140
      %v1511 = vpack.c.b16 %v1145, %v1143
      %v1512 = vpack.c.b16 %v1146, %v1144
      %v1513 = vpack.c.b16 %v1149, %v1147
      %v1514 = vpack.c.b16 %v1150, %v1148
      %v1515 = vpack.c.b16 %v1153, %v1151
      %v1516 = vpack.c.b16 %v1154, %v1152
      %v1517 = vpack.c.b16 %v1157, %v1155
      %v1518 = vpack.c.b16 %v1158, %v1156
      %v1519 = vpack.c.b16 %v1161, %v1159
      %v1520 = vpack.c.b16 %v1162, %v1160
      %v1521 = vpack.c.b16 %v1165, %v1163
      %v1522 = vpack.c.b16 %v1166, %v1164
      %v1523 = vpack.c.b16 %v1169, %v1167
      %v1524 = vpack.c.b16 %v1170, %v1168
      %v1525 = vpack.c.b16 %v1173, %v1171
      %v1526 = vpack.c.b16 %v1174, %v1172
      %v1527 = vpack.c.b16 %v1177, %v1175
      %v1528 = vpack.c.b16 %v1178, %v1176
      %v1529 = vpack.c.b16 %v1181, %v1179
      %v1530 = vpack.c.b16 %v1182, %v1180
      %v1531 = vpack.c.b16 %v1185, %v1183
      %v1532 = vpack.c.b16 %v1186, %v1184
      %v1533 = vpack.c.b16 %v1189, %v1187
      %v1534 = vpack.c.b16 %v1190, %v1188
      %v1535 = vpack.c.b16 %v1193, %v1191
      %v1536 = vpack.c.b16 %v1194, %v1192
      %v1537 = vpack.c.b16 %v1197, %v1195
      %v1538 = vpack.c.b16 %v1198, %v1196
      %v1539 = vpack.c.b16 %v1201, %v1199
      %v1540 = vpack.c.b16 %v1202, %v1200
      %v1541 = vpack.c.b16 %v1205, %v1203
      %v1542 = vpack.c.b16 %v1206, %v1204
      %v1543 = vpack.c.b16 %v1209, %v1207
      %v1544 = vpack.c.b16 %v1210, %v1208
      %v1545 = vpack.c.b16 %v1213, %v1211
      %v1546 = vpack.c.b16 %v1214, %v1212
      %v1547 = vpack.c.b16 %v1217, %v1215
      %v1548 = vpack.c.b16 %v1218, %v1216
      %v1549 = vpack.c.b16 %v1221, %v1219
      %v1550 = vpack.c.b16 %v1222, %v1220
      %v1551 = vpack.c.b16 %v1225, %v1223
      %v1552 = vpack.c.b16 %v1226, %v1224
      %v1553 = vpack.c.b16 %v1229, %v1227
      %v1554 = vpack.c.b16 %v1230, %v1228
      %v1555 = vpack.c.b16 %v1233, %v1231
      %v1556 = vpack.c.b16 %v1234, %v1232
      %v1557 = vpack.c.b16 %v1237, %v1235
      %v1558 = vpack.c.b16 %v1238, %v1236
      %v1559 = vpack.c.b16 %v1241, %v1239
      %v1560 = vpack.c.b16 %v1242, %v1240
      %v1561 = vpack.c.b16 %v1245, %v1243
      %v1562 = vpack.c.b16 %v1246, %v1244
      %v1563 = vpack.c.b16 %v1249, %v1247
      %v1564 = vpack.c.b16 %v1250, %v1248
      %v1565 = vpack.c.b16 %v1253, %v1251
      %v1566 = vpack.c.b16 %v1254, %v1252
      %v1567 = vpack.c.b16 %v1257, %v1255
      %v1568 = vpack.c.b16 %v1258, %v1256
      %v1569 = vpack.c.b16 %v1261, %v1259
      %v1570 = vpack.c.b16 %v1262, %v1260
      %v1571 = vpack.c.b16 %v1265, %v1263
      %v1572 = vpack.c.b16 %v1266, %v1264
      %v1573 = vpack.c.b16 %v1269, %v1267
      %v1574 = vpack.c.b16 %v1270, %v1268
      %v1575 = vpack.c.b16 %v1273, %v1271
      %v1576 = vpack.c.b16 %v1274, %v1272
      %v1577 = vpack.c.b16 %v1277, %v1275
      %v1578 = vpack.c.b16 %v1278, %v1276
      %v1579 = vpack.c.b16 %v1281, %v1279
      %v1580 = vpack.c.b16 %v1282, %v1280
      %v1581 = vpack.c.b16 %v1285, %v1283
      %v1582 = vpack.c.b16 %v1286, %v1284
      %v1583 = vpack.c.b16 %v1289, %v1287
      %v1584 = vpack.c.b16 %v1290, %v1288
      %v1585 = vpack.c.b16 %v1293, %v1291
      %v1586 = vpack.c.b16 %v1294, %v1292
      %v1587 = vpack.c.b16 %v1297, %v1295
      %v1588 = vpack.c.b16 %v1298, %v1296
      %v1589 = vpack.c.b16 %v1301, %v1299
      %v1590 = vpack.c.b16 %v1302, %v1300
      %v1591 = vpack.c.b16 %v1305, %v1303
      %v1592 = vpack.c.b16 %v1306, %v1304
      %v1593 = vpack.c.b16 %v1309, %v1307
      %v1594 = vpack.c.b16 %v1310, %v1308
      %v1595 = vpack.c.b16 %v1313, %v1311
      %v1596 = vpack.c.b16 %v1314, %v1312
      %v1597 = vpack.c.b16 %v1317, %v1315
      %v1598 = vpack.c.b16 %v1318, %v1316
      %v1599 = vpack.c.b16 %v1321, %v1319
      %v1600 = vpack.c.b16 %v1322, %v1320
      %v1601 = vpack.c.b16 %v1325, %v1323
      %v1602 = vpack.c.b16 %v1326, %v1324
      %v1603 = vpack.c.b16 %v1329, %v1327
      %v1604 = vpack.c.b16 %v1330, %v1328
      %v1605 = vpack.c.b16 %v1333, %v1331
      %v1606 = vpack.c.b16 %v1334, %v1332
      %v1607 = vpack.c.b16 %v1337, %v1335
      %v1608 = vpack.c.b16 %v1338, %v1336
      %v1609 = vpack.c.b16 %v1341, %v1339
      %v1610 = vpack.c.b16 %v1342, %v1340
      %v1611 = vpack.c.b16 %v1345, %v1343
      %v1612 = vpack.c.b16 %v1346, %v1344
      %v1613 = vpack.c.b16 %v1349, %v1347
      %v1614 = vpack.c.b16 %v1350, %v1348
      %v1615 = vpack.c.b16 %v1353, %v1351
      %v1616 = vpack.c.b16 %v1354, %v1352
      %v1617 = vpack.c.b16 %v1357, %v1355
      %v1618 = vpack.c.b16 %v1358, %v1356
      %v1619 = vpack.c.b16 %v1361, %v1359
      %v1620 = vpack.c.b16 %v1362, %v1360
      %v1621 = vpack.c.b16 %v1365, %v1363
      %v1622 = vpack.c.b16 %v1366, %v1364
      %1879 = vmatpush.bf16.msra.mxu0 %v1381
      %1880 = vmatpush.bf16.msra.mxu0 %v1379
      %1881 = vmatpush.bf16.msra.mxu0 %v1377
      %1882 = vmatpush.bf16.msra.mxu0 %v1375
      %1883 = vmatpush.bf16.msra.mxu0 %v1373
      %1884 = vmatpush.bf16.msra.mxu0 %v1371
      %1885 = vmatpush.bf16.msra.mxu0 %v1369
      %1886 = vmatpush.bf16.msra.mxu0 %v1367
      %1887 = vmatmul.bf16.gmra.mxu0 %v565
      %v1888 = vpop.f32.mrf.mxu0
      %v1889 = vadd.f32 %v559, %v1888
      %v1890 = vpop.f32.mrf.mxu0
      %1891 = vdwg.mxu0
      %1892 = vmatpush.bf16.msra.mxu0 %v1397
      %1893 = vmatpush.bf16.msra.mxu0 %v1395
      %1894 = vmatpush.bf16.msra.mxu0 %v1393
      %1895 = vmatpush.bf16.msra.mxu0 %v1391
      %1896 = vmatpush.bf16.msra.mxu0 %v1389
      %1897 = vmatpush.bf16.msra.mxu0 %v1387
      %1898 = vmatpush.bf16.msra.mxu0 %v1385
      %1899 = vmatpush.bf16.msra.mxu0 %v1383
      %1900 = vmatmul.bf16.gmra.mxu0 %v566
      %v1901 = vpop.f32.mrf.mxu0
      %v1902 = vadd.f32 %v1889, %v1901
      %v1903 = vpop.f32.mrf.mxu0
      %1904 = vdwg.mxu0
      %1905 = vmatpush.bf16.msra.mxu0 %v1413
      %1906 = vmatpush.bf16.msra.mxu0 %v1411
      %1907 = vmatpush.bf16.msra.mxu0 %v1409
      %1908 = vmatpush.bf16.msra.mxu0 %v1407
      %1909 = vmatpush.bf16.msra.mxu0 %v1405
      %1910 = vmatpush.bf16.msra.mxu0 %v1403
      %1911 = vmatpush.bf16.msra.mxu0 %v1401
      %1912 = vmatpush.bf16.msra.mxu0 %v1399
      %1913 = vmatmul.bf16.gmra.mxu0 %v567
      %v1914 = vpop.f32.mrf.mxu0
      %v1915 = vadd.f32 %v1902, %v1914
      %v1916 = vpop.f32.mrf.mxu0
      %1917 = vdwg.mxu0
      %1918 = vmatpush.bf16.msra.mxu0 %v1429
      %1919 = vmatpush.bf16.msra.mxu0 %v1427
      %1920 = vmatpush.bf16.msra.mxu0 %v1425
      %1921 = vmatpush.bf16.msra.mxu0 %v1423
      %1922 = vmatpush.bf16.msra.mxu0 %v1421
      %1923 = vmatpush.bf16.msra.mxu0 %v1419
      %1924 = vmatpush.bf16.msra.mxu0 %v1417
      %1925 = vmatpush.bf16.msra.mxu0 %v1415
      %1926 = vmatmul.bf16.gmra.mxu0 %v568
      %v1927 = vpop.f32.mrf.mxu0
      %v1928 = vadd.f32 %v1915, %v1927
      %v1929 = vpop.f32.mrf.mxu0
      %1930 = vdwg.mxu0
      %1931 = vmatpush.bf16.msra.mxu0 %v1445
      %1932 = vmatpush.bf16.msra.mxu0 %v1443
      %1933 = vmatpush.bf16.msra.mxu0 %v1441
      %1934 = vmatpush.bf16.msra.mxu0 %v1439
      %1935 = vmatpush.bf16.msra.mxu0 %v1437
      %1936 = vmatpush.bf16.msra.mxu0 %v1435
      %1937 = vmatpush.bf16.msra.mxu0 %v1433
      %1938 = vmatpush.bf16.msra.mxu0 %v1431
      %1939 = vmatmul.bf16.gmra.mxu0 %v569
      %v1940 = vpop.f32.mrf.mxu0
      %v1941 = vadd.f32 %v1928, %v1940
      %v1942 = vpop.f32.mrf.mxu0
      %1943 = vdwg.mxu0
      %1944 = vmatpush.bf16.msra.mxu0 %v1461
      %1945 = vmatpush.bf16.msra.mxu0 %v1459
      %1946 = vmatpush.bf16.msra.mxu0 %v1457
      %1947 = vmatpush.bf16.msra.mxu0 %v1455
      %1948 = vmatpush.bf16.msra.mxu0 %v1453
      %1949 = vmatpush.bf16.msra.mxu0 %v1451
      %1950 = vmatpush.bf16.msra.mxu0 %v1449
      %1951 = vmatpush.bf16.msra.mxu0 %v1447
      %1952 = vmatmul.bf16.gmra.mxu0 %v570
      %v1953 = vpop.f32.mrf.mxu0
      %v1954 = vadd.f32 %v1941, %v1953
      %v1955 = vpop.f32.mrf.mxu0
      %1956 = vdwg.mxu0
      %1957 = vmatpush.bf16.msra.mxu0 %v1477
      %1958 = vmatpush.bf16.msra.mxu0 %v1475
      %1959 = vmatpush.bf16.msra.mxu0 %v1473
      %1960 = vmatpush.bf16.msra.mxu0 %v1471
      %1961 = vmatpush.bf16.msra.mxu0 %v1469
      %1962 = vmatpush.bf16.msra.mxu0 %v1467
      %1963 = vmatpush.bf16.msra.mxu0 %v1465
      %1964 = vmatpush.bf16.msra.mxu0 %v1463
      %1965 = vmatmul.bf16.gmra.mxu0 %v571
      %v1966 = vpop.f32.mrf.mxu0
      %v1967 = vadd.f32 %v1954, %v1966
      %v1968 = vpop.f32.mrf.mxu0
      %1969 = vdwg.mxu0
      %1970 = vmatpush.bf16.msra.mxu0 %v1493
      %1971 = vmatpush.bf16.msra.mxu0 %v1491
      %1972 = vmatpush.bf16.msra.mxu0 %v1489
      %1973 = vmatpush.bf16.msra.mxu0 %v1487
      %1974 = vmatpush.bf16.msra.mxu0 %v1485
      %1975 = vmatpush.bf16.msra.mxu0 %v1483
      %1976 = vmatpush.bf16.msra.mxu0 %v1481
      %1977 = vmatpush.bf16.msra.mxu0 %v1479
      %1978 = vmatmul.bf16.gmra.mxu0 %v572
      %v1979 = vpop.f32.mrf.mxu0
      %v1980 = vadd.f32 %v1967, %v1979
      %v1981 = vpop.f32.mrf.mxu0
      %1982 = vdwg.mxu0
      %1983 = vmatpush.bf16.msra.mxu0 %v1509
      %1984 = vmatpush.bf16.msra.mxu0 %v1507
      %1985 = vmatpush.bf16.msra.mxu0 %v1505
      %1986 = vmatpush.bf16.msra.mxu0 %v1503
      %1987 = vmatpush.bf16.msra.mxu0 %v1501
      %1988 = vmatpush.bf16.msra.mxu0 %v1499
      %1989 = vmatpush.bf16.msra.mxu0 %v1497
      %1990 = vmatpush.bf16.msra.mxu0 %v1495
      %1991 = vmatmul.bf16.gmra.mxu0 %v575
      %v1992 = vpop.f32.mrf.mxu0
      %v1993 = vadd.f32 %v1980, %v1992
      %v1994 = vpop.f32.mrf.mxu0
      %1995 = vdwg.mxu0
      %1996 = vmatpush.bf16.msra.mxu0 %v1525
      %1997 = vmatpush.bf16.msra.mxu0 %v1523
      %1998 = vmatpush.bf16.msra.mxu0 %v1521
      %1999 = vmatpush.bf16.msra.mxu0 %v1519
      %2000 = vmatpush.bf16.msra.mxu0 %v1517
      %2001 = vmatpush.bf16.msra.mxu0 %v1515
      %2002 = vmatpush.bf16.msra.mxu0 %v1513
      %2003 = vmatpush.bf16.msra.mxu0 %v1511
      %2004 = vmatmul.bf16.gmra.mxu0 %v576
      %v2005 = vpop.f32.mrf.mxu0
      %v2006 = vadd.f32 %v1993, %v2005
      %v2007 = vpop.f32.mrf.mxu0
      %2008 = vdwg.mxu0
      %2009 = vmatpush.bf16.msra.mxu0 %v1541
      %2010 = vmatpush.bf16.msra.mxu0 %v1539
      %2011 = vmatpush.bf16.msra.mxu0 %v1537
      %2012 = vmatpush.bf16.msra.mxu0 %v1535
      %2013 = vmatpush.bf16.msra.mxu0 %v1533
      %2014 = vmatpush.bf16.msra.mxu0 %v1531
      %2015 = vmatpush.bf16.msra.mxu0 %v1529
      %2016 = vmatpush.bf16.msra.mxu0 %v1527
      %2017 = vmatmul.bf16.gmra.mxu0 %v577
      %v2018 = vpop.f32.mrf.mxu0
      %v2019 = vadd.f32 %v2006, %v2018
      %v2020 = vpop.f32.mrf.mxu0
      %2021 = vdwg.mxu0
      %2022 = vmatpush.bf16.msra.mxu0 %v1557
      %2023 = vmatpush.bf16.msra.mxu0 %v1555
      %2024 = vmatpush.bf16.msra.mxu0 %v1553
      %2025 = vmatpush.bf16.msra.mxu0 %v1551
      %2026 = vmatpush.bf16.msra.mxu0 %v1549
      %2027 = vmatpush.bf16.msra.mxu0 %v1547
      %2028 = vmatpush.bf16.msra.mxu0 %v1545
      %2029 = vmatpush.bf16.msra.mxu0 %v1543
      %2030 = vmatmul.bf16.gmra.mxu0 %v578
      %v2031 = vpop.f32.mrf.mxu0
      %v2032 = vadd.f32 %v2019, %v2031
      %v2033 = vpop.f32.mrf.mxu0
      %2034 = vdwg.mxu0
      %2035 = vmatpush.bf16.msra.mxu0 %v1573
      %2036 = vmatpush.bf16.msra.mxu0 %v1571
      %2037 = vmatpush.bf16.msra.mxu0 %v1569
      %2038 = vmatpush.bf16.msra.mxu0 %v1567
      %2039 = vmatpush.bf16.msra.mxu0 %v1565
      %2040 = vmatpush.bf16.msra.mxu0 %v1563
      %2041 = vmatpush.bf16.msra.mxu0 %v1561
      %2042 = vmatpush.bf16.msra.mxu0 %v1559
      %2043 = vmatmul.bf16.gmra.mxu0 %v579
      %v2044 = vpop.f32.mrf.mxu0
      %v2045 = vadd.f32 %v2032, %v2044
      %v2046 = vpop.f32.mrf.mxu0
      %2047 = vdwg.mxu0
      %2048 = vmatpush.bf16.msra.mxu0 %v1589
      %2049 = vmatpush.bf16.msra.mxu0 %v1587
      %2050 = vmatpush.bf16.msra.mxu0 %v1585
      %2051 = vmatpush.bf16.msra.mxu0 %v1583
      %2052 = vmatpush.bf16.msra.mxu0 %v1581
      %2053 = vmatpush.bf16.msra.mxu0 %v1579
      %2054 = vmatpush.bf16.msra.mxu0 %v1577
      %2055 = vmatpush.bf16.msra.mxu0 %v1575
      %2056 = vmatmul.bf16.gmra.mxu0 %v580
      %v2057 = vpop.f32.mrf.mxu0
      %v2058 = vadd.f32 %v2045, %v2057
      %v2059 = vpop.f32.mrf.mxu0
      %2060 = vdwg.mxu0
      %2061 = vmatpush.bf16.msra.mxu0 %v1605
      %2062 = vmatpush.bf16.msra.mxu0 %v1603
      %2063 = vmatpush.bf16.msra.mxu0 %v1601
      %2064 = vmatpush.bf16.msra.mxu0 %v1599
      %2065 = vmatpush.bf16.msra.mxu0 %v1597
      %2066 = vmatpush.bf16.msra.mxu0 %v1595
      %2067 = vmatpush.bf16.msra.mxu0 %v1593
      %2068 = vmatpush.bf16.msra.mxu0 %v1591
      %2069 = vmatmul.bf16.gmra.mxu0 %v581
      %v2070 = vpop.f32.mrf.mxu0
      %v2071 = vadd.f32 %v2058, %v2070
      %v2072 = vpop.f32.mrf.mxu0
      %2073 = vdwg.mxu0
      %2074 = vmatpush.bf16.msra.mxu0 %v1621
      %2075 = vmatpush.bf16.msra.mxu0 %v1619
      %2076 = vmatpush.bf16.msra.mxu0 %v1617
      %2077 = vmatpush.bf16.msra.mxu0 %v1615
      %2078 = vmatpush.bf16.msra.mxu0 %v1613
      %2079 = vmatpush.bf16.msra.mxu0 %v1611
      %2080 = vmatpush.bf16.msra.mxu0 %v1609
      %2081 = vmatpush.bf16.msra.mxu0 %v1607
      %2082 = vmatmul.bf16.gmra.mxu0 %v582
      %v2083 = vpop.f32.mrf.mxu0
      %v2084 = vadd.f32 %v2071, %v2083
      %v2085 = vpop.f32.mrf.mxu0
      %2086 = vdwg.mxu0
      %2087 = vmatpush.bf16.msra.mxu0 %v1382
      %2088 = vmatpush.bf16.msra.mxu0 %v1380
      %2089 = vmatpush.bf16.msra.mxu0 %v1378
      %2090 = vmatpush.bf16.msra.mxu0 %v1376
      %2091 = vmatpush.bf16.msra.mxu0 %v1374
      %2092 = vmatpush.bf16.msra.mxu0 %v1372
      %2093 = vmatpush.bf16.msra.mxu0 %v1370
      %2094 = vmatpush.bf16.msra.mxu0 %v1368
      %2095 = vmatmul.bf16.gmra.mxu0 %v565
      %v2096 = vpop.f32.mrf.mxu0
      %v2097 = vadd.f32 %v560, %v2096
      %v2098 = vpop.f32.mrf.mxu0
      %2099 = vdwg.mxu0
      %2100 = vmatpush.bf16.msra.mxu0 %v1398
      %2101 = vmatpush.bf16.msra.mxu0 %v1396
      %2102 = vmatpush.bf16.msra.mxu0 %v1394
      %2103 = vmatpush.bf16.msra.mxu0 %v1392
      %2104 = vmatpush.bf16.msra.mxu0 %v1390
      %2105 = vmatpush.bf16.msra.mxu0 %v1388
      %2106 = vmatpush.bf16.msra.mxu0 %v1386
      %2107 = vmatpush.bf16.msra.mxu0 %v1384
      %2108 = vmatmul.bf16.gmra.mxu0 %v566
      %v2109 = vpop.f32.mrf.mxu0
      %v2110 = vadd.f32 %v2097, %v2109
      %v2111 = vpop.f32.mrf.mxu0
      %2112 = vdwg.mxu0
      %2113 = vmatpush.bf16.msra.mxu0 %v1414
      %2114 = vmatpush.bf16.msra.mxu0 %v1412
      %2115 = vmatpush.bf16.msra.mxu0 %v1410
      %2116 = vmatpush.bf16.msra.mxu0 %v1408
      %2117 = vmatpush.bf16.msra.mxu0 %v1406
      %2118 = vmatpush.bf16.msra.mxu0 %v1404
      %2119 = vmatpush.bf16.msra.mxu0 %v1402
      %2120 = vmatpush.bf16.msra.mxu0 %v1400
      %2121 = vmatmul.bf16.gmra.mxu0 %v567
      %v2122 = vpop.f32.mrf.mxu0
      %v2123 = vadd.f32 %v2110, %v2122
      %v2124 = vpop.f32.mrf.mxu0
      %2125 = vdwg.mxu0
      %2126 = vmatpush.bf16.msra.mxu0 %v1430
      %2127 = vmatpush.bf16.msra.mxu0 %v1428
      %2128 = vmatpush.bf16.msra.mxu0 %v1426
      %2129 = vmatpush.bf16.msra.mxu0 %v1424
      %2130 = vmatpush.bf16.msra.mxu0 %v1422
      %2131 = vmatpush.bf16.msra.mxu0 %v1420
      %2132 = vmatpush.bf16.msra.mxu0 %v1418
      %2133 = vmatpush.bf16.msra.mxu0 %v1416
      %2134 = vmatmul.bf16.gmra.mxu0 %v568
      %v2135 = vpop.f32.mrf.mxu0
      %v2136 = vadd.f32 %v2123, %v2135
      %v2137 = vpop.f32.mrf.mxu0
      %2138 = vdwg.mxu0
      %2139 = vmatpush.bf16.msra.mxu0 %v1446
      %2140 = vmatpush.bf16.msra.mxu0 %v1444
      %2141 = vmatpush.bf16.msra.mxu0 %v1442
      %2142 = vmatpush.bf16.msra.mxu0 %v1440
      %2143 = vmatpush.bf16.msra.mxu0 %v1438
      %2144 = vmatpush.bf16.msra.mxu0 %v1436
      %2145 = vmatpush.bf16.msra.mxu0 %v1434
      %2146 = vmatpush.bf16.msra.mxu0 %v1432
      %2147 = vmatmul.bf16.gmra.mxu0 %v569
      %v2148 = vpop.f32.mrf.mxu0
      %v2149 = vadd.f32 %v2136, %v2148
      %v2150 = vpop.f32.mrf.mxu0
      %2151 = vdwg.mxu0
      %2152 = vmatpush.bf16.msra.mxu0 %v1462
      %2153 = vmatpush.bf16.msra.mxu0 %v1460
      %2154 = vmatpush.bf16.msra.mxu0 %v1458
      %2155 = vmatpush.bf16.msra.mxu0 %v1456
      %2156 = vmatpush.bf16.msra.mxu0 %v1454
      %2157 = vmatpush.bf16.msra.mxu0 %v1452
      %2158 = vmatpush.bf16.msra.mxu0 %v1450
      %2159 = vmatpush.bf16.msra.mxu0 %v1448
      %2160 = vmatmul.bf16.gmra.mxu0 %v570
      %v2161 = vpop.f32.mrf.mxu0
      %v2162 = vadd.f32 %v2149, %v2161
      %v2163 = vpop.f32.mrf.mxu0
      %2164 = vdwg.mxu0
      %2165 = vmatpush.bf16.msra.mxu0 %v1478
      %2166 = vmatpush.bf16.msra.mxu0 %v1476
      %2167 = vmatpush.bf16.msra.mxu0 %v1474
      %2168 = vmatpush.bf16.msra.mxu0 %v1472
      %2169 = vmatpush.bf16.msra.mxu0 %v1470
      %2170 = vmatpush.bf16.msra.mxu0 %v1468
      %2171 = vmatpush.bf16.msra.mxu0 %v1466
      %2172 = vmatpush.bf16.msra.mxu0 %v1464
      %2173 = vmatmul.bf16.gmra.mxu0 %v571
      %v2174 = vpop.f32.mrf.mxu0
      %v2175 = vadd.f32 %v2162, %v2174
      %v2176 = vpop.f32.mrf.mxu0
      %2177 = vdwg.mxu0
      %2178 = vmatpush.bf16.msra.mxu0 %v1494
      %2179 = vmatpush.bf16.msra.mxu0 %v1492
      %2180 = vmatpush.bf16.msra.mxu0 %v1490
      %2181 = vmatpush.bf16.msra.mxu0 %v1488
      %2182 = vmatpush.bf16.msra.mxu0 %v1486
      %2183 = vmatpush.bf16.msra.mxu0 %v1484
      %2184 = vmatpush.bf16.msra.mxu0 %v1482
      %2185 = vmatpush.bf16.msra.mxu0 %v1480
      %2186 = vmatmul.bf16.gmra.mxu0 %v572
      %v2187 = vpop.f32.mrf.mxu0
      %v2188 = vadd.f32 %v2175, %v2187
      %v2189 = vpop.f32.mrf.mxu0
      %2190 = vdwg.mxu0
      %2191 = vmatpush.bf16.msra.mxu0 %v1510
      %2192 = vmatpush.bf16.msra.mxu0 %v1508
      %2193 = vmatpush.bf16.msra.mxu0 %v1506
      %2194 = vmatpush.bf16.msra.mxu0 %v1504
      %2195 = vmatpush.bf16.msra.mxu0 %v1502
      %2196 = vmatpush.bf16.msra.mxu0 %v1500
      %2197 = vmatpush.bf16.msra.mxu0 %v1498
      %2198 = vmatpush.bf16.msra.mxu0 %v1496
      %2199 = vmatmul.bf16.gmra.mxu0 %v575
      %v2200 = vpop.f32.mrf.mxu0
      %v2201 = vadd.f32 %v2188, %v2200
      %v2202 = vpop.f32.mrf.mxu0
      %2203 = vdwg.mxu0
      %2204 = vmatpush.bf16.msra.mxu0 %v1526
      %2205 = vmatpush.bf16.msra.mxu0 %v1524
      %2206 = vmatpush.bf16.msra.mxu0 %v1522
      %2207 = vmatpush.bf16.msra.mxu0 %v1520
      %2208 = vmatpush.bf16.msra.mxu0 %v1518
      %2209 = vmatpush.bf16.msra.mxu0 %v1516
      %2210 = vmatpush.bf16.msra.mxu0 %v1514
      %2211 = vmatpush.bf16.msra.mxu0 %v1512
      %2212 = vmatmul.bf16.gmra.mxu0 %v576
      %v2213 = vpop.f32.mrf.mxu0
      %v2214 = vadd.f32 %v2201, %v2213
      %v2215 = vpop.f32.mrf.mxu0
      %2216 = vdwg.mxu0
      %2217 = vmatpush.bf16.msra.mxu0 %v1542
      %2218 = vmatpush.bf16.msra.mxu0 %v1540
      %2219 = vmatpush.bf16.msra.mxu0 %v1538
      %2220 = vmatpush.bf16.msra.mxu0 %v1536
      %2221 = vmatpush.bf16.msra.mxu0 %v1534
      %2222 = vmatpush.bf16.msra.mxu0 %v1532
      %2223 = vmatpush.bf16.msra.mxu0 %v1530
      %2224 = vmatpush.bf16.msra.mxu0 %v1528
      %2225 = vmatmul.bf16.gmra.mxu0 %v577
      %v2226 = vpop.f32.mrf.mxu0
      %v2227 = vadd.f32 %v2214, %v2226
      %v2228 = vpop.f32.mrf.mxu0
      %2229 = vdwg.mxu0
      %2230 = vmatpush.bf16.msra.mxu0 %v1558
      %2231 = vmatpush.bf16.msra.mxu0 %v1556
      %2232 = vmatpush.bf16.msra.mxu0 %v1554
      %2233 = vmatpush.bf16.msra.mxu0 %v1552
      %2234 = vmatpush.bf16.msra.mxu0 %v1550
      %2235 = vmatpush.bf16.msra.mxu0 %v1548
      %2236 = vmatpush.bf16.msra.mxu0 %v1546
      %2237 = vmatpush.bf16.msra.mxu0 %v1544
      %2238 = vmatmul.bf16.gmra.mxu0 %v578
      %v2239 = vpop.f32.mrf.mxu0
      %v2240 = vadd.f32 %v2227, %v2239
      %v2241 = vpop.f32.mrf.mxu0
      %2242 = vdwg.mxu0
      %2243 = vmatpush.bf16.msra.mxu0 %v1574
      %2244 = vmatpush.bf16.msra.mxu0 %v1572
      %2245 = vmatpush.bf16.msra.mxu0 %v1570
      %2246 = vmatpush.bf16.msra.mxu0 %v1568
      %2247 = vmatpush.bf16.msra.mxu0 %v1566
      %2248 = vmatpush.bf16.msra.mxu0 %v1564
      %2249 = vmatpush.bf16.msra.mxu0 %v1562
      %2250 = vmatpush.bf16.msra.mxu0 %v1560
      %2251 = vmatmul.bf16.gmra.mxu0 %v579
      %v2252 = vpop.f32.mrf.mxu0
      %v2253 = vadd.f32 %v2240, %v2252
      %v2254 = vpop.f32.mrf.mxu0
      %2255 = vdwg.mxu0
      %2256 = vmatpush.bf16.msra.mxu0 %v1590
      %2257 = vmatpush.bf16.msra.mxu0 %v1588
      %2258 = vmatpush.bf16.msra.mxu0 %v1586
      %2259 = vmatpush.bf16.msra.mxu0 %v1584
      %2260 = vmatpush.bf16.msra.mxu0 %v1582
      %2261 = vmatpush.bf16.msra.mxu0 %v1580
      %2262 = vmatpush.bf16.msra.mxu0 %v1578
      %2263 = vmatpush.bf16.msra.mxu0 %v1576
      %2264 = vmatmul.bf16.gmra.mxu0 %v580
      %v2265 = vpop.f32.mrf.mxu0
      %v2266 = vadd.f32 %v2253, %v2265
      %v2267 = vpop.f32.mrf.mxu0
      %2268 = vdwg.mxu0
      %2269 = vmatpush.bf16.msra.mxu0 %v1606
      %2270 = vmatpush.bf16.msra.mxu0 %v1604
      %2271 = vmatpush.bf16.msra.mxu0 %v1602
      %2272 = vmatpush.bf16.msra.mxu0 %v1600
      %2273 = vmatpush.bf16.msra.mxu0 %v1598
      %2274 = vmatpush.bf16.msra.mxu0 %v1596
      %2275 = vmatpush.bf16.msra.mxu0 %v1594
      %2276 = vmatpush.bf16.msra.mxu0 %v1592
      %2277 = vmatmul.bf16.gmra.mxu0 %v581
      %v2278 = vpop.f32.mrf.mxu0
      %v2279 = vadd.f32 %v2266, %v2278
      %v2280 = vpop.f32.mrf.mxu0
      %2281 = vdwg.mxu0
      %2282 = vmatpush.bf16.msra.mxu0 %v1622
      %2283 = vmatpush.bf16.msra.mxu0 %v1620
      %2284 = vmatpush.bf16.msra.mxu0 %v1618
      %2285 = vmatpush.bf16.msra.mxu0 %v1616
      %2286 = vmatpush.bf16.msra.mxu0 %v1614
      %2287 = vmatpush.bf16.msra.mxu0 %v1612
      %2288 = vmatpush.bf16.msra.mxu0 %v1610
      %2289 = vmatpush.bf16.msra.mxu0 %v1608
      %2290 = vmatmul.bf16.gmra.mxu0 %v582
      %v2291 = vpop.f32.mrf.mxu0
      %v2292 = vadd.f32 %v2279, %v2291
      %v2293 = vpop.f32.mrf.mxu0
      %2294 = vdwg.mxu0
      %v2295 = vmax.f32 %v2084, 0.0
      %v2296 = vmax.f32 %v2292, 0.0
      %v2299 = vrot.slane %v2296, 6
      %vm2300 = vcmask 1041408
      %v2301 = vsel %vm2300, %v2295, %v2299
      %2303 = vst [vmem:[%s293] sm:$0xf] %v2301
      %v2304 = vpack.c.bf16 %v2295, %v2295
      %v2305 = vpack.c.bf16 %v2296, %v2296
      %v2306 = vld [vmem:[%s284] sm:$0xff]
      %v2307 = vld [vmem:[%s284 + $0x8] sm:$0xff]
      %v2308 = vld [vmem:[%s284 + $0x10] sm:$0xff]
      %v2309 = vld [vmem:[%s284 + $0x18] sm:$0xff]
      %v2310 = vld [vmem:[%s284 + $0x20] sm:$0xff]
      %v2311 = vld [vmem:[%s284 + $0x28] sm:$0xff]
      %v2312 = vld [vmem:[%s284 + $0x30] sm:$0xff]
      %v2313 = vld [vmem:[%s284 + $0x38] sm:$0xff]
      %v2314 = vld [vmem:[%s284 + $0x40] sm:$0xff]
      %v2315 = vld [vmem:[%s284 + $0x48] sm:$0xff]
      %v2316 = vld [vmem:[%s284 + $0x50] sm:$0xff]
      %v2317 = vld [vmem:[%s284 + $0x58] sm:$0xff]
      %v2318 = vld [vmem:[%s284 + $0x60] sm:$0xff]
      %v2319 = vld [vmem:[%s284 + $0x68] sm:$0xff]
      %v2320 = vld [vmem:[%s284 + $0x70] sm:$0xff]
      %v2321 = vld [vmem:[%s284 + $0x78] sm:$0xff]
      %v2322 = vld [vmem:[%s284 + $0x80] sm:$0xff]
      %v2323 = vld [vmem:[%s284 + $0x88] sm:$0xff]
      %v2324 = vld [vmem:[%s284 + $0x90] sm:$0xff]
      %v2325 = vld [vmem:[%s284 + $0x98] sm:$0xff]
      %v2326 = vld [vmem:[%s284 + $0xa0] sm:$0xff]
      %v2327 = vld [vmem:[%s284 + $0xa8] sm:$0xff]
      %v2328 = vld [vmem:[%s284 + $0xb0] sm:$0xff]
      %v2329 = vld [vmem:[%s284 + $0xb8] sm:$0xff]
      %v2330 = vld [vmem:[%s284 + $0xc0] sm:$0xff]
      %v2331 = vld [vmem:[%s284 + $0xc8] sm:$0xff]
      %v2332 = vld [vmem:[%s284 + $0xd0] sm:$0xff]
      %v2333 = vld [vmem:[%s284 + $0xd8] sm:$0xff]
      %v2334 = vld [vmem:[%s284 + $0xe0] sm:$0xff]
      %v2335 = vld [vmem:[%s284 + $0xe8] sm:$0xff]
      %v2336 = vld [vmem:[%s284 + $0xf0] sm:$0xff]
      %v2337 = vld [vmem:[%s284 + $0xf8] sm:$0xff]
      %v2338 = vld [vmem:[%s284 + $0x100] sm:$0xff]
      %v2339 = vld [vmem:[%s284 + $0x108] sm:$0xff]
      %v2340 = vld [vmem:[%s284 + $0x110] sm:$0xff]
      %v2341 = vld [vmem:[%s284 + $0x118] sm:$0xff]
      %v2342 = vld [vmem:[%s284 + $0x120] sm:$0xff]
      %v2343 = vld [vmem:[%s284 + $0x128] sm:$0xff]
      %v2344 = vld [vmem:[%s284 + $0x130] sm:$0xff]
      %v2345 = vld [vmem:[%s284 + $0x138] sm:$0xff]
      %v2346 = vld [vmem:[%s284 + $0x140] sm:$0xff]
      %v2347 = vld [vmem:[%s284 + $0x148] sm:$0xff]
      %v2348 = vld [vmem:[%s284 + $0x150] sm:$0xff]
      %v2349 = vld [vmem:[%s284 + $0x158] sm:$0xff]
      %v2350 = vld [vmem:[%s284 + $0x160] sm:$0xff]
      %v2351 = vld [vmem:[%s284 + $0x168] sm:$0xff]
      %v2352 = vld [vmem:[%s284 + $0x170] sm:$0xff]
      %v2353 = vld [vmem:[%s284 + $0x178] sm:$0xff]
      %v2354 = vld [vmem:[%s284 + $0x180] sm:$0xff]
      %v2355 = vld [vmem:[%s284 + $0x188] sm:$0xff]
      %v2356 = vld [vmem:[%s284 + $0x190] sm:$0xff]
      %v2357 = vld [vmem:[%s284 + $0x198] sm:$0xff]
      %v2358 = vld [vmem:[%s284 + $0x1a0] sm:$0xff]
      %v2359 = vld [vmem:[%s284 + $0x1a8] sm:$0xff]
      %v2360 = vld [vmem:[%s284 + $0x1b0] sm:$0xff]
      %v2361 = vld [vmem:[%s284 + $0x1b8] sm:$0xff]
      %v2362 = vld [vmem:[%s284 + $0x1c0] sm:$0xff]
      %v2363 = vld [vmem:[%s284 + $0x1c8] sm:$0xff]
      %v2364 = vld [vmem:[%s284 + $0x1d0] sm:$0xff]
      %v2365 = vld [vmem:[%s284 + $0x1d8] sm:$0xff]
      %v2366 = vld [vmem:[%s284 + $0x1e0] sm:$0xff]
      %v2367 = vld [vmem:[%s284 + $0x1e8] sm:$0xff]
      %v2368 = vld [vmem:[%s284 + $0x1f0] sm:$0xff]
      %v2369 = vld [vmem:[%s284 + $0x1f8] sm:$0xff]
      %v2370 = vld [vmem:[%s284 + $0x200] sm:$0xff]
      %v2371 = vld [vmem:[%s284 + $0x208] sm:$0xff]
      %v2372 = vld [vmem:[%s284 + $0x210] sm:$0xff]
      %v2373 = vld [vmem:[%s284 + $0x218] sm:$0xff]
      %v2374 = vld [vmem:[%s284 + $0x220] sm:$0xff]
      %v2375 = vld [vmem:[%s284 + $0x228] sm:$0xff]
      %v2376 = vld [vmem:[%s284 + $0x230] sm:$0xff]
      %v2377 = vld [vmem:[%s284 + $0x238] sm:$0xff]
      %v2378 = vld [vmem:[%s284 + $0x240] sm:$0xff]
      %v2379 = vld [vmem:[%s284 + $0x248] sm:$0xff]
      %v2380 = vld [vmem:[%s284 + $0x250] sm:$0xff]
      %v2381 = vld [vmem:[%s284 + $0x258] sm:$0xff]
      %v2382 = vld [vmem:[%s284 + $0x260] sm:$0xff]
      %v2383 = vld [vmem:[%s284 + $0x268] sm:$0xff]
      %v2384 = vld [vmem:[%s284 + $0x270] sm:$0xff]
      %v2385 = vld [vmem:[%s284 + $0x278] sm:$0xff]
      %v2386 = vld [vmem:[%s284 + $0x280] sm:$0xff]
      %v2387 = vld [vmem:[%s284 + $0x288] sm:$0xff]
      %v2388 = vld [vmem:[%s284 + $0x290] sm:$0xff]
      %v2389 = vld [vmem:[%s284 + $0x298] sm:$0xff]
      %v2390 = vld [vmem:[%s284 + $0x2a0] sm:$0xff]
      %v2391 = vld [vmem:[%s284 + $0x2a8] sm:$0xff]
      %v2392 = vld [vmem:[%s284 + $0x2b0] sm:$0xff]
      %v2393 = vld [vmem:[%s284 + $0x2b8] sm:$0xff]
      %v2394 = vld [vmem:[%s284 + $0x2c0] sm:$0xff]
      %v2395 = vld [vmem:[%s284 + $0x2c8] sm:$0xff]
      %v2396 = vld [vmem:[%s284 + $0x2d0] sm:$0xff]
      %v2397 = vld [vmem:[%s284 + $0x2d8] sm:$0xff]
      %v2398 = vld [vmem:[%s284 + $0x2e0] sm:$0xff]
      %v2399 = vld [vmem:[%s284 + $0x2e8] sm:$0xff]
      %v2400 = vld [vmem:[%s284 + $0x2f0] sm:$0xff]
      %v2401 = vld [vmem:[%s284 + $0x2f8] sm:$0xff]
      %v2402 = vld [vmem:[%s288] sm:$0x3f]
      %v2404 = vperm.slane %v2402, 0
      %v2405 = vperm.slane %v2402, 1
      %v2406 = vperm.slane %v2402, 2
      %v2407 = vperm.slane %v2402, 3
      %v2408 = vperm.slane %v2402, 4
      %v2409 = vperm.slane %v2402, 5
      %v2512 = vunpack.c.l.b16 %v2306
      %v2513 = vunpack.c.h.b16 %v2306
      %v2514 = vunpack.c.l.b16 %v2307
      %v2515 = vunpack.c.h.b16 %v2307
      %v2516 = vunpack.c.l.b16 %v2308
      %v2517 = vunpack.c.h.b16 %v2308
      %v2518 = vunpack.c.l.b16 %v2309
      %v2519 = vunpack.c.h.b16 %v2309
      %v2520 = vunpack.c.l.b16 %v2310
      %v2521 = vunpack.c.h.b16 %v2310
      %v2522 = vunpack.c.l.b16 %v2311
      %v2523 = vunpack.c.h.b16 %v2311
      %v2524 = vunpack.c.l.b16 %v2312
      %v2525 = vunpack.c.h.b16 %v2312
      %v2526 = vunpack.c.l.b16 %v2313
      %v2527 = vunpack.c.h.b16 %v2313
      %v2528 = vunpack.c.l.b16 %v2314
      %v2529 = vunpack.c.h.b16 %v2314
      %v2530 = vunpack.c.l.b16 %v2315
      %v2531 = vunpack.c.h.b16 %v2315
      %v2532 = vunpack.c.l.b16 %v2316
      %v2533 = vunpack.c.h.b16 %v2316
      %v2534 = vunpack.c.l.b16 %v2317
      %v2535 = vunpack.c.h.b16 %v2317
      %v2536 = vunpack.c.l.b16 %v2318
      %v2537 = vunpack.c.h.b16 %v2318
      %v2538 = vunpack.c.l.b16 %v2319
      %v2539 = vunpack.c.h.b16 %v2319
      %v2540 = vunpack.c.l.b16 %v2320
      %v2541 = vunpack.c.h.b16 %v2320
      %v2542 = vunpack.c.l.b16 %v2321
      %v2543 = vunpack.c.h.b16 %v2321
      %v2544 = vunpack.c.l.b16 %v2322
      %v2545 = vunpack.c.h.b16 %v2322
      %v2546 = vunpack.c.l.b16 %v2323
      %v2547 = vunpack.c.h.b16 %v2323
      %v2548 = vunpack.c.l.b16 %v2324
      %v2549 = vunpack.c.h.b16 %v2324
      %v2550 = vunpack.c.l.b16 %v2325
      %v2551 = vunpack.c.h.b16 %v2325
      %v2552 = vunpack.c.l.b16 %v2326
      %v2553 = vunpack.c.h.b16 %v2326
      %v2554 = vunpack.c.l.b16 %v2327
      %v2555 = vunpack.c.h.b16 %v2327
      %v2556 = vunpack.c.l.b16 %v2328
      %v2557 = vunpack.c.h.b16 %v2328
      %v2558 = vunpack.c.l.b16 %v2329
      %v2559 = vunpack.c.h.b16 %v2329
      %v2560 = vunpack.c.l.b16 %v2330
      %v2561 = vunpack.c.h.b16 %v2330
      %v2562 = vunpack.c.l.b16 %v2331
      %v2563 = vunpack.c.h.b16 %v2331
      %v2564 = vunpack.c.l.b16 %v2332
      %v2565 = vunpack.c.h.b16 %v2332
      %v2566 = vunpack.c.l.b16 %v2333
      %v2567 = vunpack.c.h.b16 %v2333
      %v2568 = vunpack.c.l.b16 %v2334
      %v2569 = vunpack.c.h.b16 %v2334
      %v2570 = vunpack.c.l.b16 %v2335
      %v2571 = vunpack.c.h.b16 %v2335
      %v2572 = vunpack.c.l.b16 %v2336
      %v2573 = vunpack.c.h.b16 %v2336
      %v2574 = vunpack.c.l.b16 %v2337
      %v2575 = vunpack.c.h.b16 %v2337
      %v2576 = vunpack.c.l.b16 %v2338
      %v2577 = vunpack.c.h.b16 %v2338
      %v2578 = vunpack.c.l.b16 %v2339
      %v2579 = vunpack.c.h.b16 %v2339
      %v2580 = vunpack.c.l.b16 %v2340
      %v2581 = vunpack.c.h.b16 %v2340
      %v2582 = vunpack.c.l.b16 %v2341
      %v2583 = vunpack.c.h.b16 %v2341
      %v2584 = vunpack.c.l.b16 %v2342
      %v2585 = vunpack.c.h.b16 %v2342
      %v2586 = vunpack.c.l.b16 %v2343
      %v2587 = vunpack.c.h.b16 %v2343
      %v2588 = vunpack.c.l.b16 %v2344
      %v2589 = vunpack.c.h.b16 %v2344
      %v2590 = vunpack.c.l.b16 %v2345
      %v2591 = vunpack.c.h.b16 %v2345
      %v2592 = vunpack.c.l.b16 %v2346
      %v2593 = vunpack.c.h.b16 %v2346
      %v2594 = vunpack.c.l.b16 %v2347
      %v2595 = vunpack.c.h.b16 %v2347
      %v2596 = vunpack.c.l.b16 %v2348
      %v2597 = vunpack.c.h.b16 %v2348
      %v2598 = vunpack.c.l.b16 %v2349
      %v2599 = vunpack.c.h.b16 %v2349
      %v2600 = vunpack.c.l.b16 %v2350
      %v2601 = vunpack.c.h.b16 %v2350
      %v2602 = vunpack.c.l.b16 %v2351
      %v2603 = vunpack.c.h.b16 %v2351
      %v2604 = vunpack.c.l.b16 %v2352
      %v2605 = vunpack.c.h.b16 %v2352
      %v2606 = vunpack.c.l.b16 %v2353
      %v2607 = vunpack.c.h.b16 %v2353
      %v2608 = vunpack.c.l.b16 %v2354
      %v2609 = vunpack.c.h.b16 %v2354
      %v2610 = vunpack.c.l.b16 %v2355
      %v2611 = vunpack.c.h.b16 %v2355
      %v2612 = vunpack.c.l.b16 %v2356
      %v2613 = vunpack.c.h.b16 %v2356
      %v2614 = vunpack.c.l.b16 %v2357
      %v2615 = vunpack.c.h.b16 %v2357
      %v2616 = vunpack.c.l.b16 %v2358
      %v2617 = vunpack.c.h.b16 %v2358
      %v2618 = vunpack.c.l.b16 %v2359
      %v2619 = vunpack.c.h.b16 %v2359
      %v2620 = vunpack.c.l.b16 %v2360
      %v2621 = vunpack.c.h.b16 %v2360
      %v2622 = vunpack.c.l.b16 %v2361
      %v2623 = vunpack.c.h.b16 %v2361
      %v2624 = vunpack.c.l.b16 %v2362
      %v2625 = vunpack.c.h.b16 %v2362
      %v2626 = vunpack.c.l.b16 %v2363
      %v2627 = vunpack.c.h.b16 %v2363
      %v2628 = vunpack.c.l.b16 %v2364
      %v2629 = vunpack.c.h.b16 %v2364
      %v2630 = vunpack.c.l.b16 %v2365
      %v2631 = vunpack.c.h.b16 %v2365
      %v2632 = vunpack.c.l.b16 %v2366
      %v2633 = vunpack.c.h.b16 %v2366
      %v2634 = vunpack.c.l.b16 %v2367
      %v2635 = vunpack.c.h.b16 %v2367
      %v2636 = vunpack.c.l.b16 %v2368
      %v2637 = vunpack.c.h.b16 %v2368
      %v2638 = vunpack.c.l.b16 %v2369
      %v2639 = vunpack.c.h.b16 %v2369
      %v2640 = vunpack.c.l.b16 %v2370
      %v2641 = vunpack.c.h.b16 %v2370
      %v2642 = vunpack.c.l.b16 %v2371
      %v2643 = vunpack.c.h.b16 %v2371
      %v2644 = vunpack.c.l.b16 %v2372
      %v2645 = vunpack.c.h.b16 %v2372
      %v2646 = vunpack.c.l.b16 %v2373
      %v2647 = vunpack.c.h.b16 %v2373
      %v2648 = vunpack.c.l.b16 %v2374
      %v2649 = vunpack.c.h.b16 %v2374
      %v2650 = vunpack.c.l.b16 %v2375
      %v2651 = vunpack.c.h.b16 %v2375
      %v2652 = vunpack.c.l.b16 %v2376
      %v2653 = vunpack.c.h.b16 %v2376
      %v2654 = vunpack.c.l.b16 %v2377
      %v2655 = vunpack.c.h.b16 %v2377
      %v2656 = vunpack.c.l.b16 %v2378
      %v2657 = vunpack.c.h.b16 %v2378
      %v2658 = vunpack.c.l.b16 %v2379
      %v2659 = vunpack.c.h.b16 %v2379
      %v2660 = vunpack.c.l.b16 %v2380
      %v2661 = vunpack.c.h.b16 %v2380
      %v2662 = vunpack.c.l.b16 %v2381
      %v2663 = vunpack.c.h.b16 %v2381
      %v2664 = vunpack.c.l.b16 %v2382
      %v2665 = vunpack.c.h.b16 %v2382
      %v2666 = vunpack.c.l.b16 %v2383
      %v2667 = vunpack.c.h.b16 %v2383
      %v2668 = vunpack.c.l.b16 %v2384
      %v2669 = vunpack.c.h.b16 %v2384
      %v2670 = vunpack.c.l.b16 %v2385
      %v2671 = vunpack.c.h.b16 %v2385
      %v2672 = vunpack.c.l.b16 %v2386
      %v2673 = vunpack.c.h.b16 %v2386
      %v2674 = vunpack.c.l.b16 %v2387
      %v2675 = vunpack.c.h.b16 %v2387
      %v2676 = vunpack.c.l.b16 %v2388
      %v2677 = vunpack.c.h.b16 %v2388
      %v2678 = vunpack.c.l.b16 %v2389
      %v2679 = vunpack.c.h.b16 %v2389
      %v2680 = vunpack.c.l.b16 %v2390
      %v2681 = vunpack.c.h.b16 %v2390
      %v2682 = vunpack.c.l.b16 %v2391
      %v2683 = vunpack.c.h.b16 %v2391
      %v2684 = vunpack.c.l.b16 %v2392
      %v2685 = vunpack.c.h.b16 %v2392
      %v2686 = vunpack.c.l.b16 %v2393
      %v2687 = vunpack.c.h.b16 %v2393
      %v2688 = vunpack.c.l.b16 %v2394
      %v2689 = vunpack.c.h.b16 %v2394
      %v2690 = vunpack.c.l.b16 %v2395
      %v2691 = vunpack.c.h.b16 %v2395
      %v2692 = vunpack.c.l.b16 %v2396
      %v2693 = vunpack.c.h.b16 %v2396
      %v2694 = vunpack.c.l.b16 %v2397
      %v2695 = vunpack.c.h.b16 %v2397
      %v2696 = vunpack.c.l.b16 %v2398
      %v2697 = vunpack.c.h.b16 %v2398
      %v2698 = vunpack.c.l.b16 %v2399
      %v2699 = vunpack.c.h.b16 %v2399
      %v2700 = vunpack.c.l.b16 %v2400
      %v2701 = vunpack.c.h.b16 %v2400
      %v2702 = vunpack.c.l.b16 %v2401
      %v2703 = vunpack.c.h.b16 %v2401
      %v2704 = vpack.c.b16 %v2518, %v2512
      %v2705 = vpack.c.b16 %v2519, %v2513
      %v2706 = vpack.c.b16 %v2520, %v2514
      %v2707 = vpack.c.b16 %v2521, %v2515
      %v2708 = vpack.c.b16 %v2522, %v2516
      %v2709 = vpack.c.b16 %v2523, %v2517
      %v2710 = vpack.c.b16 %v2530, %v2524
      %v2711 = vpack.c.b16 %v2531, %v2525
      %v2712 = vpack.c.b16 %v2532, %v2526
      %v2713 = vpack.c.b16 %v2533, %v2527
      %v2714 = vpack.c.b16 %v2534, %v2528
      %v2715 = vpack.c.b16 %v2535, %v2529
      %v2716 = vpack.c.b16 %v2542, %v2536
      %v2717 = vpack.c.b16 %v2543, %v2537
      %v2718 = vpack.c.b16 %v2544, %v2538
      %v2719 = vpack.c.b16 %v2545, %v2539
      %v2720 = vpack.c.b16 %v2546, %v2540
      %v2721 = vpack.c.b16 %v2547, %v2541
      %v2722 = vpack.c.b16 %v2554, %v2548
      %v2723 = vpack.c.b16 %v2555, %v2549
      %v2724 = vpack.c.b16 %v2556, %v2550
      %v2725 = vpack.c.b16 %v2557, %v2551
      %v2726 = vpack.c.b16 %v2558, %v2552
      %v2727 = vpack.c.b16 %v2559, %v2553
      %v2728 = vpack.c.b16 %v2566, %v2560
      %v2729 = vpack.c.b16 %v2567, %v2561
      %v2730 = vpack.c.b16 %v2568, %v2562
      %v2731 = vpack.c.b16 %v2569, %v2563
      %v2732 = vpack.c.b16 %v2570, %v2564
      %v2733 = vpack.c.b16 %v2571, %v2565
      %v2734 = vpack.c.b16 %v2578, %v2572
      %v2735 = vpack.c.b16 %v2579, %v2573
      %v2736 = vpack.c.b16 %v2580, %v2574
      %v2737 = vpack.c.b16 %v2581, %v2575
      %v2738 = vpack.c.b16 %v2582, %v2576
      %v2739 = vpack.c.b16 %v2583, %v2577
      %v2740 = vpack.c.b16 %v2590, %v2584
      %v2741 = vpack.c.b16 %v2591, %v2585
      %v2742 = vpack.c.b16 %v2592, %v2586
      %v2743 = vpack.c.b16 %v2593, %v2587
      %v2744 = vpack.c.b16 %v2594, %v2588
      %v2745 = vpack.c.b16 %v2595, %v2589
      %v2746 = vpack.c.b16 %v2602, %v2596
      %v2747 = vpack.c.b16 %v2603, %v2597
      %v2748 = vpack.c.b16 %v2604, %v2598
      %v2749 = vpack.c.b16 %v2605, %v2599
      %v2750 = vpack.c.b16 %v2606, %v2600
      %v2751 = vpack.c.b16 %v2607, %v2601
      %v2752 = vpack.c.b16 %v2614, %v2608
      %v2753 = vpack.c.b16 %v2615, %v2609
      %v2754 = vpack.c.b16 %v2616, %v2610
      %v2755 = vpack.c.b16 %v2617, %v2611
      %v2756 = vpack.c.b16 %v2618, %v2612
      %v2757 = vpack.c.b16 %v2619, %v2613
      %v2758 = vpack.c.b16 %v2626, %v2620
      %v2759 = vpack.c.b16 %v2627, %v2621
      %v2760 = vpack.c.b16 %v2628, %v2622
      %v2761 = vpack.c.b16 %v2629, %v2623
      %v2762 = vpack.c.b16 %v2630, %v2624
      %v2763 = vpack.c.b16 %v2631, %v2625
      %v2764 = vpack.c.b16 %v2638, %v2632
      %v2765 = vpack.c.b16 %v2639, %v2633
      %v2766 = vpack.c.b16 %v2640, %v2634
      %v2767 = vpack.c.b16 %v2641, %v2635
      %v2768 = vpack.c.b16 %v2642, %v2636
      %v2769 = vpack.c.b16 %v2643, %v2637
      %v2770 = vpack.c.b16 %v2650, %v2644
      %v2771 = vpack.c.b16 %v2651, %v2645
      %v2772 = vpack.c.b16 %v2652, %v2646
      %v2773 = vpack.c.b16 %v2653, %v2647
      %v2774 = vpack.c.b16 %v2654, %v2648
      %v2775 = vpack.c.b16 %v2655, %v2649
      %v2776 = vpack.c.b16 %v2662, %v2656
      %v2777 = vpack.c.b16 %v2663, %v2657
      %v2778 = vpack.c.b16 %v2664, %v2658
      %v2779 = vpack.c.b16 %v2665, %v2659
      %v2780 = vpack.c.b16 %v2666, %v2660
      %v2781 = vpack.c.b16 %v2667, %v2661
      %v2782 = vpack.c.b16 %v2674, %v2668
      %v2783 = vpack.c.b16 %v2675, %v2669
      %v2784 = vpack.c.b16 %v2676, %v2670
      %v2785 = vpack.c.b16 %v2677, %v2671
      %v2786 = vpack.c.b16 %v2678, %v2672
      %v2787 = vpack.c.b16 %v2679, %v2673
      %v2788 = vpack.c.b16 %v2686, %v2680
      %v2789 = vpack.c.b16 %v2687, %v2681
      %v2790 = vpack.c.b16 %v2688, %v2682
      %v2791 = vpack.c.b16 %v2689, %v2683
      %v2792 = vpack.c.b16 %v2690, %v2684
      %v2793 = vpack.c.b16 %v2691, %v2685
      %v2794 = vpack.c.b16 %v2698, %v2692
      %v2795 = vpack.c.b16 %v2699, %v2693
      %v2796 = vpack.c.b16 %v2700, %v2694
      %v2797 = vpack.c.b16 %v2701, %v2695
      %v2798 = vpack.c.b16 %v2702, %v2696
      %v2799 = vpack.c.b16 %v2703, %v2697
      %2896 = vmatpush.bf16.msra.mxu0 %v2746
      %2897 = vmatpush.bf16.msra.mxu0 %v2740
      %2898 = vmatpush.bf16.msra.mxu0 %v2734
      %2899 = vmatpush.bf16.msra.mxu0 %v2728
      %2900 = vmatpush.bf16.msra.mxu0 %v2722
      %2901 = vmatpush.bf16.msra.mxu0 %v2716
      %2902 = vmatpush.bf16.msra.mxu0 %v2710
      %2903 = vmatpush.bf16.msra.mxu0 %v2704
      %2904 = vmatmul.bf16.gmra.mxu0 %v2304
      %v2905 = vpop.f32.mrf.mxu0
      %v2906 = vadd.f32 %v2404, %v2905
      %v2907 = vpop.f32.mrf.mxu0
      %2908 = vdwg.mxu0
      %2909 = vmatpush.bf16.msra.mxu0 %v2794
      %2910 = vmatpush.bf16.msra.mxu0 %v2788
      %2911 = vmatpush.bf16.msra.mxu0 %v2782
      %2912 = vmatpush.bf16.msra.mxu0 %v2776
      %2913 = vmatpush.bf16.msra.mxu0 %v2770
      %2914 = vmatpush.bf16.msra.mxu0 %v2764
      %2915 = vmatpush.bf16.msra.mxu0 %v2758
      %2916 = vmatpush.bf16.msra.mxu0 %v2752
      %2917 = vmatmul.bf16.gmra.mxu0 %v2305
      %v2918 = vpop.f32.mrf.mxu0
      %v2919 = vadd.f32 %v2906, %v2918
      %v2920 = vpop.f32.mrf.mxu0
      %2921 = vdwg.mxu0
      %2922 = vmatpush.bf16.msra.mxu0 %v2747
      %2923 = vmatpush.bf16.msra.mxu0 %v2741
      %2924 = vmatpush.bf16.msra.mxu0 %v2735
      %2925 = vmatpush.bf16.msra.mxu0 %v2729
      %2926 = vmatpush.bf16.msra.mxu0 %v2723
      %2927 = vmatpush.bf16.msra.mxu0 %v2717
      %2928 = vmatpush.bf16.msra.mxu0 %v2711
      %2929 = vmatpush.bf16.msra.mxu0 %v2705
      %2930 = vmatmul.bf16.gmra.mxu0 %v2304
      %v2931 = vpop.f32.mrf.mxu0
      %v2932 = vadd.f32 %v2405, %v2931
      %v2933 = vpop.f32.mrf.mxu0
      %2934 = vdwg.mxu0
      %2935 = vmatpush.bf16.msra.mxu0 %v2795
      %2936 = vmatpush.bf16.msra.mxu0 %v2789
      %2937 = vmatpush.bf16.msra.mxu0 %v2783
      %2938 = vmatpush.bf16.msra.mxu0 %v2777
      %2939 = vmatpush.bf16.msra.mxu0 %v2771
      %2940 = vmatpush.bf16.msra.mxu0 %v2765
      %2941 = vmatpush.bf16.msra.mxu0 %v2759
      %2942 = vmatpush.bf16.msra.mxu0 %v2753
      %2943 = vmatmul.bf16.gmra.mxu0 %v2305
      %v2944 = vpop.f32.mrf.mxu0
      %v2945 = vadd.f32 %v2932, %v2944
      %v2946 = vpop.f32.mrf.mxu0
      %2947 = vdwg.mxu0
      %2948 = vmatpush.bf16.msra.mxu0 %v2748
      %2949 = vmatpush.bf16.msra.mxu0 %v2742
      %2950 = vmatpush.bf16.msra.mxu0 %v2736
      %2951 = vmatpush.bf16.msra.mxu0 %v2730
      %2952 = vmatpush.bf16.msra.mxu0 %v2724
      %2953 = vmatpush.bf16.msra.mxu0 %v2718
      %2954 = vmatpush.bf16.msra.mxu0 %v2712
      %2955 = vmatpush.bf16.msra.mxu0 %v2706
      %2956 = vmatmul.bf16.gmra.mxu0 %v2304
      %v2957 = vpop.f32.mrf.mxu0
      %v2958 = vadd.f32 %v2406, %v2957
      %v2959 = vpop.f32.mrf.mxu0
      %2960 = vdwg.mxu0
      %2961 = vmatpush.bf16.msra.mxu0 %v2796
      %2962 = vmatpush.bf16.msra.mxu0 %v2790
      %2963 = vmatpush.bf16.msra.mxu0 %v2784
      %2964 = vmatpush.bf16.msra.mxu0 %v2778
      %2965 = vmatpush.bf16.msra.mxu0 %v2772
      %2966 = vmatpush.bf16.msra.mxu0 %v2766
      %2967 = vmatpush.bf16.msra.mxu0 %v2760
      %2968 = vmatpush.bf16.msra.mxu0 %v2754
      %2969 = vmatmul.bf16.gmra.mxu0 %v2305
      %v2970 = vpop.f32.mrf.mxu0
      %v2971 = vadd.f32 %v2958, %v2970
      %v2972 = vpop.f32.mrf.mxu0
      %2973 = vdwg.mxu0
      %2974 = vmatpush.bf16.msra.mxu0 %v2749
      %2975 = vmatpush.bf16.msra.mxu0 %v2743
      %2976 = vmatpush.bf16.msra.mxu0 %v2737
      %2977 = vmatpush.bf16.msra.mxu0 %v2731
      %2978 = vmatpush.bf16.msra.mxu0 %v2725
      %2979 = vmatpush.bf16.msra.mxu0 %v2719
      %2980 = vmatpush.bf16.msra.mxu0 %v2713
      %2981 = vmatpush.bf16.msra.mxu0 %v2707
      %2982 = vmatmul.bf16.gmra.mxu0 %v2304
      %v2983 = vpop.f32.mrf.mxu0
      %v2984 = vadd.f32 %v2407, %v2983
      %v2985 = vpop.f32.mrf.mxu0
      %2986 = vdwg.mxu0
      %2987 = vmatpush.bf16.msra.mxu0 %v2797
      %2988 = vmatpush.bf16.msra.mxu0 %v2791
      %2989 = vmatpush.bf16.msra.mxu0 %v2785
      %2990 = vmatpush.bf16.msra.mxu0 %v2779
      %2991 = vmatpush.bf16.msra.mxu0 %v2773
      %2992 = vmatpush.bf16.msra.mxu0 %v2767
      %2993 = vmatpush.bf16.msra.mxu0 %v2761
      %2994 = vmatpush.bf16.msra.mxu0 %v2755
      %2995 = vmatmul.bf16.gmra.mxu0 %v2305
      %v2996 = vpop.f32.mrf.mxu0
      %v2997 = vadd.f32 %v2984, %v2996
      %v2998 = vpop.f32.mrf.mxu0
      %2999 = vdwg.mxu0
      %3000 = vmatpush.bf16.msra.mxu0 %v2750
      %3001 = vmatpush.bf16.msra.mxu0 %v2744
      %3002 = vmatpush.bf16.msra.mxu0 %v2738
      %3003 = vmatpush.bf16.msra.mxu0 %v2732
      %3004 = vmatpush.bf16.msra.mxu0 %v2726
      %3005 = vmatpush.bf16.msra.mxu0 %v2720
      %3006 = vmatpush.bf16.msra.mxu0 %v2714
      %3007 = vmatpush.bf16.msra.mxu0 %v2708
      %3008 = vmatmul.bf16.gmra.mxu0 %v2304
      %v3009 = vpop.f32.mrf.mxu0
      %v3010 = vadd.f32 %v2408, %v3009
      %v3011 = vpop.f32.mrf.mxu0
      %3012 = vdwg.mxu0
      %3013 = vmatpush.bf16.msra.mxu0 %v2798
      %3014 = vmatpush.bf16.msra.mxu0 %v2792
      %3015 = vmatpush.bf16.msra.mxu0 %v2786
      %3016 = vmatpush.bf16.msra.mxu0 %v2780
      %3017 = vmatpush.bf16.msra.mxu0 %v2774
      %3018 = vmatpush.bf16.msra.mxu0 %v2768
      %3019 = vmatpush.bf16.msra.mxu0 %v2762
      %3020 = vmatpush.bf16.msra.mxu0 %v2756
      %3021 = vmatmul.bf16.gmra.mxu0 %v2305
      %v3022 = vpop.f32.mrf.mxu0
      %v3023 = vadd.f32 %v3010, %v3022
      %v3024 = vpop.f32.mrf.mxu0
      %3025 = vdwg.mxu0
      %3026 = vmatpush.bf16.msra.mxu0 %v2751
      %3027 = vmatpush.bf16.msra.mxu0 %v2745
      %3028 = vmatpush.bf16.msra.mxu0 %v2739
      %3029 = vmatpush.bf16.msra.mxu0 %v2733
      %3030 = vmatpush.bf16.msra.mxu0 %v2727
      %3031 = vmatpush.bf16.msra.mxu0 %v2721
      %3032 = vmatpush.bf16.msra.mxu0 %v2715
      %3033 = vmatpush.bf16.msra.mxu0 %v2709
      %3034 = vmatmul.bf16.gmra.mxu0 %v2304
      %v3035 = vpop.f32.mrf.mxu0
      %v3036 = vadd.f32 %v2409, %v3035
      %v3037 = vpop.f32.mrf.mxu0
      %3038 = vdwg.mxu0
      %3039 = vmatpush.bf16.msra.mxu0 %v2799
      %3040 = vmatpush.bf16.msra.mxu0 %v2793
      %3041 = vmatpush.bf16.msra.mxu0 %v2787
      %3042 = vmatpush.bf16.msra.mxu0 %v2781
      %3043 = vmatpush.bf16.msra.mxu0 %v2775
      %3044 = vmatpush.bf16.msra.mxu0 %v2769
      %3045 = vmatpush.bf16.msra.mxu0 %v2763
      %3046 = vmatpush.bf16.msra.mxu0 %v2757
      %3047 = vmatmul.bf16.gmra.mxu0 %v2305
      %v3048 = vpop.f32.mrf.mxu0
      %v3049 = vadd.f32 %v3036, %v3048
      %v3050 = vpop.f32.mrf.mxu0
      %3051 = vdwg.mxu0
      %v3058 = vrot.slane %v2945, 6
      %v3059 = vrot.slane %v2971, 4
      %v3060 = vrot.slane %v2997, 2
      %v3061 = vrot.slane %v3049, 6
      %v3062 = vsel %vm2300, %v2919, %v3058
      %vm3063 = vcmask 1045508
      %v3064 = vsel %vm3063, %v3059, %v3060
      %vm3065 = vcmask 1043456
      %v3066 = vsel %vm3065, %v3062, %v3064
      %v3067 = vsel %vm2300, %v3023, %v3061
      %3070 = vst [vmem:[%s298] sm:$0xff] %v3066
      %3071 = vst [vmem:[%s298 + $0x8] sm:$0xf] %v3067
      %p3072 = scmp.lt.s32.totalorder %s18, 7
      %s3073 = scalar_select %p3072, %s18, 7
      %s3074 = smul.addr %s3073, 2
      %s3075 = smul.addr %s3074, 2
      %s3076 = scalar_lea.vmem %s5, %s3075
      %p3077 = scmp.lt.s32.totalorder %s18, 7
      %s3078 = scalar_select %p3077, %s18, 7
      %s3079 = smul.addr %s3078, 6
      %s3080 = smul.addr %s3079, 2
      %s3081 = scalar_lea.vmem %s6, %s3080
      // Predicated region
      $region41: #{mgn_forward.7} parent=39 // pred_check
        %p3082 = pneg %p156
      $region42: #{mgn_forward.7} parent=39 // pred_check_branch
        %3084 = sbr.rel (%p3082) target = $region44
      $region43: #{mgn_forward.7} parent=39 // pred_region
        _
      $region44: #{mgn_forward.7} parent=39 // pred_fallthru
        _
      // Predicated region
      $region45: #{mgn_forward.7} parent=39 // pred_check
        %p3085 = pneg %p182
      $region46: #{mgn_forward.7} parent=39 // pred_check_branch
        %3087 = sbr.rel (%p3085) target = $region48
      $region47: #{mgn_forward.7} parent=39 // pred_region
        _
      $region48: #{mgn_forward.7} parent=39 // pred_fallthru
        _
    $region40: #{mgn_forward.7} parent=5 // pred_fallthru
      _
    %p3088 = scmp.le.s32.totalorder 2, %s13
    // Predicated region
    $region49: #{mgn_forward.7} parent=5 // pred_check
      %p3089 = pneg %p3088
    $region50: #{mgn_forward.7} parent=5 // pred_check_branch
      %3091 = sbr.rel (%p3089) target = $region52
    $region51: #{mgn_forward.7} parent=5 // pred_region
      %s3092 = ssub.s32 %s13, 2
      // Predicated region
      $region53: #{mgn_forward.7} parent=51 // pred_check
        %p3093 = pneg %p162
      $region54: #{mgn_forward.7} parent=51 // pred_check_branch
        %3095 = sbr.rel (%p3093) target = $region56
      $region55: #{mgn_forward.7} parent=51 // pred_region
        %p3096 = scmp.lt.s32.totalorder %s19, 7
        %s3097 = scalar_select %p3096, %s19, 7
        %s3098 = smul.addr %s3097, 2
        %s3099 = smul.addr %s3098, 2
        %s3100 = scalar_lea.vmem %s5, %s3099
      $region56: #{mgn_forward.7} parent=51 // pred_fallthru
        _
      // Predicated region
      $region57: #{mgn_forward.7} parent=51 // pred_check
        %p3101 = pneg %p188
      $region58: #{mgn_forward.7} parent=51 // pred_check_branch
        %3103 = sbr.rel (%p3101) target = $region60
      $region59: #{mgn_forward.7} parent=51 // pred_region
        %p3104 = scmp.lt.s32.totalorder %s19, 7
        %s3105 = scalar_select %p3104, %s19, 7
        %s3106 = smul.addr %s3105, 6
        %s3107 = smul.addr %s3106, 2
        %s3108 = scalar_lea.vmem %s6, %s3107
      $region60: #{mgn_forward.7} parent=51 // pred_fallthru
        _
    $region52: #{mgn_forward.7} parent=5 // pred_fallthru
      _
  $region6: #{mgn_forward.7} parent=0 // loop_footer
    %s17 = sadd.s32 1, %s13
  $region7: #{mgn_forward.7} parent=0 // loop_footer_branch
    %12 = sbr.rel target = $region3
  $region8: #{mgn_forward.7} parent=0 // loop_exit
    _

</llo_original>
